<compile_context>
chip_gen: v6e
topology: v6e:2x2x1
jax: 0.10.0
libtpu: 0.0.40
codegen_flags: <defaults>
</compile_context>

<pallas_src>
import jax
import jax.numpy as jnp
from jax import lax
from jax.experimental import pallas as pl
from jax.experimental.pallas import tpu as pltpu

_HIGHEST = lax.Precision.HIGHEST


def _lambda_kernel(q_ref, k_ref, v_ref, emb_ref, o_ref):
    # q_ref:   (Bt, H2, N, K)   queries, heads on a leading dim
    # k_ref:   (Bt, M, K)
    # v_ref:   (Bt, M, V)
    # emb_ref: (M, H2*K)        embedding, constant across the grid
    # o_ref:   (Bt, H2, N*V)    lane-dense slab; raw buffer == contiguous (Bt,H2,N,V)
    Bt, H2, N, K = q_ref.shape
    M = k_ref.shape[1]
    V = v_ref.shape[2]

    vals = v_ref[...]                                        # (Bt, M, V), input dtype
    q = q_ref[...]                                           # (Bt, H2, N, K)

    # Softmax over K, exact (f32 max-subtract, exp, divide).
    kf = k_ref[...].astype(jnp.float32)                      # (Bt, M, K)
    kf = kf - jnp.max(kf, axis=-1, keepdims=True)
    ke = jnp.exp(kf)
    softk = (ke / jnp.sum(ke, axis=-1, keepdims=True)).astype(vals.dtype)  # (Bt, M, K)

    # content_lambda[b, k, v] = sum_m softk[b, m, k] * vals[b, m, v]
    content = jnp.einsum('bmk,bmv->bkv', softk, vals,
                         precision=_HIGHEST,
                         preferred_element_type=jnp.float32)  # (Bt, K, V) f32

    # All H2 position lambdas in one (batched) matmul:
    # pos[b, h*K+k, v] = sum_m embedding[h, m, k] * vals[b, m, v]
    emb_b = jnp.broadcast_to(emb_ref[...][None], (Bt, M, H2 * K))
    pos = jnp.einsum('bmh,bmv->bhv', emb_b, vals,
                     precision=_HIGHEST,
                     preferred_element_type=jnp.float32)      # (Bt, H2*K, V) f32

    # lam[b, h] = content_lambda[b] + position_lambda[b, h]   -> (Bt, H2, K, V)
    lam = pos.reshape(Bt, H2, K, V) + content[:, None, :, :]

    # Apply: out[b, h, n, v] = sum_k q[b, h, n, k] * lam[b, h, k, v].
    # Fold (batch, head) into one batch axis -> a single batched MXU call.
    q_z = q.reshape(Bt * H2, N, K)
    lam_z = lam.reshape(Bt * H2, K, V).astype(q.dtype)
    out = jnp.einsum('znk,zkv->znv', q_z, lam_z,
                     precision=_HIGHEST,
                     preferred_element_type=jnp.float32)      # (Bt*H2, N, V) f32

    # One lane-dense store of the whole tile (no narrow masked stores).
    o_ref[...] = out.reshape(Bt, H2, N * V).astype(o_ref.dtype)


def _pick_batch_tile(B):
    # Largest divisor of B (<= 8 batches per grid step), preferring a grid of
    # >= 2 steps when B is large enough so both v7x TensorCores get work.
    limit = min(8, B if B < 4 else max(1, B // 2))
    for cand in range(limit, 0, -1):
        if B % cand == 0:
            return cand
    return 1


def lambda_attention(queries, keys, values, embedding, *, batch_tile=None):
    """Pallas implementation of LambdaModule.forward. Returns (output, None)."""
    B, N, H2, K = queries.shape
    _, M, V = values.shape
    assert keys.shape == (B, M, K)
    assert embedding.shape == (H2, M, K)

    Bt = _pick_batch_tile(B) if batch_tile is None else batch_tile
    assert B % Bt == 0

    # Layout plumbing outside the kernel (cheap, contiguous XLA ops):
    #  - queries -> (B, H2, N, K): heads become a leading dim (free indexing in-kernel)
    #  - embedding -> (M, H2*K):   all position lambdas from one matmul operand
    q_t = jnp.transpose(queries, (0, 2, 1, 3))
    emb2 = jnp.transpose(embedding, (1, 0, 2)).reshape(M, H2 * K)

    # VMEM budget: ~2x (double buffering) per block, clamped to 32 MiB so the same
    # setting is safe on v7x (64 MiB physical VMEM) as well as v5e/v6e (128 MiB).
    itemsize = jnp.dtype(queries.dtype).itemsize
    block_bytes = itemsize * (Bt * H2 * N * K + Bt * M * K + Bt * M * V
                              + M * H2 * K + Bt * H2 * N * V)
    vmem_limit = int(min(max(4 * block_bytes, 8 << 20), 32 << 20))

    out3 = pl.pallas_call(
        _lambda_kernel,
        out_shape=jax.ShapeDtypeStruct((B, H2, N * V), queries.dtype),
        grid=(B // Bt,),
        in_specs=[
            pl.BlockSpec((Bt, H2, N, K), lambda i: (i, 0, 0, 0)),
            pl.BlockSpec((Bt, M, K), lambda i: (i, 0, 0)),
            pl.BlockSpec((Bt, M, V), lambda i: (i, 0, 0)),
            pl.BlockSpec((M, H2 * K), lambda i: (0, 0)),      # constant across grid
        ],
        out_specs=pl.BlockSpec((Bt, H2, N * V), lambda i: (i, 0, 0)),
        compiler_params=pltpu.CompilerParams(
            dimension_semantics=("parallel",),
            vmem_limit_bytes=vmem_limit,
        ),
    )(q_t, keys, values, emb2)

    # Raw reinterpretation identical to torch's `.view(b, n, -1)` on the
    # contiguous (B, H2, N, V) tensor (same contiguous buffer as (B, H2, N*V)).
    output = out3.reshape(B, N, H2 * V)
    return output, None


def _reference(queries, keys, values, embedding):
    # Pure-JAX transcription of the PyTorch forward, for verification.
    softk = jax.nn.softmax(keys, axis=-1)
    content_lambda = jnp.einsum('bmk,bmv->bkv', softk, values, precision=_HIGHEST)
    position_lambdas = jnp.einsum('nmk,bmv->bnkv', embedding, values, precision=_HIGHEST)
    content_output = jnp.einsum('bhnk,bkv->bnhv', queries, content_lambda,
                                precision=_HIGHEST)
    position_output = jnp.einsum('bhnk,bnkv->bnhv', queries, position_lambdas,
                                 precision=_HIGHEST)
    out = (content_output + position_output).reshape(
        queries.shape[0], queries.shape[1], -1)
    return out


if __name__ == "__main__":
    key = jax.random.PRNGKey(0)
    kq, kk, kv, ke = jax.random.split(key, 4)

    B, N, H2, K, M, V = 2, 8, 4, 16, 8, 16
    queries = jax.random.normal(kq, (B, N, H2, K), dtype=jnp.float32)
    keys = jax.random.normal(kk, (B, M, K), dtype=jnp.float32)
    values = jax.random.normal(kv, (B, M, V), dtype=jnp.float32)
    embedding = jax.random.normal(ke, (H2, M, K), dtype=jnp.float32)

    out, attn = lambda_attention(queries, keys, values, embedding)
    out = jax.block_until_ready(out)

    ref = _reference(queries, keys, values, embedding)
    assert out.shape == (B, N, H2 * V), out.shape
    assert attn is None
    max_err = float(jnp.max(jnp.abs(out - ref)))
    assert jnp.allclose(out, ref, rtol=2e-3, atol=2e-3), (
        f"mismatch vs reference, max abs err = {max_err}")

    print("KERNEL_OK")
</pallas_src>

<mosaic_0001>
module attributes {stable_mosaic.version = 11 : i64} {
  func.func @_lambda_kernel(%arg0: i32, %arg1: memref<2x4x8x16xf32, #tpu.memory_space<vmem>>, %arg2: memref<2x8x16xf32, #tpu.memory_space<vmem>>, %arg3: memref<2x8x16xf32, #tpu.memory_space<vmem>>, %arg4: memref<8x64xf32, #tpu.memory_space<vmem>>, %arg5: memref<2x4x128xf32, #tpu.memory_space<vmem>>) attributes {dimension_semantics = [#tpu.dimension_semantics<parallel>], iteration_bounds = array<i64: 1>, scalar_prefetch = 0 : i64, scratch_operands = 0 : i64, tpu.core_type = #tpu.core_type<tc>, window_params = [{transform_indices = @transform_0, window_bounds = array<i64: 2, 4, 8, 16>}, {transform_indices = @transform_1, window_bounds = array<i64: 2, 8, 16>}, {transform_indices = @transform_2, window_bounds = array<i64: 2, 8, 16>}, {pipeline_mode = #tpu.pipeline_mode<synchronous>, transform_indices = @transform_3, window_bounds = array<i64: 8, 64>}, {transform_indices = @transform_4, window_bounds = array<i64: 2, 4, 128>}]} {
    %c0 = arith.constant 0 : index
    %c0_0 = arith.constant 0 : index
    %c0_1 = arith.constant 0 : index
    %0 = vector.load %arg3[%c0, %c0_0, %c0_1] : memref<2x8x16xf32, #tpu.memory_space<vmem>>, vector<2x8x16xf32>
    %c0_2 = arith.constant 0 : index
    %c0_3 = arith.constant 0 : index
    %c0_4 = arith.constant 0 : index
    %c0_5 = arith.constant 0 : index
    %1 = vector.load %arg1[%c0_2, %c0_3, %c0_4, %c0_5] : memref<2x4x8x16xf32, #tpu.memory_space<vmem>>, vector<2x4x8x16xf32>
    %c0_6 = arith.constant 0 : index
    %c0_7 = arith.constant 0 : index
    %c0_8 = arith.constant 0 : index
    %2 = vector.load %arg2[%c0_6, %c0_7, %c0_8] : memref<2x8x16xf32, #tpu.memory_space<vmem>>, vector<2x8x16xf32>
    %cst = arith.constant dense<0xFF800000> : vector<2x8xf32>
    %3 = vector.multi_reduction <maximumf>, %2, %cst [2] : vector<2x8x16xf32> to vector<2x8xf32>
    %4 = vector.shape_cast %3 : vector<2x8xf32> to vector<2x8x1xf32>
    %5 = vector.broadcast %4 : vector<2x8x1xf32> to vector<2x8x16xf32>
    %6 = arith.subf %2, %5 : vector<2x8x16xf32>
    %7 = math.exp %6 : vector<2x8x16xf32>
    %cst_9 = arith.constant dense<0.000000e+00> : vector<2x8xf32>
    %8 = vector.multi_reduction <add>, %7, %cst_9 [2] : vector<2x8x16xf32> to vector<2x8xf32>
    %9 = vector.shape_cast %8 : vector<2x8xf32> to vector<2x8x1xf32>
    %10 = vector.broadcast %9 : vector<2x8x1xf32> to vector<2x8x16xf32>
    %11 = arith.divf %7, %10 : vector<2x8x16xf32>
    "tpu.trace_start"() <{level = 10 : i32, message = "bmk,bmv->bkv"}> : () -> ()
    %cst_10 = arith.constant dense<0.000000e+00> : vector<2x16x16xf32>
    %12 = tpu.matmul %11, %0, %cst_10 {dimension_numbers = #tpu.dot_dimension_numbers<[1], [1], [2], [2], [0, 0, 0, 2, 1, 2], [0], [0]>, precision = #tpu.contract_precision<fp32>} : vector<2x8x16xf32>, vector<2x8x16xf32>, vector<2x16x16xf32> -> vector<2x16x16xf32>
    "tpu.trace_stop"() : () -> ()
    %c0_11 = arith.constant 0 : index
    %c0_12 = arith.constant 0 : index
    %13 = vector.load %arg4[%c0_11, %c0_12] : memref<8x64xf32, #tpu.memory_space<vmem>>, vector<8x64xf32>
    %14 = vector.shape_cast %13 : vector<8x64xf32> to vector<1x8x64xf32>
    %15 = vector.shape_cast %14 : vector<1x8x64xf32> to vector<1x8x64xf32>
    %16 = vector.broadcast %15 : vector<1x8x64xf32> to vector<2x8x64xf32>
    "tpu.trace_start"() <{level = 10 : i32, message = "bmh,bmv->bhv"}> : () -> ()
    %cst_13 = arith.constant dense<0.000000e+00> : vector<2x64x16xf32>
    %17 = tpu.matmul %16, %0, %cst_13 {dimension_numbers = #tpu.dot_dimension_numbers<[1], [1], [2], [2], [0, 0, 0, 2, 1, 2], [0], [0]>, precision = #tpu.contract_precision<fp32>} : vector<2x8x64xf32>, vector<2x8x16xf32>, vector<2x64x16xf32> -> vector<2x64x16xf32>
    "tpu.trace_stop"() : () -> ()
    %18 = vector.shape_cast %17 : vector<2x64x16xf32> to vector<2x4x16x16xf32>
    %19 = vector.shape_cast %12 : vector<2x16x16xf32> to vector<2x1x16x16xf32>
    %20 = vector.broadcast %19 : vector<2x1x16x16xf32> to vector<2x4x16x16xf32>
    %21 = arith.addf %18, %20 : vector<2x4x16x16xf32>
    %22 = vector.shape_cast %1 : vector<2x4x8x16xf32> to vector<8x8x16xf32>
    %23 = vector.shape_cast %21 : vector<2x4x16x16xf32> to vector<8x16x16xf32>
    "tpu.trace_start"() <{level = 10 : i32, message = "znk,zkv->znv"}> : () -> ()
    %cst_14 = arith.constant dense<0.000000e+00> : vector<8x8x16xf32>
    %24 = tpu.matmul %22, %23, %cst_14 {dimension_numbers = #tpu.dot_dimension_numbers<[2], [1], [1], [2], [0, 0, 0, 1, 1, 2], [0], [0]>, precision = #tpu.contract_precision<fp32>} : vector<8x8x16xf32>, vector<8x16x16xf32>, vector<8x8x16xf32> -> vector<8x8x16xf32>
    "tpu.trace_stop"() : () -> ()
    %25 = vector.shape_cast %24 : vector<8x8x16xf32> to vector<2x4x128xf32>
    %c0_15 = arith.constant 0 : index
    %c0_16 = arith.constant 0 : index
    %c0_17 = arith.constant 0 : index
    %26 = vector.load %arg5[%c0_15, %c0_16, %c0_17] : memref<2x4x128xf32, #tpu.memory_space<vmem>>, vector<2x4x128xf32>
    tpu.vector_store %arg5[%c0_15, %c0_16, %c0_17], %25 {strides = array<i32>} : memref<2x4x128xf32, #tpu.memory_space<vmem>>, vector<2x4x128xf32>,
    return
  }
  func.func @transform_0(%arg0: i32) -> (i32, i32, i32, i32) {
    %c0_i32 = arith.constant 0 : i32
    %c0_i32_0 = arith.constant 0 : i32
    %c0_i32_1 = arith.constant 0 : i32
    %c0_i32_2 = arith.constant 0 : i32
    return %arg0, %c0_i32, %c0_i32_0, %c0_i32_1 : i32, i32, i32, i32
  }
  func.func @transform_1(%arg0: i32) -> (i32, i32, i32) {
    %c0_i32 = arith.constant 0 : i32
    %c0_i32_0 = arith.constant 0 : i32
    %c0_i32_1 = arith.constant 0 : i32
    return %arg0, %c0_i32, %c0_i32_0 : i32, i32, i32
  }
  func.func @transform_2(%arg0: i32) -> (i32, i32, i32) {
    %c0_i32 = arith.constant 0 : i32
    %c0_i32_0 = arith.constant 0 : i32
    %c0_i32_1 = arith.constant 0 : i32
    return %arg0, %c0_i32, %c0_i32_0 : i32, i32, i32
  }
  func.func @transform_3(%arg0: i32) -> (i32, i32) {
    %c0_i32 = arith.constant 0 : i32
    %c0_i32_0 = arith.constant 0 : i32
    %c0_i32_1 = arith.constant 0 : i32
    return %c0_i32, %c0_i32_0 : i32, i32
  }
  func.func @transform_4(%arg0: i32) -> (i32, i32, i32) {
    %c0_i32 = arith.constant 0 : i32
    %c0_i32_0 = arith.constant 0 : i32
    %c0_i32_1 = arith.constant 0 : i32
    return %arg0, %c0_i32, %c0_i32_0 : i32, i32, i32
  }
}

</mosaic_0001>

<llo_original>
// kernel: tpu_custom_call.1
$region0: #{tpu_custom_call.1}
  #allocation0 [shape = 'u32[]', space=smem, size = 0x4, offset = 0x4, fixed_abs, tag = 'smem constant byte address 0x4 - core index']
  #allocation1 [shape = 'u32[144,128]{1,0:T(1,128)}', space=vmem, size = 0x12000, scoped, tag = 'internal scratch']
  %s0 = inlined_call_operand.hbm [shape: f32[2,4,8,16], index: 0, kind: input, shape index: {}]
  %s1 = inlined_call_operand.hbm [shape: f32[2,8,16], index: 1, kind: input, shape index: {}]
  %s2 = inlined_call_operand.hbm [shape: f32[2,8,16], index: 2, kind: input, shape index: {}]
  %s3 = inlined_call_operand.hbm [shape: f32[8,64], index: 3, kind: input, shape index: {}]
  %s4 = inlined_call_operand.hbm [shape: f32[2,4,128], index: 4, kind: output, shape index: {}]
  %s5 = sld [smem:[#allocation0]]
  $region42: #{tpu_custom_call.1} parent=0
    _
  %s7 = ssub.s32 1, %s5
  %s8 = scalar_select 0, %s7, %s5
  $region1: #{tpu_custom_call.1} parent=0
    #allocation2 [shape = 'u8[32768]{0}', space=vmem, size = 0x8000, scoped, tag = 'input window, operand 0, single buffered']
    #allocation3 [shape = 's32[1]{0}', space=sflag, size = 0x4, scoped, tag = 'scoped memory for tpu_custom_call.1']
    #allocation4 [shape = 's32[1]{0}', space=sflag, size = 0x4, scoped, tag = 'scoped memory for tpu_custom_call.1']
    #allocation5 [shape = 'u8[8192]{0}', space=vmem, size = 0x2000, scoped, tag = 'input window, operand 1, single buffered']
    #allocation6 [shape = 's32[1]{0}', space=sflag, size = 0x4, scoped, tag = 'scoped memory for tpu_custom_call.1']
    #allocation7 [shape = 'u8[8192]{0}', space=vmem, size = 0x2000, scoped, tag = 'input window, operand 2, single buffered']
    #allocation8 [shape = 'u8[4096]{0}', space=vmem, size = 0x1000, scoped, tag = 'input window, operand 3, single buffered']
    #allocation9 [shape = 's32[1]{0}', space=sflag, size = 0x4, scoped, tag = 'scoped memory for tpu_custom_call.1']
    #allocation10 [shape = 'u8[4096]{0}', space=vmem, size = 0x1000, scoped, tag = 'output window, operand 0, single buffered']
    %9 = vsyncpa [#allocation3], 0
    %10 = vsyncpa [#allocation6], 0
    %11 = vsyncpa [#allocation9], 0
    %12 = vsyncpa [#allocation4], 0
    // Predicated region
    $region2: #{tpu_custom_call.1} parent=1 // pred_check
      _
    $region3: #{tpu_custom_call.1} parent=1 // pred_check_branch
      %14 = sbr.rel (0) target = $region5
    $region4: #{tpu_custom_call.1} parent=1 // pred_region
      %s16 = ssub.s32 1024, 1024
      %17 = vsyncadd [#allocation3], %s16
      %s18 = sshll.u32 [#allocation2], 4
      %s19 = int_to_ptr.vmem [resolvable:$true] %s18
      %24 = dma.hbm_to_vmem [thread:$0]  %s0, 1024, %s19, [#allocation3], 128, 128, 8
    $region5: #{tpu_custom_call.1} parent=1 // pred_fallthru
      _
    // Predicated region
    $region6: #{tpu_custom_call.1} parent=1 // pred_check
      _
    $region7: #{tpu_custom_call.1} parent=1 // pred_check_branch
      %26 = sbr.rel (0) target = $region9
    $region8: #{tpu_custom_call.1} parent=1 // pred_region
      %s28 = ssub.s32 256, 256
      %29 = vsyncadd [#allocation6], %s28
      %s30 = sshll.u32 [#allocation5], 4
      %s31 = int_to_ptr.vmem [resolvable:$true] %s30
      %36 = dma.hbm_to_vmem [thread:$0]  %s1, 256, %s31, [#allocation6], 128, 128, 8
    $region9: #{tpu_custom_call.1} parent=1 // pred_fallthru
      _
    // Predicated region
    $region10: #{tpu_custom_call.1} parent=1 // pred_check
      _
    $region11: #{tpu_custom_call.1} parent=1 // pred_check_branch
      %38 = sbr.rel (0) target = $region13
    $region12: #{tpu_custom_call.1} parent=1 // pred_region
      %s40 = ssub.s32 256, 256
      %41 = vsyncadd [#allocation6], %s40
      %s42 = sshll.u32 [#allocation7], 4
      %s43 = int_to_ptr.vmem [resolvable:$true] %s42
      %48 = dma.hbm_to_vmem [thread:$0]  %s2, 256, %s43, [#allocation6], 128, 128, 8
    $region13: #{tpu_custom_call.1} parent=1 // pred_fallthru
      _
    // Predicated region
    $region14: #{tpu_custom_call.1} parent=1 // pred_check
      _
    $region15: #{tpu_custom_call.1} parent=1 // pred_check_branch
      %50 = sbr.rel (0) target = $region17
    $region16: #{tpu_custom_call.1} parent=1 // pred_region
      %s52 = ssub.s32 128, 128
      %53 = vsyncadd [#allocation9], %s52
      %s55 = sshll.u32 [#allocation8], 4
      %s56 = int_to_ptr.vmem [resolvable:$true] %s55
      %58 = dma.hbm_to_vmem [thread:$0]  %s3, 128, %s56, [#allocation9]
    $region17: #{tpu_custom_call.1} parent=1 // pred_fallthru
      _
    // Predicated region
    $region18: #{tpu_custom_call.1} parent=1 // pred_check
      _
    $region19: #{tpu_custom_call.1} parent=1 // pred_check_branch
      %60 = sbr.rel (0) target = $region21
    $region20: #{tpu_custom_call.1} parent=1 // pred_region
      %61 = dma.done [#allocation3], 1024
    $region21: #{tpu_custom_call.1} parent=1 // pred_fallthru
      _
    // Predicated region
    $region22: #{tpu_custom_call.1} parent=1 // pred_check
      _
    $region23: #{tpu_custom_call.1} parent=1 // pred_check_branch
      %63 = sbr.rel (0) target = $region25
    $region24: #{tpu_custom_call.1} parent=1 // pred_region
      %64 = dma.done [#allocation6], 256
    $region25: #{tpu_custom_call.1} parent=1 // pred_fallthru
      _
    // Predicated region
    $region26: #{tpu_custom_call.1} parent=1 // pred_check
      _
    $region27: #{tpu_custom_call.1} parent=1 // pred_check_branch
      %66 = sbr.rel (0) target = $region29
    $region28: #{tpu_custom_call.1} parent=1 // pred_region
      %67 = dma.done [#allocation6], 256
    $region29: #{tpu_custom_call.1} parent=1 // pred_fallthru
      _
    // Predicated region
    $region30: #{tpu_custom_call.1} parent=1 // pred_check
      _
    $region31: #{tpu_custom_call.1} parent=1 // pred_check_branch
      %69 = sbr.rel (0) target = $region33
    $region32: #{tpu_custom_call.1} parent=1 // pred_region
      %70 = dma.done [#allocation9], 128
    $region33: #{tpu_custom_call.1} parent=1 // pred_fallthru
      _
    %v71 = vld [vmem:[#allocation7] sm:$0xff]
    %v72 = vld [vmem:[#allocation7 + $0x8] sm:$0xff]
    %v73 = vld [vmem:[#allocation2] sm:$0xff]
    %v74 = vld [vmem:[#allocation2 + $0x8] sm:$0xff]
    %v75 = vld [vmem:[#allocation2 + $0x10] sm:$0xff]
    %v76 = vld [vmem:[#allocation2 + $0x18] sm:$0xff]
    %v77 = vld [vmem:[#allocation2 + $0x20] sm:$0xff]
    %v78 = vld [vmem:[#allocation2 + $0x28] sm:$0xff]
    %v79 = vld [vmem:[#allocation2 + $0x30] sm:$0xff]
    %v80 = vld [vmem:[#allocation2 + $0x38] sm:$0xff]
    %v81 = vld [vmem:[#allocation5] sm:$0xff]
    %v82 = vld [vmem:[#allocation5 + $0x8] sm:$0xff]
    %vm83 = vcmask 130048
    %v84 = vsel %vm83, %v81, -inf
    %85 = vmax.xlane.f32.xlu0 %v84
    %v86 = vpop.xlane.xlu0 %85
    %v87 = vsel %vm83, %v82, -inf
    %88 = vmax.xlane.f32.xlu0 %v87
    %v89 = vpop.xlane.xlu0 %88
    %v90 = vsub.f32 %v81, %v86
    %v91 = vsub.f32 %v82, %v89
    %v92 = vmul.f32 %v90, 1.442695
    %v93 = vpow.pop %v92
    %v94 = vmul.f32 %v91, 1.442695
    %v95 = vpow.pop %v94
    %v96 = vsel %vm83, %v93, 0.0
    %97 = vadd.xlane.f32.xlu0 %v96
    %v98 = vpop.xlane.xlu0 %97
    %v99 = vsel %vm83, %v95, 0.0
    %100 = vadd.xlane.f32.xlu0 %v99
    %v101 = vpop.xlane.xlu0 %100
    %v102 = vrcp.pop %v98
    %v103 = vmul.f32 %v93, %v102
    %v104 = vrcp.pop %v101
    %v105 = vmul.f32 %v95, %v104
    %106 = vxpose.xlu0.b32.start [1/16] %v103, 128
    %107 = vxpose.xlu0.b32.cont [2/16] 0.0, 128
    %108 = vxpose.xlu0.b32.cont [3/16] 0.0, 128
    %109 = vxpose.xlu0.b32.cont [4/16] 0.0, 128
    %110 = vxpose.xlu0.b32.cont [5/16] 0.0, 128
    %111 = vxpose.xlu0.b32.cont [6/16] 0.0, 128
    %112 = vxpose.xlu0.b32.cont [7/16] 0.0, 128
    %113 = vxpose.xlu0.b32.cont [8/16] 0.0, 128
    %114 = vxpose.xlu0.b32.cont [9/16] 0.0, 128
    %115 = vxpose.xlu0.b32.cont [10/16] 0.0, 128
    %116 = vxpose.xlu0.b32.cont [11/16] 0.0, 128
    %117 = vxpose.xlu0.b32.cont [12/16] 0.0, 128
    %118 = vxpose.xlu0.b32.cont [13/16] 0.0, 128
    %119 = vxpose.xlu0.b32.cont [14/16] 0.0, 128
    %120 = vxpose.xlu0.b32.cont [15/16] 0.0, 128
    %121 = vxpose.xlu0.b32.end [16/16] 0.0, 128
    %v122 = vpop.trf.xlu0
    %v123 = vpop.trf.xlu0
    %v124 = vpop.trf.xlu0
    %v125 = vpop.trf.xlu0
    %v126 = vpop.trf.xlu0
    %v127 = vpop.trf.xlu0
    %v128 = vpop.trf.xlu0
    %v129 = vpop.trf.xlu0
    %v130 = vpop.trf.xlu0
    %v131 = vpop.trf.xlu0
    %v132 = vpop.trf.xlu0
    %v133 = vpop.trf.xlu0
    %v134 = vpop.trf.xlu0
    %v135 = vpop.trf.xlu0
    %v136 = vpop.trf.xlu0
    %v137 = vpop.trf.xlu0
    %vm138 = vcmask 64512
    %v140 = vsel %vm138, %v122, 0
    %v143 = vsel %vm138, %v123, 0
    %145 = vmatprep.subr.mxu0 0.0
    %146 = vmatpush1.msra.mxu0 0.0
    %147 = vmatprep.subr.mxu0 0.0
    %148 = vmatpush1.msra.mxu0 0.0
    %149 = vmatprep.subr.mxu0 0.0
    %150 = vmatpush1.msra.mxu0 0.0
    %151 = vmatprep.subr.mxu0 0.0
    %152 = vmatpush1.msra.mxu0 0.0
    %153 = vmatprep.subr.mxu0 0.0
    %154 = vmatpush1.msra.mxu0 0.0
    %155 = vmatprep.subr.mxu0 0.0
    %156 = vmatpush1.msra.mxu0 0.0
    %157 = vmatprep.subr.mxu0 0.0
    %158 = vmatpush1.msra.mxu0 0.0
    %159 = vmatprep.subr.mxu0 0.0
    %160 = vmatpush1.msra.mxu0 0.0
    %161 = vmatprep.subr.mxu0 0.0
    %162 = vmatpush1.msra.mxu0 0.0
    %163 = vmatprep.subr.mxu0 0.0
    %164 = vmatpush1.msra.mxu0 0.0
    %165 = vmatprep.subr.mxu0 0.0
    %166 = vmatpush1.msra.mxu0 0.0
    %167 = vmatprep.subr.mxu0 0.0
    %168 = vmatpush1.msra.mxu0 0.0
    %169 = vmatprep.subr.mxu0 0.0
    %170 = vmatpush1.msra.mxu0 0.0
    %171 = vmatprep.subr.mxu0 0.0
    %172 = vmatpush1.msra.mxu0 0.0
    %173 = vmatprep.subr.mxu0 0.0
    %174 = vmatpush1.msra.mxu0 0.0
    %175 = vmatprep.subr.mxu0 0.0
    %v176 = vand.u32 %v71, 4294901760
    %177 = vmatpush1.msra.mxu0 %v176
    %178 = vmatprep.subr.mxu0 0.0
    %179 = vmatpush2.msra.mxu0 0.0
    %180 = vmatprep.subr.mxu0 0.0
    %181 = vmatpush2.msra.mxu0 0.0
    %182 = vmatprep.subr.mxu0 0.0
    %183 = vmatpush2.msra.mxu0 0.0
    %184 = vmatprep.subr.mxu0 0.0
    %185 = vmatpush2.msra.mxu0 0.0
    %186 = vmatprep.subr.mxu0 0.0
    %187 = vmatpush2.msra.mxu0 0.0
    %188 = vmatprep.subr.mxu0 0.0
    %189 = vmatpush2.msra.mxu0 0.0
    %190 = vmatprep.subr.mxu0 0.0
    %191 = vmatpush2.msra.mxu0 0.0
    %192 = vmatprep.subr.mxu0 0.0
    %193 = vmatpush2.msra.mxu0 0.0
    %194 = vmatprep.subr.mxu0 0.0
    %195 = vmatpush2.msra.mxu0 0.0
    %196 = vmatprep.subr.mxu0 0.0
    %197 = vmatpush2.msra.mxu0 0.0
    %198 = vmatprep.subr.mxu0 0.0
    %199 = vmatpush2.msra.mxu0 0.0
    %200 = vmatprep.subr.mxu0 0.0
    %201 = vmatpush2.msra.mxu0 0.0
    %202 = vmatprep.subr.mxu0 0.0
    %203 = vmatpush2.msra.mxu0 0.0
    %204 = vmatprep.subr.mxu0 0.0
    %205 = vmatpush2.msra.mxu0 0.0
    %206 = vmatprep.subr.mxu0 0.0
    %207 = vmatpush2.msra.mxu0 0.0
    %208 = vmatprep.subr.mxu0 0.0
    %209 = vmatpush2.msra.mxu0 0.0
    %210 = vmatprep.mubr.f32.mxu0 0.0
    %v211 = vand.u32 %v140, 4294901760
    %v212 = vsub.f32 %v140, %v211
    %v213 = vand.u32 %v212, 4294901760
    %v214 = vsub.f32 %v212, %v213
    %v215 = vand.u32 %v214, 4294901760
    %216 = vmatmul.mubr.f32.gmra.mxu0 %v215
    %v217 = vpop.f32.mrf.mxu0
    %v218 = vadd.f32 0.0, %v217
    %v219 = vpop.f32.mrf.mxu0
    %220 = vmatprep.mubr.f32.mxu0 0.0
    %v221 = vand.u32 %v143, 4294901760
    %v222 = vsub.f32 %v143, %v221
    %v223 = vand.u32 %v222, 4294901760
    %v224 = vsub.f32 %v222, %v223
    %v225 = vand.u32 %v224, 4294901760
    %226 = vmatmul.mubr.f32.gmra.mxu0 %v225
    %v227 = vpop.f32.mrf.mxu0
    %v228 = vadd.f32 0.0, %v227
    %v229 = vpop.f32.mrf.mxu0
    %230 = vdwg.mxu0
    %231 = vmatprep.subr.mxu0 0.0
    %232 = vmatpush1.msra.mxu0 0.0
    %233 = vmatprep.subr.mxu0 0.0
    %234 = vmatpush1.msra.mxu0 0.0
    %235 = vmatprep.subr.mxu0 0.0
    %236 = vmatpush1.msra.mxu0 0.0
    %237 = vmatprep.subr.mxu0 0.0
    %238 = vmatpush1.msra.mxu0 0.0
    %239 = vmatprep.subr.mxu0 0.0
    %240 = vmatpush1.msra.mxu0 0.0
    %241 = vmatprep.subr.mxu0 0.0
    %242 = vmatpush1.msra.mxu0 0.0
    %243 = vmatprep.subr.mxu0 0.0
    %244 = vmatpush1.msra.mxu0 0.0
    %245 = vmatprep.subr.mxu0 0.0
    %246 = vmatpush1.msra.mxu0 0.0
    %247 = vmatprep.subr.mxu0 0.0
    %248 = vmatpush1.msra.mxu0 0.0
    %249 = vmatprep.subr.mxu0 0.0
    %250 = vmatpush1.msra.mxu0 0.0
    %251 = vmatprep.subr.mxu0 0.0
    %252 = vmatpush1.msra.mxu0 0.0
    %253 = vmatprep.subr.mxu0 0.0
    %254 = vmatpush1.msra.mxu0 0.0
    %255 = vmatprep.subr.mxu0 0.0
    %256 = vmatpush1.msra.mxu0 0.0
    %257 = vmatprep.subr.mxu0 0.0
    %258 = vmatpush1.msra.mxu0 0.0
    %259 = vmatprep.subr.mxu0 0.0
    %260 = vmatpush1.msra.mxu0 0.0
    %261 = vmatprep.subr.mxu0 0.0
    %v262 = vand.u32 %v71, 4294901760
    %v263 = vsub.f32 %v71, %v262
    %v264 = vand.u32 %v263, 4294901760
    %v265 = vsub.f32 %v263, %v264
    %v266 = vand.u32 %v265, 4294901760
    %267 = vmatpush1.msra.mxu0 %v266
    %268 = vmatprep.subr.mxu0 0.0
    %269 = vmatpush2.msra.mxu0 0.0
    %270 = vmatprep.subr.mxu0 0.0
    %271 = vmatpush2.msra.mxu0 0.0
    %272 = vmatprep.subr.mxu0 0.0
    %273 = vmatpush2.msra.mxu0 0.0
    %274 = vmatprep.subr.mxu0 0.0
    %275 = vmatpush2.msra.mxu0 0.0
    %276 = vmatprep.subr.mxu0 0.0
    %277 = vmatpush2.msra.mxu0 0.0
    %278 = vmatprep.subr.mxu0 0.0
    %279 = vmatpush2.msra.mxu0 0.0
    %280 = vmatprep.subr.mxu0 0.0
    %281 = vmatpush2.msra.mxu0 0.0
    %282 = vmatprep.subr.mxu0 0.0
    %283 = vmatpush2.msra.mxu0 0.0
    %284 = vmatprep.subr.mxu0 0.0
    %285 = vmatpush2.msra.mxu0 0.0
    %286 = vmatprep.subr.mxu0 0.0
    %287 = vmatpush2.msra.mxu0 0.0
    %288 = vmatprep.subr.mxu0 0.0
    %289 = vmatpush2.msra.mxu0 0.0
    %290 = vmatprep.subr.mxu0 0.0
    %291 = vmatpush2.msra.mxu0 0.0
    %292 = vmatprep.subr.mxu0 0.0
    %293 = vmatpush2.msra.mxu0 0.0
    %294 = vmatprep.subr.mxu0 0.0
    %295 = vmatpush2.msra.mxu0 0.0
    %296 = vmatprep.subr.mxu0 0.0
    %297 = vmatpush2.msra.mxu0 0.0
    %298 = vmatprep.subr.mxu0 0.0
    %299 = vmatpush2.msra.mxu0 0.0
    %300 = vmatprep.mubr.f32.mxu0 0.0
    %v301 = vand.u32 %v140, 4294901760
    %302 = vmatmul.mubr.f32.gmra.mxu0 %v301
    %v303 = vpop.f32.mrf.mxu0
    %v304 = vadd.f32 %v218, %v303
    %v305 = vpop.f32.mrf.mxu0
    %306 = vmatprep.mubr.f32.mxu0 0.0
    %v307 = vand.u32 %v143, 4294901760
    %308 = vmatmul.mubr.f32.gmra.mxu0 %v307
    %v309 = vpop.f32.mrf.mxu0
    %v310 = vadd.f32 %v228, %v309
    %v311 = vpop.f32.mrf.mxu0
    %312 = vdwg.mxu0
    %313 = vmatprep.subr.mxu0 0.0
    %314 = vmatpush1.msra.mxu0 0.0
    %315 = vmatprep.subr.mxu0 0.0
    %316 = vmatpush1.msra.mxu0 0.0
    %317 = vmatprep.subr.mxu0 0.0
    %318 = vmatpush1.msra.mxu0 0.0
    %319 = vmatprep.subr.mxu0 0.0
    %320 = vmatpush1.msra.mxu0 0.0
    %321 = vmatprep.subr.mxu0 0.0
    %322 = vmatpush1.msra.mxu0 0.0
    %323 = vmatprep.subr.mxu0 0.0
    %324 = vmatpush1.msra.mxu0 0.0
    %325 = vmatprep.subr.mxu0 0.0
    %326 = vmatpush1.msra.mxu0 0.0
    %327 = vmatprep.subr.mxu0 0.0
    %328 = vmatpush1.msra.mxu0 0.0
    %329 = vmatprep.subr.mxu0 0.0
    %330 = vmatpush1.msra.mxu0 0.0
    %331 = vmatprep.subr.mxu0 0.0
    %332 = vmatpush1.msra.mxu0 0.0
    %333 = vmatprep.subr.mxu0 0.0
    %334 = vmatpush1.msra.mxu0 0.0
    %335 = vmatprep.subr.mxu0 0.0
    %336 = vmatpush1.msra.mxu0 0.0
    %337 = vmatprep.subr.mxu0 0.0
    %338 = vmatpush1.msra.mxu0 0.0
    %339 = vmatprep.subr.mxu0 0.0
    %340 = vmatpush1.msra.mxu0 0.0
    %341 = vmatprep.subr.mxu0 0.0
    %342 = vmatpush1.msra.mxu0 0.0
    %343 = vmatprep.subr.mxu0 0.0
    %v344 = vand.u32 %v71, 4294901760
    %v345 = vsub.f32 %v71, %v344
    %346 = vmatpush1.msra.mxu0 %v345
    %347 = vmatprep.subr.mxu0 0.0
    %348 = vmatpush2.msra.mxu0 0.0
    %349 = vmatprep.subr.mxu0 0.0
    %350 = vmatpush2.msra.mxu0 0.0
    %351 = vmatprep.subr.mxu0 0.0
    %352 = vmatpush2.msra.mxu0 0.0
    %353 = vmatprep.subr.mxu0 0.0
    %354 = vmatpush2.msra.mxu0 0.0
    %355 = vmatprep.subr.mxu0 0.0
    %356 = vmatpush2.msra.mxu0 0.0
    %357 = vmatprep.subr.mxu0 0.0
    %358 = vmatpush2.msra.mxu0 0.0
    %359 = vmatprep.subr.mxu0 0.0
    %360 = vmatpush2.msra.mxu0 0.0
    %361 = vmatprep.subr.mxu0 0.0
    %362 = vmatpush2.msra.mxu0 0.0
    %363 = vmatprep.subr.mxu0 0.0
    %364 = vmatpush2.msra.mxu0 0.0
    %365 = vmatprep.subr.mxu0 0.0
    %366 = vmatpush2.msra.mxu0 0.0
    %367 = vmatprep.subr.mxu0 0.0
    %368 = vmatpush2.msra.mxu0 0.0
    %369 = vmatprep.subr.mxu0 0.0
    %370 = vmatpush2.msra.mxu0 0.0
    %371 = vmatprep.subr.mxu0 0.0
    %372 = vmatpush2.msra.mxu0 0.0
    %373 = vmatprep.subr.mxu0 0.0
    %374 = vmatpush2.msra.mxu0 0.0
    %375 = vmatprep.subr.mxu0 0.0
    %376 = vmatpush2.msra.mxu0 0.0
    %377 = vmatprep.subr.mxu0 0.0
    %378 = vmatpush2.msra.mxu0 0.0
    %379 = vmatprep.mubr.f32.mxu0 0.0
    %v380 = vand.u32 %v140, 4294901760
    %v381 = vsub.f32 %v140, %v380
    %382 = vmatmul.mubr.f32.gmra.mxu0 %v381
    %v383 = vpop.f32.mrf.mxu0
    %v384 = vadd.f32 %v304, %v383
    %v385 = vpop.f32.mrf.mxu0
    %386 = vmatprep.mubr.f32.mxu0 0.0
    %v387 = vand.u32 %v143, 4294901760
    %v388 = vsub.f32 %v143, %v387
    %389 = vmatmul.mubr.f32.gmra.mxu0 %v388
    %v390 = vpop.f32.mrf.mxu0
    %v391 = vadd.f32 %v310, %v390
    %v392 = vpop.f32.mrf.mxu0
    %393 = vdwg.mxu0
    %394 = vmatprep.subr.mxu0 0.0
    %395 = vmatpush1.msra.mxu0 0.0
    %396 = vmatprep.subr.mxu0 0.0
    %397 = vmatpush1.msra.mxu0 0.0
    %398 = vmatprep.subr.mxu0 0.0
    %399 = vmatpush1.msra.mxu0 0.0
    %400 = vmatprep.subr.mxu0 0.0
    %401 = vmatpush1.msra.mxu0 0.0
    %402 = vmatprep.subr.mxu0 0.0
    %403 = vmatpush1.msra.mxu0 0.0
    %404 = vmatprep.subr.mxu0 0.0
    %405 = vmatpush1.msra.mxu0 0.0
    %406 = vmatprep.subr.mxu0 0.0
    %407 = vmatpush1.msra.mxu0 0.0
    %408 = vmatprep.subr.mxu0 0.0
    %409 = vmatpush1.msra.mxu0 0.0
    %410 = vmatprep.subr.mxu0 0.0
    %411 = vmatpush1.msra.mxu0 0.0
    %412 = vmatprep.subr.mxu0 0.0
    %413 = vmatpush1.msra.mxu0 0.0
    %414 = vmatprep.subr.mxu0 0.0
    %415 = vmatpush1.msra.mxu0 0.0
    %416 = vmatprep.subr.mxu0 0.0
    %417 = vmatpush1.msra.mxu0 0.0
    %418 = vmatprep.subr.mxu0 0.0
    %419 = vmatpush1.msra.mxu0 0.0
    %420 = vmatprep.subr.mxu0 0.0
    %421 = vmatpush1.msra.mxu0 0.0
    %422 = vmatprep.subr.mxu0 0.0
    %423 = vmatpush1.msra.mxu0 0.0
    %424 = vmatprep.subr.mxu0 0.0
    %v425 = vand.u32 %v71, 4294901760
    %426 = vmatpush1.msra.mxu0 %v425
    %427 = vmatprep.subr.mxu0 0.0
    %428 = vmatpush2.msra.mxu0 0.0
    %429 = vmatprep.subr.mxu0 0.0
    %430 = vmatpush2.msra.mxu0 0.0
    %431 = vmatprep.subr.mxu0 0.0
    %432 = vmatpush2.msra.mxu0 0.0
    %433 = vmatprep.subr.mxu0 0.0
    %434 = vmatpush2.msra.mxu0 0.0
    %435 = vmatprep.subr.mxu0 0.0
    %436 = vmatpush2.msra.mxu0 0.0
    %437 = vmatprep.subr.mxu0 0.0
    %438 = vmatpush2.msra.mxu0 0.0
    %439 = vmatprep.subr.mxu0 0.0
    %440 = vmatpush2.msra.mxu0 0.0
    %441 = vmatprep.subr.mxu0 0.0
    %442 = vmatpush2.msra.mxu0 0.0
    %443 = vmatprep.subr.mxu0 0.0
    %444 = vmatpush2.msra.mxu0 0.0
    %445 = vmatprep.subr.mxu0 0.0
    %446 = vmatpush2.msra.mxu0 0.0
    %447 = vmatprep.subr.mxu0 0.0
    %448 = vmatpush2.msra.mxu0 0.0
    %449 = vmatprep.subr.mxu0 0.0
    %450 = vmatpush2.msra.mxu0 0.0
    %451 = vmatprep.subr.mxu0 0.0
    %452 = vmatpush2.msra.mxu0 0.0
    %453 = vmatprep.subr.mxu0 0.0
    %454 = vmatpush2.msra.mxu0 0.0
    %455 = vmatprep.subr.mxu0 0.0
    %456 = vmatpush2.msra.mxu0 0.0
    %457 = vmatprep.subr.mxu0 0.0
    %458 = vmatpush2.msra.mxu0 0.0
    %459 = vmatprep.mubr.f32.mxu0 0.0
    %v460 = vand.u32 %v140, 4294901760
    %v461 = vsub.f32 %v140, %v460
    %v462 = vand.u32 %v461, 4294901760
    %463 = vmatmul.mubr.f32.gmra.mxu0 %v462
    %v464 = vpop.f32.mrf.mxu0
    %v465 = vadd.f32 %v384, %v464
    %v466 = vpop.f32.mrf.mxu0
    %467 = vmatprep.mubr.f32.mxu0 0.0
    %v468 = vand.u32 %v143, 4294901760
    %v469 = vsub.f32 %v143, %v468
    %v470 = vand.u32 %v469, 4294901760
    %471 = vmatmul.mubr.f32.gmra.mxu0 %v470
    %v472 = vpop.f32.mrf.mxu0
    %v473 = vadd.f32 %v391, %v472
    %v474 = vpop.f32.mrf.mxu0
    %475 = vdwg.mxu0
    %476 = vmatprep.subr.mxu0 0.0
    %477 = vmatpush1.msra.mxu0 0.0
    %478 = vmatprep.subr.mxu0 0.0
    %479 = vmatpush1.msra.mxu0 0.0
    %480 = vmatprep.subr.mxu0 0.0
    %481 = vmatpush1.msra.mxu0 0.0
    %482 = vmatprep.subr.mxu0 0.0
    %483 = vmatpush1.msra.mxu0 0.0
    %484 = vmatprep.subr.mxu0 0.0
    %485 = vmatpush1.msra.mxu0 0.0
    %486 = vmatprep.subr.mxu0 0.0
    %487 = vmatpush1.msra.mxu0 0.0
    %488 = vmatprep.subr.mxu0 0.0
    %489 = vmatpush1.msra.mxu0 0.0
    %490 = vmatprep.subr.mxu0 0.0
    %491 = vmatpush1.msra.mxu0 0.0
    %492 = vmatprep.subr.mxu0 0.0
    %493 = vmatpush1.msra.mxu0 0.0
    %494 = vmatprep.subr.mxu0 0.0
    %495 = vmatpush1.msra.mxu0 0.0
    %496 = vmatprep.subr.mxu0 0.0
    %497 = vmatpush1.msra.mxu0 0.0
    %498 = vmatprep.subr.mxu0 0.0
    %499 = vmatpush1.msra.mxu0 0.0
    %500 = vmatprep.subr.mxu0 0.0
    %501 = vmatpush1.msra.mxu0 0.0
    %502 = vmatprep.subr.mxu0 0.0
    %503 = vmatpush1.msra.mxu0 0.0
    %504 = vmatprep.subr.mxu0 0.0
    %505 = vmatpush1.msra.mxu0 0.0
    %506 = vmatprep.subr.mxu0 0.0
    %v507 = vand.u32 %v71, 4294901760
    %v508 = vsub.f32 %v71, %v507
    %v509 = vand.u32 %v508, 4294901760
    %510 = vmatpush1.msra.mxu0 %v509
    %511 = vmatprep.subr.mxu0 0.0
    %512 = vmatpush2.msra.mxu0 0.0
    %513 = vmatprep.subr.mxu0 0.0
    %514 = vmatpush2.msra.mxu0 0.0
    %515 = vmatprep.subr.mxu0 0.0
    %516 = vmatpush2.msra.mxu0 0.0
    %517 = vmatprep.subr.mxu0 0.0
    %518 = vmatpush2.msra.mxu0 0.0
    %519 = vmatprep.subr.mxu0 0.0
    %520 = vmatpush2.msra.mxu0 0.0
    %521 = vmatprep.subr.mxu0 0.0
    %522 = vmatpush2.msra.mxu0 0.0
    %523 = vmatprep.subr.mxu0 0.0
    %524 = vmatpush2.msra.mxu0 0.0
    %525 = vmatprep.subr.mxu0 0.0
    %526 = vmatpush2.msra.mxu0 0.0
    %527 = vmatprep.subr.mxu0 0.0
    %528 = vmatpush2.msra.mxu0 0.0
    %529 = vmatprep.subr.mxu0 0.0
    %530 = vmatpush2.msra.mxu0 0.0
    %531 = vmatprep.subr.mxu0 0.0
    %532 = vmatpush2.msra.mxu0 0.0
    %533 = vmatprep.subr.mxu0 0.0
    %534 = vmatpush2.msra.mxu0 0.0
    %535 = vmatprep.subr.mxu0 0.0
    %536 = vmatpush2.msra.mxu0 0.0
    %537 = vmatprep.subr.mxu0 0.0
    %538 = vmatpush2.msra.mxu0 0.0
    %539 = vmatprep.subr.mxu0 0.0
    %540 = vmatpush2.msra.mxu0 0.0
    %541 = vmatprep.subr.mxu0 0.0
    %542 = vmatpush2.msra.mxu0 0.0
    %543 = vmatprep.mubr.f32.mxu0 0.0
    %v544 = vand.u32 %v140, 4294901760
    %545 = vmatmul.mubr.f32.gmra.mxu0 %v544
    %v546 = vpop.f32.mrf.mxu0
    %v547 = vadd.f32 %v465, %v546
    %v548 = vpop.f32.mrf.mxu0
    %549 = vmatprep.mubr.f32.mxu0 0.0
    %v550 = vand.u32 %v143, 4294901760
    %551 = vmatmul.mubr.f32.gmra.mxu0 %v550
    %v552 = vpop.f32.mrf.mxu0
    %v553 = vadd.f32 %v473, %v552
    %v554 = vpop.f32.mrf.mxu0
    %555 = vdwg.mxu0
    %556 = vmatprep.subr.mxu0 0.0
    %557 = vmatpush1.msra.mxu0 0.0
    %558 = vmatprep.subr.mxu0 0.0
    %559 = vmatpush1.msra.mxu0 0.0
    %560 = vmatprep.subr.mxu0 0.0
    %561 = vmatpush1.msra.mxu0 0.0
    %562 = vmatprep.subr.mxu0 0.0
    %563 = vmatpush1.msra.mxu0 0.0
    %564 = vmatprep.subr.mxu0 0.0
    %565 = vmatpush1.msra.mxu0 0.0
    %566 = vmatprep.subr.mxu0 0.0
    %567 = vmatpush1.msra.mxu0 0.0
    %568 = vmatprep.subr.mxu0 0.0
    %569 = vmatpush1.msra.mxu0 0.0
    %570 = vmatprep.subr.mxu0 0.0
    %571 = vmatpush1.msra.mxu0 0.0
    %572 = vmatprep.subr.mxu0 0.0
    %573 = vmatpush1.msra.mxu0 0.0
    %574 = vmatprep.subr.mxu0 0.0
    %575 = vmatpush1.msra.mxu0 0.0
    %576 = vmatprep.subr.mxu0 0.0
    %577 = vmatpush1.msra.mxu0 0.0
    %578 = vmatprep.subr.mxu0 0.0
    %579 = vmatpush1.msra.mxu0 0.0
    %580 = vmatprep.subr.mxu0 0.0
    %581 = vmatpush1.msra.mxu0 0.0
    %582 = vmatprep.subr.mxu0 0.0
    %583 = vmatpush1.msra.mxu0 0.0
    %584 = vmatprep.subr.mxu0 0.0
    %585 = vmatpush1.msra.mxu0 0.0
    %586 = vmatprep.subr.mxu0 0.0
    %v587 = vand.u32 %v71, 4294901760
    %588 = vmatpush1.msra.mxu0 %v587
    %589 = vmatprep.subr.mxu0 0.0
    %590 = vmatpush2.msra.mxu0 0.0
    %591 = vmatprep.subr.mxu0 0.0
    %592 = vmatpush2.msra.mxu0 0.0
    %593 = vmatprep.subr.mxu0 0.0
    %594 = vmatpush2.msra.mxu0 0.0
    %595 = vmatprep.subr.mxu0 0.0
    %596 = vmatpush2.msra.mxu0 0.0
    %597 = vmatprep.subr.mxu0 0.0
    %598 = vmatpush2.msra.mxu0 0.0
    %599 = vmatprep.subr.mxu0 0.0
    %600 = vmatpush2.msra.mxu0 0.0
    %601 = vmatprep.subr.mxu0 0.0
    %602 = vmatpush2.msra.mxu0 0.0
    %603 = vmatprep.subr.mxu0 0.0
    %604 = vmatpush2.msra.mxu0 0.0
    %605 = vmatprep.subr.mxu0 0.0
    %606 = vmatpush2.msra.mxu0 0.0
    %607 = vmatprep.subr.mxu0 0.0
    %608 = vmatpush2.msra.mxu0 0.0
    %609 = vmatprep.subr.mxu0 0.0
    %610 = vmatpush2.msra.mxu0 0.0
    %611 = vmatprep.subr.mxu0 0.0
    %612 = vmatpush2.msra.mxu0 0.0
    %613 = vmatprep.subr.mxu0 0.0
    %614 = vmatpush2.msra.mxu0 0.0
    %615 = vmatprep.subr.mxu0 0.0
    %616 = vmatpush2.msra.mxu0 0.0
    %617 = vmatprep.subr.mxu0 0.0
    %618 = vmatpush2.msra.mxu0 0.0
    %619 = vmatprep.subr.mxu0 0.0
    %620 = vmatpush2.msra.mxu0 0.0
    %621 = vmatprep.mubr.f32.mxu0 0.0
    %v622 = vand.u32 %v140, 4294901760
    %623 = vmatmul.mubr.f32.gmra.mxu0 %v622
    %v624 = vpop.f32.mrf.mxu0
    %v625 = vadd.f32 %v547, %v624
    %v626 = vpop.f32.mrf.mxu0
    %627 = vmatprep.mubr.f32.mxu0 0.0
    %v628 = vand.u32 %v143, 4294901760
    %629 = vmatmul.mubr.f32.gmra.mxu0 %v628
    %v630 = vpop.f32.mrf.mxu0
    %v631 = vadd.f32 %v553, %v630
    %v632 = vpop.f32.mrf.mxu0
    %633 = vdwg.mxu0
    %634 = vxpose.xlu0.b32.start [1/16] %v105, 128
    %635 = vxpose.xlu0.b32.cont [2/16] 0.0, 128
    %636 = vxpose.xlu0.b32.cont [3/16] 0.0, 128
    %637 = vxpose.xlu0.b32.cont [4/16] 0.0, 128
    %638 = vxpose.xlu0.b32.cont [5/16] 0.0, 128
    %639 = vxpose.xlu0.b32.cont [6/16] 0.0, 128
    %640 = vxpose.xlu0.b32.cont [7/16] 0.0, 128
    %641 = vxpose.xlu0.b32.cont [8/16] 0.0, 128
    %642 = vxpose.xlu0.b32.cont [9/16] 0.0, 128
    %643 = vxpose.xlu0.b32.cont [10/16] 0.0, 128
    %644 = vxpose.xlu0.b32.cont [11/16] 0.0, 128
    %645 = vxpose.xlu0.b32.cont [12/16] 0.0, 128
    %646 = vxpose.xlu0.b32.cont [13/16] 0.0, 128
    %647 = vxpose.xlu0.b32.cont [14/16] 0.0, 128
    %648 = vxpose.xlu0.b32.cont [15/16] 0.0, 128
    %649 = vxpose.xlu0.b32.end [16/16] 0.0, 128
    %v650 = vpop.trf.xlu0
    %v651 = vpop.trf.xlu0
    %v652 = vpop.trf.xlu0
    %v653 = vpop.trf.xlu0
    %v654 = vpop.trf.xlu0
    %v655 = vpop.trf.xlu0
    %v656 = vpop.trf.xlu0
    %v657 = vpop.trf.xlu0
    %v658 = vpop.trf.xlu0
    %v659 = vpop.trf.xlu0
    %v660 = vpop.trf.xlu0
    %v661 = vpop.trf.xlu0
    %v662 = vpop.trf.xlu0
    %v663 = vpop.trf.xlu0
    %v664 = vpop.trf.xlu0
    %v665 = vpop.trf.xlu0
    %v667 = vsel %vm138, %v650, 0
    %v670 = vsel %vm138, %v651, 0
    %672 = vmatprep.subr.mxu0 0.0
    %673 = vmatpush1.msra.mxu0 0.0
    %674 = vmatprep.subr.mxu0 0.0
    %675 = vmatpush1.msra.mxu0 0.0
    %676 = vmatprep.subr.mxu0 0.0
    %677 = vmatpush1.msra.mxu0 0.0
    %678 = vmatprep.subr.mxu0 0.0
    %679 = vmatpush1.msra.mxu0 0.0
    %680 = vmatprep.subr.mxu0 0.0
    %681 = vmatpush1.msra.mxu0 0.0
    %682 = vmatprep.subr.mxu0 0.0
    %683 = vmatpush1.msra.mxu0 0.0
    %684 = vmatprep.subr.mxu0 0.0
    %685 = vmatpush1.msra.mxu0 0.0
    %686 = vmatprep.subr.mxu0 0.0
    %687 = vmatpush1.msra.mxu0 0.0
    %688 = vmatprep.subr.mxu0 0.0
    %689 = vmatpush1.msra.mxu0 0.0
    %690 = vmatprep.subr.mxu0 0.0
    %691 = vmatpush1.msra.mxu0 0.0
    %692 = vmatprep.subr.mxu0 0.0
    %693 = vmatpush1.msra.mxu0 0.0
    %694 = vmatprep.subr.mxu0 0.0
    %695 = vmatpush1.msra.mxu0 0.0
    %696 = vmatprep.subr.mxu0 0.0
    %697 = vmatpush1.msra.mxu0 0.0
    %698 = vmatprep.subr.mxu0 0.0
    %699 = vmatpush1.msra.mxu0 0.0
    %700 = vmatprep.subr.mxu0 0.0
    %701 = vmatpush1.msra.mxu0 0.0
    %702 = vmatprep.subr.mxu0 0.0
    %v703 = vand.u32 %v72, 4294901760
    %704 = vmatpush1.msra.mxu0 %v703
    %705 = vmatprep.subr.mxu0 0.0
    %706 = vmatpush2.msra.mxu0 0.0
    %707 = vmatprep.subr.mxu0 0.0
    %708 = vmatpush2.msra.mxu0 0.0
    %709 = vmatprep.subr.mxu0 0.0
    %710 = vmatpush2.msra.mxu0 0.0
    %711 = vmatprep.subr.mxu0 0.0
    %712 = vmatpush2.msra.mxu0 0.0
    %713 = vmatprep.subr.mxu0 0.0
    %714 = vmatpush2.msra.mxu0 0.0
    %715 = vmatprep.subr.mxu0 0.0
    %716 = vmatpush2.msra.mxu0 0.0
    %717 = vmatprep.subr.mxu0 0.0
    %718 = vmatpush2.msra.mxu0 0.0
    %719 = vmatprep.subr.mxu0 0.0
    %720 = vmatpush2.msra.mxu0 0.0
    %721 = vmatprep.subr.mxu0 0.0
    %722 = vmatpush2.msra.mxu0 0.0
    %723 = vmatprep.subr.mxu0 0.0
    %724 = vmatpush2.msra.mxu0 0.0
    %725 = vmatprep.subr.mxu0 0.0
    %726 = vmatpush2.msra.mxu0 0.0
    %727 = vmatprep.subr.mxu0 0.0
    %728 = vmatpush2.msra.mxu0 0.0
    %729 = vmatprep.subr.mxu0 0.0
    %730 = vmatpush2.msra.mxu0 0.0
    %731 = vmatprep.subr.mxu0 0.0
    %732 = vmatpush2.msra.mxu0 0.0
    %733 = vmatprep.subr.mxu0 0.0
    %734 = vmatpush2.msra.mxu0 0.0
    %735 = vmatprep.subr.mxu0 0.0
    %736 = vmatpush2.msra.mxu0 0.0
    %737 = vmatprep.mubr.f32.mxu0 0.0
    %v738 = vand.u32 %v667, 4294901760
    %v739 = vsub.f32 %v667, %v738
    %v740 = vand.u32 %v739, 4294901760
    %v741 = vsub.f32 %v739, %v740
    %v742 = vand.u32 %v741, 4294901760
    %743 = vmatmul.mubr.f32.gmra.mxu0 %v742
    %v744 = vpop.f32.mrf.mxu0
    %v745 = vadd.f32 0.0, %v744
    %v746 = vpop.f32.mrf.mxu0
    %747 = vmatprep.mubr.f32.mxu0 0.0
    %v748 = vand.u32 %v670, 4294901760
    %v749 = vsub.f32 %v670, %v748
    %v750 = vand.u32 %v749, 4294901760
    %v751 = vsub.f32 %v749, %v750
    %v752 = vand.u32 %v751, 4294901760
    %753 = vmatmul.mubr.f32.gmra.mxu0 %v752
    %v754 = vpop.f32.mrf.mxu0
    %v755 = vadd.f32 0.0, %v754
    %v756 = vpop.f32.mrf.mxu0
    %757 = vdwg.mxu0
    %758 = vmatprep.subr.mxu0 0.0
    %759 = vmatpush1.msra.mxu0 0.0
    %760 = vmatprep.subr.mxu0 0.0
    %761 = vmatpush1.msra.mxu0 0.0
    %762 = vmatprep.subr.mxu0 0.0
    %763 = vmatpush1.msra.mxu0 0.0
    %764 = vmatprep.subr.mxu0 0.0
    %765 = vmatpush1.msra.mxu0 0.0
    %766 = vmatprep.subr.mxu0 0.0
    %767 = vmatpush1.msra.mxu0 0.0
    %768 = vmatprep.subr.mxu0 0.0
    %769 = vmatpush1.msra.mxu0 0.0
    %770 = vmatprep.subr.mxu0 0.0
    %771 = vmatpush1.msra.mxu0 0.0
    %772 = vmatprep.subr.mxu0 0.0
    %773 = vmatpush1.msra.mxu0 0.0
    %774 = vmatprep.subr.mxu0 0.0
    %775 = vmatpush1.msra.mxu0 0.0
    %776 = vmatprep.subr.mxu0 0.0
    %777 = vmatpush1.msra.mxu0 0.0
    %778 = vmatprep.subr.mxu0 0.0
    %779 = vmatpush1.msra.mxu0 0.0
    %780 = vmatprep.subr.mxu0 0.0
    %781 = vmatpush1.msra.mxu0 0.0
    %782 = vmatprep.subr.mxu0 0.0
    %783 = vmatpush1.msra.mxu0 0.0
    %784 = vmatprep.subr.mxu0 0.0
    %785 = vmatpush1.msra.mxu0 0.0
    %786 = vmatprep.subr.mxu0 0.0
    %787 = vmatpush1.msra.mxu0 0.0
    %788 = vmatprep.subr.mxu0 0.0
    %v789 = vand.u32 %v72, 4294901760
    %v790 = vsub.f32 %v72, %v789
    %v791 = vand.u32 %v790, 4294901760
    %v792 = vsub.f32 %v790, %v791
    %v793 = vand.u32 %v792, 4294901760
    %794 = vmatpush1.msra.mxu0 %v793
    %795 = vmatprep.subr.mxu0 0.0
    %796 = vmatpush2.msra.mxu0 0.0
    %797 = vmatprep.subr.mxu0 0.0
    %798 = vmatpush2.msra.mxu0 0.0
    %799 = vmatprep.subr.mxu0 0.0
    %800 = vmatpush2.msra.mxu0 0.0
    %801 = vmatprep.subr.mxu0 0.0
    %802 = vmatpush2.msra.mxu0 0.0
    %803 = vmatprep.subr.mxu0 0.0
    %804 = vmatpush2.msra.mxu0 0.0
    %805 = vmatprep.subr.mxu0 0.0
    %806 = vmatpush2.msra.mxu0 0.0
    %807 = vmatprep.subr.mxu0 0.0
    %808 = vmatpush2.msra.mxu0 0.0
    %809 = vmatprep.subr.mxu0 0.0
    %810 = vmatpush2.msra.mxu0 0.0
    %811 = vmatprep.subr.mxu0 0.0
    %812 = vmatpush2.msra.mxu0 0.0
    %813 = vmatprep.subr.mxu0 0.0
    %814 = vmatpush2.msra.mxu0 0.0
    %815 = vmatprep.subr.mxu0 0.0
    %816 = vmatpush2.msra.mxu0 0.0
    %817 = vmatprep.subr.mxu0 0.0
    %818 = vmatpush2.msra.mxu0 0.0
    %819 = vmatprep.subr.mxu0 0.0
    %820 = vmatpush2.msra.mxu0 0.0
    %821 = vmatprep.subr.mxu0 0.0
    %822 = vmatpush2.msra.mxu0 0.0
    %823 = vmatprep.subr.mxu0 0.0
    %824 = vmatpush2.msra.mxu0 0.0
    %825 = vmatprep.subr.mxu0 0.0
    %826 = vmatpush2.msra.mxu0 0.0
    %827 = vmatprep.mubr.f32.mxu0 0.0
    %v828 = vand.u32 %v667, 4294901760
    %829 = vmatmul.mubr.f32.gmra.mxu0 %v828
    %v830 = vpop.f32.mrf.mxu0
    %v831 = vadd.f32 %v745, %v830
    %v832 = vpop.f32.mrf.mxu0
    %833 = vmatprep.mubr.f32.mxu0 0.0
    %v834 = vand.u32 %v670, 4294901760
    %835 = vmatmul.mubr.f32.gmra.mxu0 %v834
    %v836 = vpop.f32.mrf.mxu0
    %v837 = vadd.f32 %v755, %v836
    %v838 = vpop.f32.mrf.mxu0
    %839 = vdwg.mxu0
    %840 = vmatprep.subr.mxu0 0.0
    %841 = vmatpush1.msra.mxu0 0.0
    %842 = vmatprep.subr.mxu0 0.0
    %843 = vmatpush1.msra.mxu0 0.0
    %844 = vmatprep.subr.mxu0 0.0
    %845 = vmatpush1.msra.mxu0 0.0
    %846 = vmatprep.subr.mxu0 0.0
    %847 = vmatpush1.msra.mxu0 0.0
    %848 = vmatprep.subr.mxu0 0.0
    %849 = vmatpush1.msra.mxu0 0.0
    %850 = vmatprep.subr.mxu0 0.0
    %851 = vmatpush1.msra.mxu0 0.0
    %852 = vmatprep.subr.mxu0 0.0
    %853 = vmatpush1.msra.mxu0 0.0
    %854 = vmatprep.subr.mxu0 0.0
    %855 = vmatpush1.msra.mxu0 0.0
    %856 = vmatprep.subr.mxu0 0.0
    %857 = vmatpush1.msra.mxu0 0.0
    %858 = vmatprep.subr.mxu0 0.0
    %859 = vmatpush1.msra.mxu0 0.0
    %860 = vmatprep.subr.mxu0 0.0
    %861 = vmatpush1.msra.mxu0 0.0
    %862 = vmatprep.subr.mxu0 0.0
    %863 = vmatpush1.msra.mxu0 0.0
    %864 = vmatprep.subr.mxu0 0.0
    %865 = vmatpush1.msra.mxu0 0.0
    %866 = vmatprep.subr.mxu0 0.0
    %867 = vmatpush1.msra.mxu0 0.0
    %868 = vmatprep.subr.mxu0 0.0
    %869 = vmatpush1.msra.mxu0 0.0
    %870 = vmatprep.subr.mxu0 0.0
    %v871 = vand.u32 %v72, 4294901760
    %v872 = vsub.f32 %v72, %v871
    %873 = vmatpush1.msra.mxu0 %v872
    %874 = vmatprep.subr.mxu0 0.0
    %875 = vmatpush2.msra.mxu0 0.0
    %876 = vmatprep.subr.mxu0 0.0
    %877 = vmatpush2.msra.mxu0 0.0
    %878 = vmatprep.subr.mxu0 0.0
    %879 = vmatpush2.msra.mxu0 0.0
    %880 = vmatprep.subr.mxu0 0.0
    %881 = vmatpush2.msra.mxu0 0.0
    %882 = vmatprep.subr.mxu0 0.0
    %883 = vmatpush2.msra.mxu0 0.0
    %884 = vmatprep.subr.mxu0 0.0
    %885 = vmatpush2.msra.mxu0 0.0
    %886 = vmatprep.subr.mxu0 0.0
    %887 = vmatpush2.msra.mxu0 0.0
    %888 = vmatprep.subr.mxu0 0.0
    %889 = vmatpush2.msra.mxu0 0.0
    %890 = vmatprep.subr.mxu0 0.0
    %891 = vmatpush2.msra.mxu0 0.0
    %892 = vmatprep.subr.mxu0 0.0
    %893 = vmatpush2.msra.mxu0 0.0
    %894 = vmatprep.subr.mxu0 0.0
    %895 = vmatpush2.msra.mxu0 0.0
    %896 = vmatprep.subr.mxu0 0.0
    %897 = vmatpush2.msra.mxu0 0.0
    %898 = vmatprep.subr.mxu0 0.0
    %899 = vmatpush2.msra.mxu0 0.0
    %900 = vmatprep.subr.mxu0 0.0
    %901 = vmatpush2.msra.mxu0 0.0
    %902 = vmatprep.subr.mxu0 0.0
    %903 = vmatpush2.msra.mxu0 0.0
    %904 = vmatprep.subr.mxu0 0.0
    %905 = vmatpush2.msra.mxu0 0.0
    %906 = vmatprep.mubr.f32.mxu0 0.0
    %v907 = vand.u32 %v667, 4294901760
    %v908 = vsub.f32 %v667, %v907
    %909 = vmatmul.mubr.f32.gmra.mxu0 %v908
    %v910 = vpop.f32.mrf.mxu0
    %v911 = vadd.f32 %v831, %v910
    %v912 = vpop.f32.mrf.mxu0
    %913 = vmatprep.mubr.f32.mxu0 0.0
    %v914 = vand.u32 %v670, 4294901760
    %v915 = vsub.f32 %v670, %v914
    %916 = vmatmul.mubr.f32.gmra.mxu0 %v915
    %v917 = vpop.f32.mrf.mxu0
    %v918 = vadd.f32 %v837, %v917
    %v919 = vpop.f32.mrf.mxu0
    %920 = vdwg.mxu0
    %921 = vmatprep.subr.mxu0 0.0
    %922 = vmatpush1.msra.mxu0 0.0
    %923 = vmatprep.subr.mxu0 0.0
    %924 = vmatpush1.msra.mxu0 0.0
    %925 = vmatprep.subr.mxu0 0.0
    %926 = vmatpush1.msra.mxu0 0.0
    %927 = vmatprep.subr.mxu0 0.0
    %928 = vmatpush1.msra.mxu0 0.0
    %929 = vmatprep.subr.mxu0 0.0
    %930 = vmatpush1.msra.mxu0 0.0
    %931 = vmatprep.subr.mxu0 0.0
    %932 = vmatpush1.msra.mxu0 0.0
    %933 = vmatprep.subr.mxu0 0.0
    %934 = vmatpush1.msra.mxu0 0.0
    %935 = vmatprep.subr.mxu0 0.0
    %936 = vmatpush1.msra.mxu0 0.0
    %937 = vmatprep.subr.mxu0 0.0
    %938 = vmatpush1.msra.mxu0 0.0
    %939 = vmatprep.subr.mxu0 0.0
    %940 = vmatpush1.msra.mxu0 0.0
    %941 = vmatprep.subr.mxu0 0.0
    %942 = vmatpush1.msra.mxu0 0.0
    %943 = vmatprep.subr.mxu0 0.0
    %944 = vmatpush1.msra.mxu0 0.0
    %945 = vmatprep.subr.mxu0 0.0
    %946 = vmatpush1.msra.mxu0 0.0
    %947 = vmatprep.subr.mxu0 0.0
    %948 = vmatpush1.msra.mxu0 0.0
    %949 = vmatprep.subr.mxu0 0.0
    %950 = vmatpush1.msra.mxu0 0.0
    %951 = vmatprep.subr.mxu0 0.0
    %v952 = vand.u32 %v72, 4294901760
    %953 = vmatpush1.msra.mxu0 %v952
    %954 = vmatprep.subr.mxu0 0.0
    %955 = vmatpush2.msra.mxu0 0.0
    %956 = vmatprep.subr.mxu0 0.0
    %957 = vmatpush2.msra.mxu0 0.0
    %958 = vmatprep.subr.mxu0 0.0
    %959 = vmatpush2.msra.mxu0 0.0
    %960 = vmatprep.subr.mxu0 0.0
    %961 = vmatpush2.msra.mxu0 0.0
    %962 = vmatprep.subr.mxu0 0.0
    %963 = vmatpush2.msra.mxu0 0.0
    %964 = vmatprep.subr.mxu0 0.0
    %965 = vmatpush2.msra.mxu0 0.0
    %966 = vmatprep.subr.mxu0 0.0
    %967 = vmatpush2.msra.mxu0 0.0
    %968 = vmatprep.subr.mxu0 0.0
    %969 = vmatpush2.msra.mxu0 0.0
    %970 = vmatprep.subr.mxu0 0.0
    %971 = vmatpush2.msra.mxu0 0.0
    %972 = vmatprep.subr.mxu0 0.0
    %973 = vmatpush2.msra.mxu0 0.0
    %974 = vmatprep.subr.mxu0 0.0
    %975 = vmatpush2.msra.mxu0 0.0
    %976 = vmatprep.subr.mxu0 0.0
    %977 = vmatpush2.msra.mxu0 0.0
    %978 = vmatprep.subr.mxu0 0.0
    %979 = vmatpush2.msra.mxu0 0.0
    %980 = vmatprep.subr.mxu0 0.0
    %981 = vmatpush2.msra.mxu0 0.0
    %982 = vmatprep.subr.mxu0 0.0
    %983 = vmatpush2.msra.mxu0 0.0
    %984 = vmatprep.subr.mxu0 0.0
    %985 = vmatpush2.msra.mxu0 0.0
    %986 = vmatprep.mubr.f32.mxu0 0.0
    %v987 = vand.u32 %v667, 4294901760
    %v988 = vsub.f32 %v667, %v987
    %v989 = vand.u32 %v988, 4294901760
    %990 = vmatmul.mubr.f32.gmra.mxu0 %v989
    %v991 = vpop.f32.mrf.mxu0
    %v992 = vadd.f32 %v911, %v991
    %v993 = vpop.f32.mrf.mxu0
    %994 = vmatprep.mubr.f32.mxu0 0.0
    %v995 = vand.u32 %v670, 4294901760
    %v996 = vsub.f32 %v670, %v995
    %v997 = vand.u32 %v996, 4294901760
    %998 = vmatmul.mubr.f32.gmra.mxu0 %v997
    %v999 = vpop.f32.mrf.mxu0
    %v1000 = vadd.f32 %v918, %v999
    %v1001 = vpop.f32.mrf.mxu0
    %1002 = vdwg.mxu0
    %1003 = vmatprep.subr.mxu0 0.0
    %1004 = vmatpush1.msra.mxu0 0.0
    %1005 = vmatprep.subr.mxu0 0.0
    %1006 = vmatpush1.msra.mxu0 0.0
    %1007 = vmatprep.subr.mxu0 0.0
    %1008 = vmatpush1.msra.mxu0 0.0
    %1009 = vmatprep.subr.mxu0 0.0
    %1010 = vmatpush1.msra.mxu0 0.0
    %1011 = vmatprep.subr.mxu0 0.0
    %1012 = vmatpush1.msra.mxu0 0.0
    %1013 = vmatprep.subr.mxu0 0.0
    %1014 = vmatpush1.msra.mxu0 0.0
    %1015 = vmatprep.subr.mxu0 0.0
    %1016 = vmatpush1.msra.mxu0 0.0
    %1017 = vmatprep.subr.mxu0 0.0
    %1018 = vmatpush1.msra.mxu0 0.0
    %1019 = vmatprep.subr.mxu0 0.0
    %1020 = vmatpush1.msra.mxu0 0.0
    %1021 = vmatprep.subr.mxu0 0.0
    %1022 = vmatpush1.msra.mxu0 0.0
    %1023 = vmatprep.subr.mxu0 0.0
    %1024 = vmatpush1.msra.mxu0 0.0
    %1025 = vmatprep.subr.mxu0 0.0
    %1026 = vmatpush1.msra.mxu0 0.0
    %1027 = vmatprep.subr.mxu0 0.0
    %1028 = vmatpush1.msra.mxu0 0.0
    %1029 = vmatprep.subr.mxu0 0.0
    %1030 = vmatpush1.msra.mxu0 0.0
    %1031 = vmatprep.subr.mxu0 0.0
    %1032 = vmatpush1.msra.mxu0 0.0
    %1033 = vmatprep.subr.mxu0 0.0
    %v1034 = vand.u32 %v72, 4294901760
    %v1035 = vsub.f32 %v72, %v1034
    %v1036 = vand.u32 %v1035, 4294901760
    %1037 = vmatpush1.msra.mxu0 %v1036
    %1038 = vmatprep.subr.mxu0 0.0
    %1039 = vmatpush2.msra.mxu0 0.0
    %1040 = vmatprep.subr.mxu0 0.0
    %1041 = vmatpush2.msra.mxu0 0.0
    %1042 = vmatprep.subr.mxu0 0.0
    %1043 = vmatpush2.msra.mxu0 0.0
    %1044 = vmatprep.subr.mxu0 0.0
    %1045 = vmatpush2.msra.mxu0 0.0
    %1046 = vmatprep.subr.mxu0 0.0
    %1047 = vmatpush2.msra.mxu0 0.0
    %1048 = vmatprep.subr.mxu0 0.0
    %1049 = vmatpush2.msra.mxu0 0.0
    %1050 = vmatprep.subr.mxu0 0.0
    %1051 = vmatpush2.msra.mxu0 0.0
    %1052 = vmatprep.subr.mxu0 0.0
    %1053 = vmatpush2.msra.mxu0 0.0
    %1054 = vmatprep.subr.mxu0 0.0
    %1055 = vmatpush2.msra.mxu0 0.0
    %1056 = vmatprep.subr.mxu0 0.0
    %1057 = vmatpush2.msra.mxu0 0.0
    %1058 = vmatprep.subr.mxu0 0.0
    %1059 = vmatpush2.msra.mxu0 0.0
    %1060 = vmatprep.subr.mxu0 0.0
    %1061 = vmatpush2.msra.mxu0 0.0
    %1062 = vmatprep.subr.mxu0 0.0
    %1063 = vmatpush2.msra.mxu0 0.0
    %1064 = vmatprep.subr.mxu0 0.0
    %1065 = vmatpush2.msra.mxu0 0.0
    %1066 = vmatprep.subr.mxu0 0.0
    %1067 = vmatpush2.msra.mxu0 0.0
    %1068 = vmatprep.subr.mxu0 0.0
    %1069 = vmatpush2.msra.mxu0 0.0
    %1070 = vmatprep.mubr.f32.mxu0 0.0
    %v1071 = vand.u32 %v667, 4294901760
    %1072 = vmatmul.mubr.f32.gmra.mxu0 %v1071
    %v1073 = vpop.f32.mrf.mxu0
    %v1074 = vadd.f32 %v992, %v1073
    %v1075 = vpop.f32.mrf.mxu0
    %1076 = vmatprep.mubr.f32.mxu0 0.0
    %v1077 = vand.u32 %v670, 4294901760
    %1078 = vmatmul.mubr.f32.gmra.mxu0 %v1077
    %v1079 = vpop.f32.mrf.mxu0
    %v1080 = vadd.f32 %v1000, %v1079
    %v1081 = vpop.f32.mrf.mxu0
    %1082 = vdwg.mxu0
    %1083 = vmatprep.subr.mxu0 0.0
    %1084 = vmatpush1.msra.mxu0 0.0
    %1085 = vmatprep.subr.mxu0 0.0
    %1086 = vmatpush1.msra.mxu0 0.0
    %1087 = vmatprep.subr.mxu0 0.0
    %1088 = vmatpush1.msra.mxu0 0.0
    %1089 = vmatprep.subr.mxu0 0.0
    %1090 = vmatpush1.msra.mxu0 0.0
    %1091 = vmatprep.subr.mxu0 0.0
    %1092 = vmatpush1.msra.mxu0 0.0
    %1093 = vmatprep.subr.mxu0 0.0
    %1094 = vmatpush1.msra.mxu0 0.0
    %1095 = vmatprep.subr.mxu0 0.0
    %1096 = vmatpush1.msra.mxu0 0.0
    %1097 = vmatprep.subr.mxu0 0.0
    %1098 = vmatpush1.msra.mxu0 0.0
    %1099 = vmatprep.subr.mxu0 0.0
    %1100 = vmatpush1.msra.mxu0 0.0
    %1101 = vmatprep.subr.mxu0 0.0
    %1102 = vmatpush1.msra.mxu0 0.0
    %1103 = vmatprep.subr.mxu0 0.0
    %1104 = vmatpush1.msra.mxu0 0.0
    %1105 = vmatprep.subr.mxu0 0.0
    %1106 = vmatpush1.msra.mxu0 0.0
    %1107 = vmatprep.subr.mxu0 0.0
    %1108 = vmatpush1.msra.mxu0 0.0
    %1109 = vmatprep.subr.mxu0 0.0
    %1110 = vmatpush1.msra.mxu0 0.0
    %1111 = vmatprep.subr.mxu0 0.0
    %1112 = vmatpush1.msra.mxu0 0.0
    %1113 = vmatprep.subr.mxu0 0.0
    %v1114 = vand.u32 %v72, 4294901760
    %1115 = vmatpush1.msra.mxu0 %v1114
    %1116 = vmatprep.subr.mxu0 0.0
    %1117 = vmatpush2.msra.mxu0 0.0
    %1118 = vmatprep.subr.mxu0 0.0
    %1119 = vmatpush2.msra.mxu0 0.0
    %1120 = vmatprep.subr.mxu0 0.0
    %1121 = vmatpush2.msra.mxu0 0.0
    %1122 = vmatprep.subr.mxu0 0.0
    %1123 = vmatpush2.msra.mxu0 0.0
    %1124 = vmatprep.subr.mxu0 0.0
    %1125 = vmatpush2.msra.mxu0 0.0
    %1126 = vmatprep.subr.mxu0 0.0
    %1127 = vmatpush2.msra.mxu0 0.0
    %1128 = vmatprep.subr.mxu0 0.0
    %1129 = vmatpush2.msra.mxu0 0.0
    %1130 = vmatprep.subr.mxu0 0.0
    %1131 = vmatpush2.msra.mxu0 0.0
    %1132 = vmatprep.subr.mxu0 0.0
    %1133 = vmatpush2.msra.mxu0 0.0
    %1134 = vmatprep.subr.mxu0 0.0
    %1135 = vmatpush2.msra.mxu0 0.0
    %1136 = vmatprep.subr.mxu0 0.0
    %1137 = vmatpush2.msra.mxu0 0.0
    %1138 = vmatprep.subr.mxu0 0.0
    %1139 = vmatpush2.msra.mxu0 0.0
    %1140 = vmatprep.subr.mxu0 0.0
    %1141 = vmatpush2.msra.mxu0 0.0
    %1142 = vmatprep.subr.mxu0 0.0
    %1143 = vmatpush2.msra.mxu0 0.0
    %1144 = vmatprep.subr.mxu0 0.0
    %1145 = vmatpush2.msra.mxu0 0.0
    %1146 = vmatprep.subr.mxu0 0.0
    %1147 = vmatpush2.msra.mxu0 0.0
    %1148 = vmatprep.mubr.f32.mxu0 0.0
    %v1149 = vand.u32 %v667, 4294901760
    %1150 = vmatmul.mubr.f32.gmra.mxu0 %v1149
    %v1151 = vpop.f32.mrf.mxu0
    %v1152 = vadd.f32 %v1074, %v1151
    %v1153 = vpop.f32.mrf.mxu0
    %1154 = vmatprep.mubr.f32.mxu0 0.0
    %v1155 = vand.u32 %v670, 4294901760
    %1156 = vmatmul.mubr.f32.gmra.mxu0 %v1155
    %v1157 = vpop.f32.mrf.mxu0
    %v1158 = vadd.f32 %v1080, %v1157
    %v1159 = vpop.f32.mrf.mxu0
    %1160 = vdwg.mxu0
    %v1161 = vld [vmem:[#allocation8] sm:$0xff]
    %1162 = vxpose.xlu0.b32.start [1/16] %v1161, 128
    %1163 = vxpose.xlu0.b32.cont [2/16] 0.0, 128
    %1164 = vxpose.xlu0.b32.cont [3/16] 0.0, 128
    %1165 = vxpose.xlu0.b32.cont [4/16] 0.0, 128
    %1166 = vxpose.xlu0.b32.cont [5/16] 0.0, 128
    %1167 = vxpose.xlu0.b32.cont [6/16] 0.0, 128
    %1168 = vxpose.xlu0.b32.cont [7/16] 0.0, 128
    %1169 = vxpose.xlu0.b32.cont [8/16] 0.0, 128
    %1170 = vxpose.xlu0.b32.cont [9/16] 0.0, 128
    %1171 = vxpose.xlu0.b32.cont [10/16] 0.0, 128
    %1172 = vxpose.xlu0.b32.cont [11/16] 0.0, 128
    %1173 = vxpose.xlu0.b32.cont [12/16] 0.0, 128
    %1174 = vxpose.xlu0.b32.cont [13/16] 0.0, 128
    %1175 = vxpose.xlu0.b32.cont [14/16] 0.0, 128
    %1176 = vxpose.xlu0.b32.cont [15/16] 0.0, 128
    %1177 = vxpose.xlu0.b32.end [16/16] 0.0, 128
    %v1178 = vpop.trf.xlu0
    %v1179 = vpop.trf.xlu0
    %v1180 = vpop.trf.xlu0
    %v1181 = vpop.trf.xlu0
    %v1182 = vpop.trf.xlu0
    %v1183 = vpop.trf.xlu0
    %v1184 = vpop.trf.xlu0
    %v1185 = vpop.trf.xlu0
    %v1186 = vpop.trf.xlu0
    %v1187 = vpop.trf.xlu0
    %v1188 = vpop.trf.xlu0
    %v1189 = vpop.trf.xlu0
    %v1190 = vpop.trf.xlu0
    %v1191 = vpop.trf.xlu0
    %v1192 = vpop.trf.xlu0
    %v1193 = vpop.trf.xlu0
    %v1195 = vsel %vm138, %v1178, 0
    %v1198 = vsel %vm138, %v1179, 0
    %v1201 = vsel %vm138, %v1180, 0
    %v1204 = vsel %vm138, %v1181, 0
    %v1207 = vsel %vm138, %v1182, 0
    %v1210 = vsel %vm138, %v1183, 0
    %v1213 = vsel %vm138, %v1184, 0
    %v1216 = vsel %vm138, %v1185, 0
    %1218 = vmatprep.subr.mxu0 0.0
    %1219 = vmatpush1.msra.mxu0 0.0
    %1220 = vmatprep.subr.mxu0 0.0
    %1221 = vmatpush1.msra.mxu0 0.0
    %1222 = vmatprep.subr.mxu0 0.0
    %1223 = vmatpush1.msra.mxu0 0.0
    %1224 = vmatprep.subr.mxu0 0.0
    %1225 = vmatpush1.msra.mxu0 0.0
    %1226 = vmatprep.subr.mxu0 0.0
    %1227 = vmatpush1.msra.mxu0 0.0
    %1228 = vmatprep.subr.mxu0 0.0
    %1229 = vmatpush1.msra.mxu0 0.0
    %1230 = vmatprep.subr.mxu0 0.0
    %1231 = vmatpush1.msra.mxu0 0.0
    %1232 = vmatprep.subr.mxu0 0.0
    %1233 = vmatpush1.msra.mxu0 0.0
    %1234 = vmatprep.subr.mxu0 0.0
    %1235 = vmatpush1.msra.mxu0 0.0
    %1236 = vmatprep.subr.mxu0 0.0
    %1237 = vmatpush1.msra.mxu0 0.0
    %1238 = vmatprep.subr.mxu0 0.0
    %1239 = vmatpush1.msra.mxu0 0.0
    %1240 = vmatprep.subr.mxu0 0.0
    %1241 = vmatpush1.msra.mxu0 0.0
    %1242 = vmatprep.subr.mxu0 0.0
    %1243 = vmatpush1.msra.mxu0 0.0
    %1244 = vmatprep.subr.mxu0 0.0
    %1245 = vmatpush1.msra.mxu0 0.0
    %1246 = vmatprep.subr.mxu0 0.0
    %1247 = vmatpush1.msra.mxu0 0.0
    %1248 = vmatprep.subr.mxu0 0.0
    %v1249 = vand.u32 %v71, 4294901760
    %1250 = vmatpush1.msra.mxu0 %v1249
    %1251 = vmatprep.subr.mxu0 0.0
    %1252 = vmatpush2.msra.mxu0 0.0
    %1253 = vmatprep.subr.mxu0 0.0
    %1254 = vmatpush2.msra.mxu0 0.0
    %1255 = vmatprep.subr.mxu0 0.0
    %1256 = vmatpush2.msra.mxu0 0.0
    %1257 = vmatprep.subr.mxu0 0.0
    %1258 = vmatpush2.msra.mxu0 0.0
    %1259 = vmatprep.subr.mxu0 0.0
    %1260 = vmatpush2.msra.mxu0 0.0
    %1261 = vmatprep.subr.mxu0 0.0
    %1262 = vmatpush2.msra.mxu0 0.0
    %1263 = vmatprep.subr.mxu0 0.0
    %1264 = vmatpush2.msra.mxu0 0.0
    %1265 = vmatprep.subr.mxu0 0.0
    %1266 = vmatpush2.msra.mxu0 0.0
    %1267 = vmatprep.subr.mxu0 0.0
    %1268 = vmatpush2.msra.mxu0 0.0
    %1269 = vmatprep.subr.mxu0 0.0
    %1270 = vmatpush2.msra.mxu0 0.0
    %1271 = vmatprep.subr.mxu0 0.0
    %1272 = vmatpush2.msra.mxu0 0.0
    %1273 = vmatprep.subr.mxu0 0.0
    %1274 = vmatpush2.msra.mxu0 0.0
    %1275 = vmatprep.subr.mxu0 0.0
    %1276 = vmatpush2.msra.mxu0 0.0
    %1277 = vmatprep.subr.mxu0 0.0
    %1278 = vmatpush2.msra.mxu0 0.0
    %1279 = vmatprep.subr.mxu0 0.0
    %1280 = vmatpush2.msra.mxu0 0.0
    %1281 = vmatprep.subr.mxu0 0.0
    %1282 = vmatpush2.msra.mxu0 0.0
    %1283 = vmatprep.mubr.f32.mxu0 0.0
    %v1284 = vand.u32 %v1195, 4294901760
    %v1285 = vsub.f32 %v1195, %v1284
    %v1286 = vand.u32 %v1285, 4294901760
    %v1287 = vsub.f32 %v1285, %v1286
    %v1288 = vand.u32 %v1287, 4294901760
    %1289 = vmatmul.mubr.f32.gmra.mxu0 %v1288
    %v1290 = vpop.f32.mrf.mxu0
    %v1291 = vadd.f32 0.0, %v1290
    %v1292 = vpop.f32.mrf.mxu0
    %1293 = vmatprep.mubr.f32.mxu0 0.0
    %v1294 = vand.u32 %v1198, 4294901760
    %v1295 = vsub.f32 %v1198, %v1294
    %v1296 = vand.u32 %v1295, 4294901760
    %v1297 = vsub.f32 %v1295, %v1296
    %v1298 = vand.u32 %v1297, 4294901760
    %1299 = vmatmul.mubr.f32.gmra.mxu0 %v1298
    %v1300 = vpop.f32.mrf.mxu0
    %v1301 = vadd.f32 0.0, %v1300
    %v1302 = vpop.f32.mrf.mxu0
    %1303 = vmatprep.mubr.f32.mxu0 0.0
    %v1304 = vand.u32 %v1201, 4294901760
    %v1305 = vsub.f32 %v1201, %v1304
    %v1306 = vand.u32 %v1305, 4294901760
    %v1307 = vsub.f32 %v1305, %v1306
    %v1308 = vand.u32 %v1307, 4294901760
    %1309 = vmatmul.mubr.f32.gmra.mxu0 %v1308
    %v1310 = vpop.f32.mrf.mxu0
    %v1311 = vadd.f32 0.0, %v1310
    %v1312 = vpop.f32.mrf.mxu0
    %1313 = vmatprep.mubr.f32.mxu0 0.0
    %v1314 = vand.u32 %v1204, 4294901760
    %v1315 = vsub.f32 %v1204, %v1314
    %v1316 = vand.u32 %v1315, 4294901760
    %v1317 = vsub.f32 %v1315, %v1316
    %v1318 = vand.u32 %v1317, 4294901760
    %1319 = vmatmul.mubr.f32.gmra.mxu0 %v1318
    %v1320 = vpop.f32.mrf.mxu0
    %v1321 = vadd.f32 0.0, %v1320
    %v1322 = vpop.f32.mrf.mxu0
    %1323 = vmatprep.mubr.f32.mxu0 0.0
    %v1324 = vand.u32 %v1207, 4294901760
    %v1325 = vsub.f32 %v1207, %v1324
    %v1326 = vand.u32 %v1325, 4294901760
    %v1327 = vsub.f32 %v1325, %v1326
    %v1328 = vand.u32 %v1327, 4294901760
    %1329 = vmatmul.mubr.f32.gmra.mxu0 %v1328
    %v1330 = vpop.f32.mrf.mxu0
    %v1331 = vadd.f32 0.0, %v1330
    %v1332 = vpop.f32.mrf.mxu0
    %1333 = vmatprep.mubr.f32.mxu0 0.0
    %v1334 = vand.u32 %v1210, 4294901760
    %v1335 = vsub.f32 %v1210, %v1334
    %v1336 = vand.u32 %v1335, 4294901760
    %v1337 = vsub.f32 %v1335, %v1336
    %v1338 = vand.u32 %v1337, 4294901760
    %1339 = vmatmul.mubr.f32.gmra.mxu0 %v1338
    %v1340 = vpop.f32.mrf.mxu0
    %v1341 = vadd.f32 0.0, %v1340
    %v1342 = vpop.f32.mrf.mxu0
    %1343 = vmatprep.mubr.f32.mxu0 0.0
    %v1344 = vand.u32 %v1213, 4294901760
    %v1345 = vsub.f32 %v1213, %v1344
    %v1346 = vand.u32 %v1345, 4294901760
    %v1347 = vsub.f32 %v1345, %v1346
    %v1348 = vand.u32 %v1347, 4294901760
    %1349 = vmatmul.mubr.f32.gmra.mxu0 %v1348
    %v1350 = vpop.f32.mrf.mxu0
    %v1351 = vadd.f32 0.0, %v1350
    %v1352 = vpop.f32.mrf.mxu0
    %1353 = vmatprep.mubr.f32.mxu0 0.0
    %v1354 = vand.u32 %v1216, 4294901760
    %v1355 = vsub.f32 %v1216, %v1354
    %v1356 = vand.u32 %v1355, 4294901760
    %v1357 = vsub.f32 %v1355, %v1356
    %v1358 = vand.u32 %v1357, 4294901760
    %1359 = vmatmul.mubr.f32.gmra.mxu0 %v1358
    %v1360 = vpop.f32.mrf.mxu0
    %v1361 = vadd.f32 0.0, %v1360
    %v1362 = vpop.f32.mrf.mxu0
    %1363 = vdwg.mxu0
    %1364 = vmatprep.subr.mxu0 0.0
    %1365 = vmatpush1.msra.mxu0 0.0
    %1366 = vmatprep.subr.mxu0 0.0
    %1367 = vmatpush1.msra.mxu0 0.0
    %1368 = vmatprep.subr.mxu0 0.0
    %1369 = vmatpush1.msra.mxu0 0.0
    %1370 = vmatprep.subr.mxu0 0.0
    %1371 = vmatpush1.msra.mxu0 0.0
    %1372 = vmatprep.subr.mxu0 0.0
    %1373 = vmatpush1.msra.mxu0 0.0
    %1374 = vmatprep.subr.mxu0 0.0
    %1375 = vmatpush1.msra.mxu0 0.0
    %1376 = vmatprep.subr.mxu0 0.0
    %1377 = vmatpush1.msra.mxu0 0.0
    %1378 = vmatprep.subr.mxu0 0.0
    %1379 = vmatpush1.msra.mxu0 0.0
    %1380 = vmatprep.subr.mxu0 0.0
    %1381 = vmatpush1.msra.mxu0 0.0
    %1382 = vmatprep.subr.mxu0 0.0
    %1383 = vmatpush1.msra.mxu0 0.0
    %1384 = vmatprep.subr.mxu0 0.0
    %1385 = vmatpush1.msra.mxu0 0.0
    %1386 = vmatprep.subr.mxu0 0.0
    %1387 = vmatpush1.msra.mxu0 0.0
    %1388 = vmatprep.subr.mxu0 0.0
    %1389 = vmatpush1.msra.mxu0 0.0
    %1390 = vmatprep.subr.mxu0 0.0
    %1391 = vmatpush1.msra.mxu0 0.0
    %1392 = vmatprep.subr.mxu0 0.0
    %1393 = vmatpush1.msra.mxu0 0.0
    %1394 = vmatprep.subr.mxu0 0.0
    %v1395 = vand.u32 %v71, 4294901760
    %v1396 = vsub.f32 %v71, %v1395
    %v1397 = vand.u32 %v1396, 4294901760
    %v1398 = vsub.f32 %v1396, %v1397
    %v1399 = vand.u32 %v1398, 4294901760
    %1400 = vmatpush1.msra.mxu0 %v1399
    %1401 = vmatprep.subr.mxu0 0.0
    %1402 = vmatpush2.msra.mxu0 0.0
    %1403 = vmatprep.subr.mxu0 0.0
    %1404 = vmatpush2.msra.mxu0 0.0
    %1405 = vmatprep.subr.mxu0 0.0
    %1406 = vmatpush2.msra.mxu0 0.0
    %1407 = vmatprep.subr.mxu0 0.0
    %1408 = vmatpush2.msra.mxu0 0.0
    %1409 = vmatprep.subr.mxu0 0.0
    %1410 = vmatpush2.msra.mxu0 0.0
    %1411 = vmatprep.subr.mxu0 0.0
    %1412 = vmatpush2.msra.mxu0 0.0
    %1413 = vmatprep.subr.mxu0 0.0
    %1414 = vmatpush2.msra.mxu0 0.0
    %1415 = vmatprep.subr.mxu0 0.0
    %1416 = vmatpush2.msra.mxu0 0.0
    %1417 = vmatprep.subr.mxu0 0.0
    %1418 = vmatpush2.msra.mxu0 0.0
    %1419 = vmatprep.subr.mxu0 0.0
    %1420 = vmatpush2.msra.mxu0 0.0
    %1421 = vmatprep.subr.mxu0 0.0
    %1422 = vmatpush2.msra.mxu0 0.0
    %1423 = vmatprep.subr.mxu0 0.0
    %1424 = vmatpush2.msra.mxu0 0.0
    %1425 = vmatprep.subr.mxu0 0.0
    %1426 = vmatpush2.msra.mxu0 0.0
    %1427 = vmatprep.subr.mxu0 0.0
    %1428 = vmatpush2.msra.mxu0 0.0
    %1429 = vmatprep.subr.mxu0 0.0
    %1430 = vmatpush2.msra.mxu0 0.0
    %1431 = vmatprep.subr.mxu0 0.0
    %1432 = vmatpush2.msra.mxu0 0.0
    %1433 = vmatprep.mubr.f32.mxu0 0.0
    %v1434 = vand.u32 %v1195, 4294901760
    %1435 = vmatmul.mubr.f32.gmra.mxu0 %v1434
    %v1436 = vpop.f32.mrf.mxu0
    %v1437 = vadd.f32 %v1291, %v1436
    %v1438 = vpop.f32.mrf.mxu0
    %1439 = vmatprep.mubr.f32.mxu0 0.0
    %v1440 = vand.u32 %v1198, 4294901760
    %1441 = vmatmul.mubr.f32.gmra.mxu0 %v1440
    %v1442 = vpop.f32.mrf.mxu0
    %v1443 = vadd.f32 %v1301, %v1442
    %v1444 = vpop.f32.mrf.mxu0
    %1445 = vmatprep.mubr.f32.mxu0 0.0
    %v1446 = vand.u32 %v1201, 4294901760
    %1447 = vmatmul.mubr.f32.gmra.mxu0 %v1446
    %v1448 = vpop.f32.mrf.mxu0
    %v1449 = vadd.f32 %v1311, %v1448
    %v1450 = vpop.f32.mrf.mxu0
    %1451 = vmatprep.mubr.f32.mxu0 0.0
    %v1452 = vand.u32 %v1204, 4294901760
    %1453 = vmatmul.mubr.f32.gmra.mxu0 %v1452
    %v1454 = vpop.f32.mrf.mxu0
    %v1455 = vadd.f32 %v1321, %v1454
    %v1456 = vpop.f32.mrf.mxu0
    %1457 = vmatprep.mubr.f32.mxu0 0.0
    %v1458 = vand.u32 %v1207, 4294901760
    %1459 = vmatmul.mubr.f32.gmra.mxu0 %v1458
    %v1460 = vpop.f32.mrf.mxu0
    %v1461 = vadd.f32 %v1331, %v1460
    %v1462 = vpop.f32.mrf.mxu0
    %1463 = vmatprep.mubr.f32.mxu0 0.0
    %v1464 = vand.u32 %v1210, 4294901760
    %1465 = vmatmul.mubr.f32.gmra.mxu0 %v1464
    %v1466 = vpop.f32.mrf.mxu0
    %v1467 = vadd.f32 %v1341, %v1466
    %v1468 = vpop.f32.mrf.mxu0
    %1469 = vmatprep.mubr.f32.mxu0 0.0
    %v1470 = vand.u32 %v1213, 4294901760
    %1471 = vmatmul.mubr.f32.gmra.mxu0 %v1470
    %v1472 = vpop.f32.mrf.mxu0
    %v1473 = vadd.f32 %v1351, %v1472
    %v1474 = vpop.f32.mrf.mxu0
    %1475 = vmatprep.mubr.f32.mxu0 0.0
    %v1476 = vand.u32 %v1216, 4294901760
    %1477 = vmatmul.mubr.f32.gmra.mxu0 %v1476
    %v1478 = vpop.f32.mrf.mxu0
    %v1479 = vadd.f32 %v1361, %v1478
    %v1480 = vpop.f32.mrf.mxu0
    %1481 = vdwg.mxu0
    %1482 = vmatprep.subr.mxu0 0.0
    %1483 = vmatpush1.msra.mxu0 0.0
    %1484 = vmatprep.subr.mxu0 0.0
    %1485 = vmatpush1.msra.mxu0 0.0
    %1486 = vmatprep.subr.mxu0 0.0
    %1487 = vmatpush1.msra.mxu0 0.0
    %1488 = vmatprep.subr.mxu0 0.0
    %1489 = vmatpush1.msra.mxu0 0.0
    %1490 = vmatprep.subr.mxu0 0.0
    %1491 = vmatpush1.msra.mxu0 0.0
    %1492 = vmatprep.subr.mxu0 0.0
    %1493 = vmatpush1.msra.mxu0 0.0
    %1494 = vmatprep.subr.mxu0 0.0
    %1495 = vmatpush1.msra.mxu0 0.0
    %1496 = vmatprep.subr.mxu0 0.0
    %1497 = vmatpush1.msra.mxu0 0.0
    %1498 = vmatprep.subr.mxu0 0.0
    %1499 = vmatpush1.msra.mxu0 0.0
    %1500 = vmatprep.subr.mxu0 0.0
    %1501 = vmatpush1.msra.mxu0 0.0
    %1502 = vmatprep.subr.mxu0 0.0
    %1503 = vmatpush1.msra.mxu0 0.0
    %1504 = vmatprep.subr.mxu0 0.0
    %1505 = vmatpush1.msra.mxu0 0.0
    %1506 = vmatprep.subr.mxu0 0.0
    %1507 = vmatpush1.msra.mxu0 0.0
    %1508 = vmatprep.subr.mxu0 0.0
    %1509 = vmatpush1.msra.mxu0 0.0
    %1510 = vmatprep.subr.mxu0 0.0
    %1511 = vmatpush1.msra.mxu0 0.0
    %1512 = vmatprep.subr.mxu0 0.0
    %v1513 = vand.u32 %v71, 4294901760
    %v1514 = vsub.f32 %v71, %v1513
    %1515 = vmatpush1.msra.mxu0 %v1514
    %1516 = vmatprep.subr.mxu0 0.0
    %1517 = vmatpush2.msra.mxu0 0.0
    %1518 = vmatprep.subr.mxu0 0.0
    %1519 = vmatpush2.msra.mxu0 0.0
    %1520 = vmatprep.subr.mxu0 0.0
    %1521 = vmatpush2.msra.mxu0 0.0
    %1522 = vmatprep.subr.mxu0 0.0
    %1523 = vmatpush2.msra.mxu0 0.0
    %1524 = vmatprep.subr.mxu0 0.0
    %1525 = vmatpush2.msra.mxu0 0.0
    %1526 = vmatprep.subr.mxu0 0.0
    %1527 = vmatpush2.msra.mxu0 0.0
    %1528 = vmatprep.subr.mxu0 0.0
    %1529 = vmatpush2.msra.mxu0 0.0
    %1530 = vmatprep.subr.mxu0 0.0
    %1531 = vmatpush2.msra.mxu0 0.0
    %1532 = vmatprep.subr.mxu0 0.0
    %1533 = vmatpush2.msra.mxu0 0.0
    %1534 = vmatprep.subr.mxu0 0.0
    %1535 = vmatpush2.msra.mxu0 0.0
    %1536 = vmatprep.subr.mxu0 0.0
    %1537 = vmatpush2.msra.mxu0 0.0
    %1538 = vmatprep.subr.mxu0 0.0
    %1539 = vmatpush2.msra.mxu0 0.0
    %1540 = vmatprep.subr.mxu0 0.0
    %1541 = vmatpush2.msra.mxu0 0.0
    %1542 = vmatprep.subr.mxu0 0.0
    %1543 = vmatpush2.msra.mxu0 0.0
    %1544 = vmatprep.subr.mxu0 0.0
    %1545 = vmatpush2.msra.mxu0 0.0
    %1546 = vmatprep.subr.mxu0 0.0
    %1547 = vmatpush2.msra.mxu0 0.0
    %1548 = vmatprep.mubr.f32.mxu0 0.0
    %v1549 = vand.u32 %v1195, 4294901760
    %v1550 = vsub.f32 %v1195, %v1549
    %1551 = vmatmul.mubr.f32.gmra.mxu0 %v1550
    %v1552 = vpop.f32.mrf.mxu0
    %v1553 = vadd.f32 %v1437, %v1552
    %v1554 = vpop.f32.mrf.mxu0
    %1555 = vmatprep.mubr.f32.mxu0 0.0
    %v1556 = vand.u32 %v1198, 4294901760
    %v1557 = vsub.f32 %v1198, %v1556
    %1558 = vmatmul.mubr.f32.gmra.mxu0 %v1557
    %v1559 = vpop.f32.mrf.mxu0
    %v1560 = vadd.f32 %v1443, %v1559
    %v1561 = vpop.f32.mrf.mxu0
    %1562 = vmatprep.mubr.f32.mxu0 0.0
    %v1563 = vand.u32 %v1201, 4294901760
    %v1564 = vsub.f32 %v1201, %v1563
    %1565 = vmatmul.mubr.f32.gmra.mxu0 %v1564
    %v1566 = vpop.f32.mrf.mxu0
    %v1567 = vadd.f32 %v1449, %v1566
    %v1568 = vpop.f32.mrf.mxu0
    %1569 = vmatprep.mubr.f32.mxu0 0.0
    %v1570 = vand.u32 %v1204, 4294901760
    %v1571 = vsub.f32 %v1204, %v1570
    %1572 = vmatmul.mubr.f32.gmra.mxu0 %v1571
    %v1573 = vpop.f32.mrf.mxu0
    %v1574 = vadd.f32 %v1455, %v1573
    %v1575 = vpop.f32.mrf.mxu0
    %1576 = vmatprep.mubr.f32.mxu0 0.0
    %v1577 = vand.u32 %v1207, 4294901760
    %v1578 = vsub.f32 %v1207, %v1577
    %1579 = vmatmul.mubr.f32.gmra.mxu0 %v1578
    %v1580 = vpop.f32.mrf.mxu0
    %v1581 = vadd.f32 %v1461, %v1580
    %v1582 = vpop.f32.mrf.mxu0
    %1583 = vmatprep.mubr.f32.mxu0 0.0
    %v1584 = vand.u32 %v1210, 4294901760
    %v1585 = vsub.f32 %v1210, %v1584
    %1586 = vmatmul.mubr.f32.gmra.mxu0 %v1585
    %v1587 = vpop.f32.mrf.mxu0
    %v1588 = vadd.f32 %v1467, %v1587
    %v1589 = vpop.f32.mrf.mxu0
    %1590 = vmatprep.mubr.f32.mxu0 0.0
    %v1591 = vand.u32 %v1213, 4294901760
    %v1592 = vsub.f32 %v1213, %v1591
    %1593 = vmatmul.mubr.f32.gmra.mxu0 %v1592
    %v1594 = vpop.f32.mrf.mxu0
    %v1595 = vadd.f32 %v1473, %v1594
    %v1596 = vpop.f32.mrf.mxu0
    %1597 = vmatprep.mubr.f32.mxu0 0.0
    %v1598 = vand.u32 %v1216, 4294901760
    %v1599 = vsub.f32 %v1216, %v1598
    %1600 = vmatmul.mubr.f32.gmra.mxu0 %v1599
    %v1601 = vpop.f32.mrf.mxu0
    %v1602 = vadd.f32 %v1479, %v1601
    %v1603 = vpop.f32.mrf.mxu0
    %1604 = vdwg.mxu0
    %1605 = vmatprep.subr.mxu0 0.0
    %1606 = vmatpush1.msra.mxu0 0.0
    %1607 = vmatprep.subr.mxu0 0.0
    %1608 = vmatpush1.msra.mxu0 0.0
    %1609 = vmatprep.subr.mxu0 0.0
    %1610 = vmatpush1.msra.mxu0 0.0
    %1611 = vmatprep.subr.mxu0 0.0
    %1612 = vmatpush1.msra.mxu0 0.0
    %1613 = vmatprep.subr.mxu0 0.0
    %1614 = vmatpush1.msra.mxu0 0.0
    %1615 = vmatprep.subr.mxu0 0.0
    %1616 = vmatpush1.msra.mxu0 0.0
    %1617 = vmatprep.subr.mxu0 0.0
    %1618 = vmatpush1.msra.mxu0 0.0
    %1619 = vmatprep.subr.mxu0 0.0
    %1620 = vmatpush1.msra.mxu0 0.0
    %1621 = vmatprep.subr.mxu0 0.0
    %1622 = vmatpush1.msra.mxu0 0.0
    %1623 = vmatprep.subr.mxu0 0.0
    %1624 = vmatpush1.msra.mxu0 0.0
    %1625 = vmatprep.subr.mxu0 0.0
    %1626 = vmatpush1.msra.mxu0 0.0
    %1627 = vmatprep.subr.mxu0 0.0
    %1628 = vmatpush1.msra.mxu0 0.0
    %1629 = vmatprep.subr.mxu0 0.0
    %1630 = vmatpush1.msra.mxu0 0.0
    %1631 = vmatprep.subr.mxu0 0.0
    %1632 = vmatpush1.msra.mxu0 0.0
    %1633 = vmatprep.subr.mxu0 0.0
    %1634 = vmatpush1.msra.mxu0 0.0
    %1635 = vmatprep.subr.mxu0 0.0
    %v1636 = vand.u32 %v71, 4294901760
    %1637 = vmatpush1.msra.mxu0 %v1636
    %1638 = vmatprep.subr.mxu0 0.0
    %1639 = vmatpush2.msra.mxu0 0.0
    %1640 = vmatprep.subr.mxu0 0.0
    %1641 = vmatpush2.msra.mxu0 0.0
    %1642 = vmatprep.subr.mxu0 0.0
    %1643 = vmatpush2.msra.mxu0 0.0
    %1644 = vmatprep.subr.mxu0 0.0
    %1645 = vmatpush2.msra.mxu0 0.0
    %1646 = vmatprep.subr.mxu0 0.0
    %1647 = vmatpush2.msra.mxu0 0.0
    %1648 = vmatprep.subr.mxu0 0.0
    %1649 = vmatpush2.msra.mxu0 0.0
    %1650 = vmatprep.subr.mxu0 0.0
    %1651 = vmatpush2.msra.mxu0 0.0
    %1652 = vmatprep.subr.mxu0 0.0
    %1653 = vmatpush2.msra.mxu0 0.0
    %1654 = vmatprep.subr.mxu0 0.0
    %1655 = vmatpush2.msra.mxu0 0.0
    %1656 = vmatprep.subr.mxu0 0.0
    %1657 = vmatpush2.msra.mxu0 0.0
    %1658 = vmatprep.subr.mxu0 0.0
    %1659 = vmatpush2.msra.mxu0 0.0
    %1660 = vmatprep.subr.mxu0 0.0
    %1661 = vmatpush2.msra.mxu0 0.0
    %1662 = vmatprep.subr.mxu0 0.0
    %1663 = vmatpush2.msra.mxu0 0.0
    %1664 = vmatprep.subr.mxu0 0.0
    %1665 = vmatpush2.msra.mxu0 0.0
    %1666 = vmatprep.subr.mxu0 0.0
    %1667 = vmatpush2.msra.mxu0 0.0
    %1668 = vmatprep.subr.mxu0 0.0
    %1669 = vmatpush2.msra.mxu0 0.0
    %1670 = vmatprep.mubr.f32.mxu0 0.0
    %v1671 = vand.u32 %v1195, 4294901760
    %v1672 = vsub.f32 %v1195, %v1671
    %v1673 = vand.u32 %v1672, 4294901760
    %1674 = vmatmul.mubr.f32.gmra.mxu0 %v1673
    %v1675 = vpop.f32.mrf.mxu0
    %v1676 = vadd.f32 %v1553, %v1675
    %v1677 = vpop.f32.mrf.mxu0
    %1678 = vmatprep.mubr.f32.mxu0 0.0
    %v1679 = vand.u32 %v1198, 4294901760
    %v1680 = vsub.f32 %v1198, %v1679
    %v1681 = vand.u32 %v1680, 4294901760
    %1682 = vmatmul.mubr.f32.gmra.mxu0 %v1681
    %v1683 = vpop.f32.mrf.mxu0
    %v1684 = vadd.f32 %v1560, %v1683
    %v1685 = vpop.f32.mrf.mxu0
    %1686 = vmatprep.mubr.f32.mxu0 0.0
    %v1687 = vand.u32 %v1201, 4294901760
    %v1688 = vsub.f32 %v1201, %v1687
    %v1689 = vand.u32 %v1688, 4294901760
    %1690 = vmatmul.mubr.f32.gmra.mxu0 %v1689
    %v1691 = vpop.f32.mrf.mxu0
    %v1692 = vadd.f32 %v1567, %v1691
    %v1693 = vpop.f32.mrf.mxu0
    %1694 = vmatprep.mubr.f32.mxu0 0.0
    %v1695 = vand.u32 %v1204, 4294901760
    %v1696 = vsub.f32 %v1204, %v1695
    %v1697 = vand.u32 %v1696, 4294901760
    %1698 = vmatmul.mubr.f32.gmra.mxu0 %v1697
    %v1699 = vpop.f32.mrf.mxu0
    %v1700 = vadd.f32 %v1574, %v1699
    %v1701 = vpop.f32.mrf.mxu0
    %1702 = vmatprep.mubr.f32.mxu0 0.0
    %v1703 = vand.u32 %v1207, 4294901760
    %v1704 = vsub.f32 %v1207, %v1703
    %v1705 = vand.u32 %v1704, 4294901760
    %1706 = vmatmul.mubr.f32.gmra.mxu0 %v1705
    %v1707 = vpop.f32.mrf.mxu0
    %v1708 = vadd.f32 %v1581, %v1707
    %v1709 = vpop.f32.mrf.mxu0
    %1710 = vmatprep.mubr.f32.mxu0 0.0
    %v1711 = vand.u32 %v1210, 4294901760
    %v1712 = vsub.f32 %v1210, %v1711
    %v1713 = vand.u32 %v1712, 4294901760
    %1714 = vmatmul.mubr.f32.gmra.mxu0 %v1713
    %v1715 = vpop.f32.mrf.mxu0
    %v1716 = vadd.f32 %v1588, %v1715
    %v1717 = vpop.f32.mrf.mxu0
    %1718 = vmatprep.mubr.f32.mxu0 0.0
    %v1719 = vand.u32 %v1213, 4294901760
    %v1720 = vsub.f32 %v1213, %v1719
    %v1721 = vand.u32 %v1720, 4294901760
    %1722 = vmatmul.mubr.f32.gmra.mxu0 %v1721
    %v1723 = vpop.f32.mrf.mxu0
    %v1724 = vadd.f32 %v1595, %v1723
    %v1725 = vpop.f32.mrf.mxu0
    %1726 = vmatprep.mubr.f32.mxu0 0.0
    %v1727 = vand.u32 %v1216, 4294901760
    %v1728 = vsub.f32 %v1216, %v1727
    %v1729 = vand.u32 %v1728, 4294901760
    %1730 = vmatmul.mubr.f32.gmra.mxu0 %v1729
    %v1731 = vpop.f32.mrf.mxu0
    %v1732 = vadd.f32 %v1602, %v1731
    %v1733 = vpop.f32.mrf.mxu0
    %1734 = vdwg.mxu0
    %1735 = vmatprep.subr.mxu0 0.0
    %1736 = vmatpush1.msra.mxu0 0.0
    %1737 = vmatprep.subr.mxu0 0.0
    %1738 = vmatpush1.msra.mxu0 0.0
    %1739 = vmatprep.subr.mxu0 0.0
    %1740 = vmatpush1.msra.mxu0 0.0
    %1741 = vmatprep.subr.mxu0 0.0
    %1742 = vmatpush1.msra.mxu0 0.0
    %1743 = vmatprep.subr.mxu0 0.0
    %1744 = vmatpush1.msra.mxu0 0.0
    %1745 = vmatprep.subr.mxu0 0.0
    %1746 = vmatpush1.msra.mxu0 0.0
    %1747 = vmatprep.subr.mxu0 0.0
    %1748 = vmatpush1.msra.mxu0 0.0
    %1749 = vmatprep.subr.mxu0 0.0
    %1750 = vmatpush1.msra.mxu0 0.0
    %1751 = vmatprep.subr.mxu0 0.0
    %1752 = vmatpush1.msra.mxu0 0.0
    %1753 = vmatprep.subr.mxu0 0.0
    %1754 = vmatpush1.msra.mxu0 0.0
    %1755 = vmatprep.subr.mxu0 0.0
    %1756 = vmatpush1.msra.mxu0 0.0
    %1757 = vmatprep.subr.mxu0 0.0
    %1758 = vmatpush1.msra.mxu0 0.0
    %1759 = vmatprep.subr.mxu0 0.0
    %1760 = vmatpush1.msra.mxu0 0.0
    %1761 = vmatprep.subr.mxu0 0.0
    %1762 = vmatpush1.msra.mxu0 0.0
    %1763 = vmatprep.subr.mxu0 0.0
    %1764 = vmatpush1.msra.mxu0 0.0
    %1765 = vmatprep.subr.mxu0 0.0
    %v1766 = vand.u32 %v71, 4294901760
    %v1767 = vsub.f32 %v71, %v1766
    %v1768 = vand.u32 %v1767, 4294901760
    %1769 = vmatpush1.msra.mxu0 %v1768
    %1770 = vmatprep.subr.mxu0 0.0
    %1771 = vmatpush2.msra.mxu0 0.0
    %1772 = vmatprep.subr.mxu0 0.0
    %1773 = vmatpush2.msra.mxu0 0.0
    %1774 = vmatprep.subr.mxu0 0.0
    %1775 = vmatpush2.msra.mxu0 0.0
    %1776 = vmatprep.subr.mxu0 0.0
    %1777 = vmatpush2.msra.mxu0 0.0
    %1778 = vmatprep.subr.mxu0 0.0
    %1779 = vmatpush2.msra.mxu0 0.0
    %1780 = vmatprep.subr.mxu0 0.0
    %1781 = vmatpush2.msra.mxu0 0.0
    %1782 = vmatprep.subr.mxu0 0.0
    %1783 = vmatpush2.msra.mxu0 0.0
    %1784 = vmatprep.subr.mxu0 0.0
    %1785 = vmatpush2.msra.mxu0 0.0
    %1786 = vmatprep.subr.mxu0 0.0
    %1787 = vmatpush2.msra.mxu0 0.0
    %1788 = vmatprep.subr.mxu0 0.0
    %1789 = vmatpush2.msra.mxu0 0.0
    %1790 = vmatprep.subr.mxu0 0.0
    %1791 = vmatpush2.msra.mxu0 0.0
    %1792 = vmatprep.subr.mxu0 0.0
    %1793 = vmatpush2.msra.mxu0 0.0
    %1794 = vmatprep.subr.mxu0 0.0
    %1795 = vmatpush2.msra.mxu0 0.0
    %1796 = vmatprep.subr.mxu0 0.0
    %1797 = vmatpush2.msra.mxu0 0.0
    %1798 = vmatprep.subr.mxu0 0.0
    %1799 = vmatpush2.msra.mxu0 0.0
    %1800 = vmatprep.subr.mxu0 0.0
    %1801 = vmatpush2.msra.mxu0 0.0
    %1802 = vmatprep.mubr.f32.mxu0 0.0
    %v1803 = vand.u32 %v1195, 4294901760
    %1804 = vmatmul.mubr.f32.gmra.mxu0 %v1803
    %v1805 = vpop.f32.mrf.mxu0
    %v1806 = vadd.f32 %v1676, %v1805
    %v1807 = vpop.f32.mrf.mxu0
    %1808 = vmatprep.mubr.f32.mxu0 0.0
    %v1809 = vand.u32 %v1198, 4294901760
    %1810 = vmatmul.mubr.f32.gmra.mxu0 %v1809
    %v1811 = vpop.f32.mrf.mxu0
    %v1812 = vadd.f32 %v1684, %v1811
    %v1813 = vpop.f32.mrf.mxu0
    %1814 = vmatprep.mubr.f32.mxu0 0.0
    %v1815 = vand.u32 %v1201, 4294901760
    %1816 = vmatmul.mubr.f32.gmra.mxu0 %v1815
    %v1817 = vpop.f32.mrf.mxu0
    %v1818 = vadd.f32 %v1692, %v1817
    %v1819 = vpop.f32.mrf.mxu0
    %1820 = vmatprep.mubr.f32.mxu0 0.0
    %v1821 = vand.u32 %v1204, 4294901760
    %1822 = vmatmul.mubr.f32.gmra.mxu0 %v1821
    %v1823 = vpop.f32.mrf.mxu0
    %v1824 = vadd.f32 %v1700, %v1823
    %v1825 = vpop.f32.mrf.mxu0
    %1826 = vmatprep.mubr.f32.mxu0 0.0
    %v1827 = vand.u32 %v1207, 4294901760
    %1828 = vmatmul.mubr.f32.gmra.mxu0 %v1827
    %v1829 = vpop.f32.mrf.mxu0
    %v1830 = vadd.f32 %v1708, %v1829
    %v1831 = vpop.f32.mrf.mxu0
    %1832 = vmatprep.mubr.f32.mxu0 0.0
    %v1833 = vand.u32 %v1210, 4294901760
    %1834 = vmatmul.mubr.f32.gmra.mxu0 %v1833
    %v1835 = vpop.f32.mrf.mxu0
    %v1836 = vadd.f32 %v1716, %v1835
    %v1837 = vpop.f32.mrf.mxu0
    %1838 = vmatprep.mubr.f32.mxu0 0.0
    %v1839 = vand.u32 %v1213, 4294901760
    %1840 = vmatmul.mubr.f32.gmra.mxu0 %v1839
    %v1841 = vpop.f32.mrf.mxu0
    %v1842 = vadd.f32 %v1724, %v1841
    %v1843 = vpop.f32.mrf.mxu0
    %1844 = vmatprep.mubr.f32.mxu0 0.0
    %v1845 = vand.u32 %v1216, 4294901760
    %1846 = vmatmul.mubr.f32.gmra.mxu0 %v1845
    %v1847 = vpop.f32.mrf.mxu0
    %v1848 = vadd.f32 %v1732, %v1847
    %v1849 = vpop.f32.mrf.mxu0
    %1850 = vdwg.mxu0
    %1851 = vmatprep.subr.mxu0 0.0
    %1852 = vmatpush1.msra.mxu0 0.0
    %1853 = vmatprep.subr.mxu0 0.0
    %1854 = vmatpush1.msra.mxu0 0.0
    %1855 = vmatprep.subr.mxu0 0.0
    %1856 = vmatpush1.msra.mxu0 0.0
    %1857 = vmatprep.subr.mxu0 0.0
    %1858 = vmatpush1.msra.mxu0 0.0
    %1859 = vmatprep.subr.mxu0 0.0
    %1860 = vmatpush1.msra.mxu0 0.0
    %1861 = vmatprep.subr.mxu0 0.0
    %1862 = vmatpush1.msra.mxu0 0.0
    %1863 = vmatprep.subr.mxu0 0.0
    %1864 = vmatpush1.msra.mxu0 0.0
    %1865 = vmatprep.subr.mxu0 0.0
    %1866 = vmatpush1.msra.mxu0 0.0
    %1867 = vmatprep.subr.mxu0 0.0
    %1868 = vmatpush1.msra.mxu0 0.0
    %1869 = vmatprep.subr.mxu0 0.0
    %1870 = vmatpush1.msra.mxu0 0.0
    %1871 = vmatprep.subr.mxu0 0.0
    %1872 = vmatpush1.msra.mxu0 0.0
    %1873 = vmatprep.subr.mxu0 0.0
    %1874 = vmatpush1.msra.mxu0 0.0
    %1875 = vmatprep.subr.mxu0 0.0
    %1876 = vmatpush1.msra.mxu0 0.0
    %1877 = vmatprep.subr.mxu0 0.0
    %1878 = vmatpush1.msra.mxu0 0.0
    %1879 = vmatprep.subr.mxu0 0.0
    %1880 = vmatpush1.msra.mxu0 0.0
    %1881 = vmatprep.subr.mxu0 0.0
    %v1882 = vand.u32 %v71, 4294901760
    %1883 = vmatpush1.msra.mxu0 %v1882
    %1884 = vmatprep.subr.mxu0 0.0
    %1885 = vmatpush2.msra.mxu0 0.0
    %1886 = vmatprep.subr.mxu0 0.0
    %1887 = vmatpush2.msra.mxu0 0.0
    %1888 = vmatprep.subr.mxu0 0.0
    %1889 = vmatpush2.msra.mxu0 0.0
    %1890 = vmatprep.subr.mxu0 0.0
    %1891 = vmatpush2.msra.mxu0 0.0
    %1892 = vmatprep.subr.mxu0 0.0
    %1893 = vmatpush2.msra.mxu0 0.0
    %1894 = vmatprep.subr.mxu0 0.0
    %1895 = vmatpush2.msra.mxu0 0.0
    %1896 = vmatprep.subr.mxu0 0.0
    %1897 = vmatpush2.msra.mxu0 0.0
    %1898 = vmatprep.subr.mxu0 0.0
    %1899 = vmatpush2.msra.mxu0 0.0
    %1900 = vmatprep.subr.mxu0 0.0
    %1901 = vmatpush2.msra.mxu0 0.0
    %1902 = vmatprep.subr.mxu0 0.0
    %1903 = vmatpush2.msra.mxu0 0.0
    %1904 = vmatprep.subr.mxu0 0.0
    %1905 = vmatpush2.msra.mxu0 0.0
    %1906 = vmatprep.subr.mxu0 0.0
    %1907 = vmatpush2.msra.mxu0 0.0
    %1908 = vmatprep.subr.mxu0 0.0
    %1909 = vmatpush2.msra.mxu0 0.0
    %1910 = vmatprep.subr.mxu0 0.0
    %1911 = vmatpush2.msra.mxu0 0.0
    %1912 = vmatprep.subr.mxu0 0.0
    %1913 = vmatpush2.msra.mxu0 0.0
    %1914 = vmatprep.subr.mxu0 0.0
    %1915 = vmatpush2.msra.mxu0 0.0
    %1916 = vmatprep.mubr.f32.mxu0 0.0
    %v1917 = vand.u32 %v1195, 4294901760
    %1918 = vmatmul.mubr.f32.gmra.mxu0 %v1917
    %v1919 = vpop.f32.mrf.mxu0
    %v1920 = vadd.f32 %v1806, %v1919
    %v1921 = vpop.f32.mrf.mxu0
    %1922 = vmatprep.mubr.f32.mxu0 0.0
    %v1923 = vand.u32 %v1198, 4294901760
    %1924 = vmatmul.mubr.f32.gmra.mxu0 %v1923
    %v1925 = vpop.f32.mrf.mxu0
    %v1926 = vadd.f32 %v1812, %v1925
    %v1927 = vpop.f32.mrf.mxu0
    %1928 = vmatprep.mubr.f32.mxu0 0.0
    %v1929 = vand.u32 %v1201, 4294901760
    %1930 = vmatmul.mubr.f32.gmra.mxu0 %v1929
    %v1931 = vpop.f32.mrf.mxu0
    %v1932 = vadd.f32 %v1818, %v1931
    %v1933 = vpop.f32.mrf.mxu0
    %1934 = vmatprep.mubr.f32.mxu0 0.0
    %v1935 = vand.u32 %v1204, 4294901760
    %1936 = vmatmul.mubr.f32.gmra.mxu0 %v1935
    %v1937 = vpop.f32.mrf.mxu0
    %v1938 = vadd.f32 %v1824, %v1937
    %v1939 = vpop.f32.mrf.mxu0
    %1940 = vmatprep.mubr.f32.mxu0 0.0
    %v1941 = vand.u32 %v1207, 4294901760
    %1942 = vmatmul.mubr.f32.gmra.mxu0 %v1941
    %v1943 = vpop.f32.mrf.mxu0
    %v1944 = vadd.f32 %v1830, %v1943
    %v1945 = vpop.f32.mrf.mxu0
    %1946 = vmatprep.mubr.f32.mxu0 0.0
    %v1947 = vand.u32 %v1210, 4294901760
    %1948 = vmatmul.mubr.f32.gmra.mxu0 %v1947
    %v1949 = vpop.f32.mrf.mxu0
    %v1950 = vadd.f32 %v1836, %v1949
    %v1951 = vpop.f32.mrf.mxu0
    %1952 = vmatprep.mubr.f32.mxu0 0.0
    %v1953 = vand.u32 %v1213, 4294901760
    %1954 = vmatmul.mubr.f32.gmra.mxu0 %v1953
    %v1955 = vpop.f32.mrf.mxu0
    %v1956 = vadd.f32 %v1842, %v1955
    %v1957 = vpop.f32.mrf.mxu0
    %1958 = vmatprep.mubr.f32.mxu0 0.0
    %v1959 = vand.u32 %v1216, 4294901760
    %1960 = vmatmul.mubr.f32.gmra.mxu0 %v1959
    %v1961 = vpop.f32.mrf.mxu0
    %v1962 = vadd.f32 %v1848, %v1961
    %v1963 = vpop.f32.mrf.mxu0
    %1964 = vdwg.mxu0
    %1965 = vmatprep.subr.mxu0 0.0
    %1966 = vmatpush1.msra.mxu0 0.0
    %1967 = vmatprep.subr.mxu0 0.0
    %1968 = vmatpush1.msra.mxu0 0.0
    %1969 = vmatprep.subr.mxu0 0.0
    %1970 = vmatpush1.msra.mxu0 0.0
    %1971 = vmatprep.subr.mxu0 0.0
    %1972 = vmatpush1.msra.mxu0 0.0
    %1973 = vmatprep.subr.mxu0 0.0
    %1974 = vmatpush1.msra.mxu0 0.0
    %1975 = vmatprep.subr.mxu0 0.0
    %1976 = vmatpush1.msra.mxu0 0.0
    %1977 = vmatprep.subr.mxu0 0.0
    %1978 = vmatpush1.msra.mxu0 0.0
    %1979 = vmatprep.subr.mxu0 0.0
    %1980 = vmatpush1.msra.mxu0 0.0
    %1981 = vmatprep.subr.mxu0 0.0
    %1982 = vmatpush1.msra.mxu0 0.0
    %1983 = vmatprep.subr.mxu0 0.0
    %1984 = vmatpush1.msra.mxu0 0.0
    %1985 = vmatprep.subr.mxu0 0.0
    %1986 = vmatpush1.msra.mxu0 0.0
    %1987 = vmatprep.subr.mxu0 0.0
    %1988 = vmatpush1.msra.mxu0 0.0
    %1989 = vmatprep.subr.mxu0 0.0
    %1990 = vmatpush1.msra.mxu0 0.0
    %1991 = vmatprep.subr.mxu0 0.0
    %1992 = vmatpush1.msra.mxu0 0.0
    %1993 = vmatprep.subr.mxu0 0.0
    %1994 = vmatpush1.msra.mxu0 0.0
    %1995 = vmatprep.subr.mxu0 0.0
    %v1996 = vand.u32 %v72, 4294901760
    %1997 = vmatpush1.msra.mxu0 %v1996
    %1998 = vmatprep.subr.mxu0 0.0
    %1999 = vmatpush2.msra.mxu0 0.0
    %2000 = vmatprep.subr.mxu0 0.0
    %2001 = vmatpush2.msra.mxu0 0.0
    %2002 = vmatprep.subr.mxu0 0.0
    %2003 = vmatpush2.msra.mxu0 0.0
    %2004 = vmatprep.subr.mxu0 0.0
    %2005 = vmatpush2.msra.mxu0 0.0
    %2006 = vmatprep.subr.mxu0 0.0
    %2007 = vmatpush2.msra.mxu0 0.0
    %2008 = vmatprep.subr.mxu0 0.0
    %2009 = vmatpush2.msra.mxu0 0.0
    %2010 = vmatprep.subr.mxu0 0.0
    %2011 = vmatpush2.msra.mxu0 0.0
    %2012 = vmatprep.subr.mxu0 0.0
    %2013 = vmatpush2.msra.mxu0 0.0
    %2014 = vmatprep.subr.mxu0 0.0
    %2015 = vmatpush2.msra.mxu0 0.0
    %2016 = vmatprep.subr.mxu0 0.0
    %2017 = vmatpush2.msra.mxu0 0.0
    %2018 = vmatprep.subr.mxu0 0.0
    %2019 = vmatpush2.msra.mxu0 0.0
    %2020 = vmatprep.subr.mxu0 0.0
    %2021 = vmatpush2.msra.mxu0 0.0
    %2022 = vmatprep.subr.mxu0 0.0
    %2023 = vmatpush2.msra.mxu0 0.0
    %2024 = vmatprep.subr.mxu0 0.0
    %2025 = vmatpush2.msra.mxu0 0.0
    %2026 = vmatprep.subr.mxu0 0.0
    %2027 = vmatpush2.msra.mxu0 0.0
    %2028 = vmatprep.subr.mxu0 0.0
    %2029 = vmatpush2.msra.mxu0 0.0
    %2030 = vmatprep.mubr.f32.mxu0 0.0
    %v2031 = vand.u32 %v1195, 4294901760
    %v2032 = vsub.f32 %v1195, %v2031
    %v2033 = vand.u32 %v2032, 4294901760
    %v2034 = vsub.f32 %v2032, %v2033
    %v2035 = vand.u32 %v2034, 4294901760
    %2036 = vmatmul.mubr.f32.gmra.mxu0 %v2035
    %v2037 = vpop.f32.mrf.mxu0
    %v2038 = vadd.f32 0.0, %v2037
    %v2039 = vpop.f32.mrf.mxu0
    %2040 = vmatprep.mubr.f32.mxu0 0.0
    %v2041 = vand.u32 %v1198, 4294901760
    %v2042 = vsub.f32 %v1198, %v2041
    %v2043 = vand.u32 %v2042, 4294901760
    %v2044 = vsub.f32 %v2042, %v2043
    %v2045 = vand.u32 %v2044, 4294901760
    %2046 = vmatmul.mubr.f32.gmra.mxu0 %v2045
    %v2047 = vpop.f32.mrf.mxu0
    %v2048 = vadd.f32 0.0, %v2047
    %v2049 = vpop.f32.mrf.mxu0
    %2050 = vmatprep.mubr.f32.mxu0 0.0
    %v2051 = vand.u32 %v1201, 4294901760
    %v2052 = vsub.f32 %v1201, %v2051
    %v2053 = vand.u32 %v2052, 4294901760
    %v2054 = vsub.f32 %v2052, %v2053
    %v2055 = vand.u32 %v2054, 4294901760
    %2056 = vmatmul.mubr.f32.gmra.mxu0 %v2055
    %v2057 = vpop.f32.mrf.mxu0
    %v2058 = vadd.f32 0.0, %v2057
    %v2059 = vpop.f32.mrf.mxu0
    %2060 = vmatprep.mubr.f32.mxu0 0.0
    %v2061 = vand.u32 %v1204, 4294901760
    %v2062 = vsub.f32 %v1204, %v2061
    %v2063 = vand.u32 %v2062, 4294901760
    %v2064 = vsub.f32 %v2062, %v2063
    %v2065 = vand.u32 %v2064, 4294901760
    %2066 = vmatmul.mubr.f32.gmra.mxu0 %v2065
    %v2067 = vpop.f32.mrf.mxu0
    %v2068 = vadd.f32 0.0, %v2067
    %v2069 = vpop.f32.mrf.mxu0
    %2070 = vmatprep.mubr.f32.mxu0 0.0
    %v2071 = vand.u32 %v1207, 4294901760
    %v2072 = vsub.f32 %v1207, %v2071
    %v2073 = vand.u32 %v2072, 4294901760
    %v2074 = vsub.f32 %v2072, %v2073
    %v2075 = vand.u32 %v2074, 4294901760
    %2076 = vmatmul.mubr.f32.gmra.mxu0 %v2075
    %v2077 = vpop.f32.mrf.mxu0
    %v2078 = vadd.f32 0.0, %v2077
    %v2079 = vpop.f32.mrf.mxu0
    %2080 = vmatprep.mubr.f32.mxu0 0.0
    %v2081 = vand.u32 %v1210, 4294901760
    %v2082 = vsub.f32 %v1210, %v2081
    %v2083 = vand.u32 %v2082, 4294901760
    %v2084 = vsub.f32 %v2082, %v2083
    %v2085 = vand.u32 %v2084, 4294901760
    %2086 = vmatmul.mubr.f32.gmra.mxu0 %v2085
    %v2087 = vpop.f32.mrf.mxu0
    %v2088 = vadd.f32 0.0, %v2087
    %v2089 = vpop.f32.mrf.mxu0
    %2090 = vmatprep.mubr.f32.mxu0 0.0
    %v2091 = vand.u32 %v1213, 4294901760
    %v2092 = vsub.f32 %v1213, %v2091
    %v2093 = vand.u32 %v2092, 4294901760
    %v2094 = vsub.f32 %v2092, %v2093
    %v2095 = vand.u32 %v2094, 4294901760
    %2096 = vmatmul.mubr.f32.gmra.mxu0 %v2095
    %v2097 = vpop.f32.mrf.mxu0
    %v2098 = vadd.f32 0.0, %v2097
    %v2099 = vpop.f32.mrf.mxu0
    %2100 = vmatprep.mubr.f32.mxu0 0.0
    %v2101 = vand.u32 %v1216, 4294901760
    %v2102 = vsub.f32 %v1216, %v2101
    %v2103 = vand.u32 %v2102, 4294901760
    %v2104 = vsub.f32 %v2102, %v2103
    %v2105 = vand.u32 %v2104, 4294901760
    %2106 = vmatmul.mubr.f32.gmra.mxu0 %v2105
    %v2107 = vpop.f32.mrf.mxu0
    %v2108 = vadd.f32 0.0, %v2107
    %v2109 = vpop.f32.mrf.mxu0
    %2110 = vdwg.mxu0
    %2111 = vmatprep.subr.mxu0 0.0
    %2112 = vmatpush1.msra.mxu0 0.0
    %2113 = vmatprep.subr.mxu0 0.0
    %2114 = vmatpush1.msra.mxu0 0.0
    %2115 = vmatprep.subr.mxu0 0.0
    %2116 = vmatpush1.msra.mxu0 0.0
    %2117 = vmatprep.subr.mxu0 0.0
    %2118 = vmatpush1.msra.mxu0 0.0
    %2119 = vmatprep.subr.mxu0 0.0
    %2120 = vmatpush1.msra.mxu0 0.0
    %2121 = vmatprep.subr.mxu0 0.0
    %2122 = vmatpush1.msra.mxu0 0.0
    %2123 = vmatprep.subr.mxu0 0.0
    %2124 = vmatpush1.msra.mxu0 0.0
    %2125 = vmatprep.subr.mxu0 0.0
    %2126 = vmatpush1.msra.mxu0 0.0
    %2127 = vmatprep.subr.mxu0 0.0
    %2128 = vmatpush1.msra.mxu0 0.0
    %2129 = vmatprep.subr.mxu0 0.0
    %2130 = vmatpush1.msra.mxu0 0.0
    %2131 = vmatprep.subr.mxu0 0.0
    %2132 = vmatpush1.msra.mxu0 0.0
    %2133 = vmatprep.subr.mxu0 0.0
    %2134 = vmatpush1.msra.mxu0 0.0
    %2135 = vmatprep.subr.mxu0 0.0
    %2136 = vmatpush1.msra.mxu0 0.0
    %2137 = vmatprep.subr.mxu0 0.0
    %2138 = vmatpush1.msra.mxu0 0.0
    %2139 = vmatprep.subr.mxu0 0.0
    %2140 = vmatpush1.msra.mxu0 0.0
    %2141 = vmatprep.subr.mxu0 0.0
    %v2142 = vand.u32 %v72, 4294901760
    %v2143 = vsub.f32 %v72, %v2142
    %v2144 = vand.u32 %v2143, 4294901760
    %v2145 = vsub.f32 %v2143, %v2144
    %v2146 = vand.u32 %v2145, 4294901760
    %2147 = vmatpush1.msra.mxu0 %v2146
    %2148 = vmatprep.subr.mxu0 0.0
    %2149 = vmatpush2.msra.mxu0 0.0
    %2150 = vmatprep.subr.mxu0 0.0
    %2151 = vmatpush2.msra.mxu0 0.0
    %2152 = vmatprep.subr.mxu0 0.0
    %2153 = vmatpush2.msra.mxu0 0.0
    %2154 = vmatprep.subr.mxu0 0.0
    %2155 = vmatpush2.msra.mxu0 0.0
    %2156 = vmatprep.subr.mxu0 0.0
    %2157 = vmatpush2.msra.mxu0 0.0
    %2158 = vmatprep.subr.mxu0 0.0
    %2159 = vmatpush2.msra.mxu0 0.0
    %2160 = vmatprep.subr.mxu0 0.0
    %2161 = vmatpush2.msra.mxu0 0.0
    %2162 = vmatprep.subr.mxu0 0.0
    %2163 = vmatpush2.msra.mxu0 0.0
    %2164 = vmatprep.subr.mxu0 0.0
    %2165 = vmatpush2.msra.mxu0 0.0
    %2166 = vmatprep.subr.mxu0 0.0
    %2167 = vmatpush2.msra.mxu0 0.0
    %2168 = vmatprep.subr.mxu0 0.0
    %2169 = vmatpush2.msra.mxu0 0.0
    %2170 = vmatprep.subr.mxu0 0.0
    %2171 = vmatpush2.msra.mxu0 0.0
    %2172 = vmatprep.subr.mxu0 0.0
    %2173 = vmatpush2.msra.mxu0 0.0
    %2174 = vmatprep.subr.mxu0 0.0
    %2175 = vmatpush2.msra.mxu0 0.0
    %2176 = vmatprep.subr.mxu0 0.0
    %2177 = vmatpush2.msra.mxu0 0.0
    %2178 = vmatprep.subr.mxu0 0.0
    %2179 = vmatpush2.msra.mxu0 0.0
    %2180 = vmatprep.mubr.f32.mxu0 0.0
    %v2181 = vand.u32 %v1195, 4294901760
    %2182 = vmatmul.mubr.f32.gmra.mxu0 %v2181
    %v2183 = vpop.f32.mrf.mxu0
    %v2184 = vadd.f32 %v2038, %v2183
    %v2185 = vpop.f32.mrf.mxu0
    %2186 = vmatprep.mubr.f32.mxu0 0.0
    %v2187 = vand.u32 %v1198, 4294901760
    %2188 = vmatmul.mubr.f32.gmra.mxu0 %v2187
    %v2189 = vpop.f32.mrf.mxu0
    %v2190 = vadd.f32 %v2048, %v2189
    %v2191 = vpop.f32.mrf.mxu0
    %2192 = vmatprep.mubr.f32.mxu0 0.0
    %v2193 = vand.u32 %v1201, 4294901760
    %2194 = vmatmul.mubr.f32.gmra.mxu0 %v2193
    %v2195 = vpop.f32.mrf.mxu0
    %v2196 = vadd.f32 %v2058, %v2195
    %v2197 = vpop.f32.mrf.mxu0
    %2198 = vmatprep.mubr.f32.mxu0 0.0
    %v2199 = vand.u32 %v1204, 4294901760
    %2200 = vmatmul.mubr.f32.gmra.mxu0 %v2199
    %v2201 = vpop.f32.mrf.mxu0
    %v2202 = vadd.f32 %v2068, %v2201
    %v2203 = vpop.f32.mrf.mxu0
    %2204 = vmatprep.mubr.f32.mxu0 0.0
    %v2205 = vand.u32 %v1207, 4294901760
    %2206 = vmatmul.mubr.f32.gmra.mxu0 %v2205
    %v2207 = vpop.f32.mrf.mxu0
    %v2208 = vadd.f32 %v2078, %v2207
    %v2209 = vpop.f32.mrf.mxu0
    %2210 = vmatprep.mubr.f32.mxu0 0.0
    %v2211 = vand.u32 %v1210, 4294901760
    %2212 = vmatmul.mubr.f32.gmra.mxu0 %v2211
    %v2213 = vpop.f32.mrf.mxu0
    %v2214 = vadd.f32 %v2088, %v2213
    %v2215 = vpop.f32.mrf.mxu0
    %2216 = vmatprep.mubr.f32.mxu0 0.0
    %v2217 = vand.u32 %v1213, 4294901760
    %2218 = vmatmul.mubr.f32.gmra.mxu0 %v2217
    %v2219 = vpop.f32.mrf.mxu0
    %v2220 = vadd.f32 %v2098, %v2219
    %v2221 = vpop.f32.mrf.mxu0
    %2222 = vmatprep.mubr.f32.mxu0 0.0
    %v2223 = vand.u32 %v1216, 4294901760
    %2224 = vmatmul.mubr.f32.gmra.mxu0 %v2223
    %v2225 = vpop.f32.mrf.mxu0
    %v2226 = vadd.f32 %v2108, %v2225
    %v2227 = vpop.f32.mrf.mxu0
    %2228 = vdwg.mxu0
    %2229 = vmatprep.subr.mxu0 0.0
    %2230 = vmatpush1.msra.mxu0 0.0
    %2231 = vmatprep.subr.mxu0 0.0
    %2232 = vmatpush1.msra.mxu0 0.0
    %2233 = vmatprep.subr.mxu0 0.0
    %2234 = vmatpush1.msra.mxu0 0.0
    %2235 = vmatprep.subr.mxu0 0.0
    %2236 = vmatpush1.msra.mxu0 0.0
    %2237 = vmatprep.subr.mxu0 0.0
    %2238 = vmatpush1.msra.mxu0 0.0
    %2239 = vmatprep.subr.mxu0 0.0
    %2240 = vmatpush1.msra.mxu0 0.0
    %2241 = vmatprep.subr.mxu0 0.0
    %2242 = vmatpush1.msra.mxu0 0.0
    %2243 = vmatprep.subr.mxu0 0.0
    %2244 = vmatpush1.msra.mxu0 0.0
    %2245 = vmatprep.subr.mxu0 0.0
    %2246 = vmatpush1.msra.mxu0 0.0
    %2247 = vmatprep.subr.mxu0 0.0
    %2248 = vmatpush1.msra.mxu0 0.0
    %2249 = vmatprep.subr.mxu0 0.0
    %2250 = vmatpush1.msra.mxu0 0.0
    %2251 = vmatprep.subr.mxu0 0.0
    %2252 = vmatpush1.msra.mxu0 0.0
    %2253 = vmatprep.subr.mxu0 0.0
    %2254 = vmatpush1.msra.mxu0 0.0
    %2255 = vmatprep.subr.mxu0 0.0
    %2256 = vmatpush1.msra.mxu0 0.0
    %2257 = vmatprep.subr.mxu0 0.0
    %2258 = vmatpush1.msra.mxu0 0.0
    %2259 = vmatprep.subr.mxu0 0.0
    %v2260 = vand.u32 %v72, 4294901760
    %v2261 = vsub.f32 %v72, %v2260
    %2262 = vmatpush1.msra.mxu0 %v2261
    %2263 = vmatprep.subr.mxu0 0.0
    %2264 = vmatpush2.msra.mxu0 0.0
    %2265 = vmatprep.subr.mxu0 0.0
    %2266 = vmatpush2.msra.mxu0 0.0
    %2267 = vmatprep.subr.mxu0 0.0
    %2268 = vmatpush2.msra.mxu0 0.0
    %2269 = vmatprep.subr.mxu0 0.0
    %2270 = vmatpush2.msra.mxu0 0.0
    %2271 = vmatprep.subr.mxu0 0.0
    %2272 = vmatpush2.msra.mxu0 0.0
    %2273 = vmatprep.subr.mxu0 0.0
    %2274 = vmatpush2.msra.mxu0 0.0
    %2275 = vmatprep.subr.mxu0 0.0
    %2276 = vmatpush2.msra.mxu0 0.0
    %2277 = vmatprep.subr.mxu0 0.0
    %2278 = vmatpush2.msra.mxu0 0.0
    %2279 = vmatprep.subr.mxu0 0.0
    %2280 = vmatpush2.msra.mxu0 0.0
    %2281 = vmatprep.subr.mxu0 0.0
    %2282 = vmatpush2.msra.mxu0 0.0
    %2283 = vmatprep.subr.mxu0 0.0
    %2284 = vmatpush2.msra.mxu0 0.0
    %2285 = vmatprep.subr.mxu0 0.0
    %2286 = vmatpush2.msra.mxu0 0.0
    %2287 = vmatprep.subr.mxu0 0.0
    %2288 = vmatpush2.msra.mxu0 0.0
    %2289 = vmatprep.subr.mxu0 0.0
    %2290 = vmatpush2.msra.mxu0 0.0
    %2291 = vmatprep.subr.mxu0 0.0
    %2292 = vmatpush2.msra.mxu0 0.0
    %2293 = vmatprep.subr.mxu0 0.0
    %2294 = vmatpush2.msra.mxu0 0.0
    %2295 = vmatprep.mubr.f32.mxu0 0.0
    %v2296 = vand.u32 %v1195, 4294901760
    %v2297 = vsub.f32 %v1195, %v2296
    %2298 = vmatmul.mubr.f32.gmra.mxu0 %v2297
    %v2299 = vpop.f32.mrf.mxu0
    %v2300 = vadd.f32 %v2184, %v2299
    %v2301 = vpop.f32.mrf.mxu0
    %2302 = vmatprep.mubr.f32.mxu0 0.0
    %v2303 = vand.u32 %v1198, 4294901760
    %v2304 = vsub.f32 %v1198, %v2303
    %2305 = vmatmul.mubr.f32.gmra.mxu0 %v2304
    %v2306 = vpop.f32.mrf.mxu0
    %v2307 = vadd.f32 %v2190, %v2306
    %v2308 = vpop.f32.mrf.mxu0
    %2309 = vmatprep.mubr.f32.mxu0 0.0
    %v2310 = vand.u32 %v1201, 4294901760
    %v2311 = vsub.f32 %v1201, %v2310
    %2312 = vmatmul.mubr.f32.gmra.mxu0 %v2311
    %v2313 = vpop.f32.mrf.mxu0
    %v2314 = vadd.f32 %v2196, %v2313
    %v2315 = vpop.f32.mrf.mxu0
    %2316 = vmatprep.mubr.f32.mxu0 0.0
    %v2317 = vand.u32 %v1204, 4294901760
    %v2318 = vsub.f32 %v1204, %v2317
    %2319 = vmatmul.mubr.f32.gmra.mxu0 %v2318
    %v2320 = vpop.f32.mrf.mxu0
    %v2321 = vadd.f32 %v2202, %v2320
    %v2322 = vpop.f32.mrf.mxu0
    %2323 = vmatprep.mubr.f32.mxu0 0.0
    %v2324 = vand.u32 %v1207, 4294901760
    %v2325 = vsub.f32 %v1207, %v2324
    %2326 = vmatmul.mubr.f32.gmra.mxu0 %v2325
    %v2327 = vpop.f32.mrf.mxu0
    %v2328 = vadd.f32 %v2208, %v2327
    %v2329 = vpop.f32.mrf.mxu0
    %2330 = vmatprep.mubr.f32.mxu0 0.0
    %v2331 = vand.u32 %v1210, 4294901760
    %v2332 = vsub.f32 %v1210, %v2331
    %2333 = vmatmul.mubr.f32.gmra.mxu0 %v2332
    %v2334 = vpop.f32.mrf.mxu0
    %v2335 = vadd.f32 %v2214, %v2334
    %v2336 = vpop.f32.mrf.mxu0
    %2337 = vmatprep.mubr.f32.mxu0 0.0
    %v2338 = vand.u32 %v1213, 4294901760
    %v2339 = vsub.f32 %v1213, %v2338
    %2340 = vmatmul.mubr.f32.gmra.mxu0 %v2339
    %v2341 = vpop.f32.mrf.mxu0
    %v2342 = vadd.f32 %v2220, %v2341
    %v2343 = vpop.f32.mrf.mxu0
    %2344 = vmatprep.mubr.f32.mxu0 0.0
    %v2345 = vand.u32 %v1216, 4294901760
    %v2346 = vsub.f32 %v1216, %v2345
    %2347 = vmatmul.mubr.f32.gmra.mxu0 %v2346
    %v2348 = vpop.f32.mrf.mxu0
    %v2349 = vadd.f32 %v2226, %v2348
    %v2350 = vpop.f32.mrf.mxu0
    %2351 = vdwg.mxu0
    %2352 = vmatprep.subr.mxu0 0.0
    %2353 = vmatpush1.msra.mxu0 0.0
    %2354 = vmatprep.subr.mxu0 0.0
    %2355 = vmatpush1.msra.mxu0 0.0
    %2356 = vmatprep.subr.mxu0 0.0
    %2357 = vmatpush1.msra.mxu0 0.0
    %2358 = vmatprep.subr.mxu0 0.0
    %2359 = vmatpush1.msra.mxu0 0.0
    %2360 = vmatprep.subr.mxu0 0.0
    %2361 = vmatpush1.msra.mxu0 0.0
    %2362 = vmatprep.subr.mxu0 0.0
    %2363 = vmatpush1.msra.mxu0 0.0
    %2364 = vmatprep.subr.mxu0 0.0
    %2365 = vmatpush1.msra.mxu0 0.0
    %2366 = vmatprep.subr.mxu0 0.0
    %2367 = vmatpush1.msra.mxu0 0.0
    %2368 = vmatprep.subr.mxu0 0.0
    %2369 = vmatpush1.msra.mxu0 0.0
    %2370 = vmatprep.subr.mxu0 0.0
    %2371 = vmatpush1.msra.mxu0 0.0
    %2372 = vmatprep.subr.mxu0 0.0
    %2373 = vmatpush1.msra.mxu0 0.0
    %2374 = vmatprep.subr.mxu0 0.0
    %2375 = vmatpush1.msra.mxu0 0.0
    %2376 = vmatprep.subr.mxu0 0.0
    %2377 = vmatpush1.msra.mxu0 0.0
    %2378 = vmatprep.subr.mxu0 0.0
    %2379 = vmatpush1.msra.mxu0 0.0
    %2380 = vmatprep.subr.mxu0 0.0
    %2381 = vmatpush1.msra.mxu0 0.0
    %2382 = vmatprep.subr.mxu0 0.0
    %v2383 = vand.u32 %v72, 4294901760
    %2384 = vmatpush1.msra.mxu0 %v2383
    %2385 = vmatprep.subr.mxu0 0.0
    %2386 = vmatpush2.msra.mxu0 0.0
    %2387 = vmatprep.subr.mxu0 0.0
    %2388 = vmatpush2.msra.mxu0 0.0
    %2389 = vmatprep.subr.mxu0 0.0
    %2390 = vmatpush2.msra.mxu0 0.0
    %2391 = vmatprep.subr.mxu0 0.0
    %2392 = vmatpush2.msra.mxu0 0.0
    %2393 = vmatprep.subr.mxu0 0.0
    %2394 = vmatpush2.msra.mxu0 0.0
    %2395 = vmatprep.subr.mxu0 0.0
    %2396 = vmatpush2.msra.mxu0 0.0
    %2397 = vmatprep.subr.mxu0 0.0
    %2398 = vmatpush2.msra.mxu0 0.0
    %2399 = vmatprep.subr.mxu0 0.0
    %2400 = vmatpush2.msra.mxu0 0.0
    %2401 = vmatprep.subr.mxu0 0.0
    %2402 = vmatpush2.msra.mxu0 0.0
    %2403 = vmatprep.subr.mxu0 0.0
    %2404 = vmatpush2.msra.mxu0 0.0
    %2405 = vmatprep.subr.mxu0 0.0
    %2406 = vmatpush2.msra.mxu0 0.0
    %2407 = vmatprep.subr.mxu0 0.0
    %2408 = vmatpush2.msra.mxu0 0.0
    %2409 = vmatprep.subr.mxu0 0.0
    %2410 = vmatpush2.msra.mxu0 0.0
    %2411 = vmatprep.subr.mxu0 0.0
    %2412 = vmatpush2.msra.mxu0 0.0
    %2413 = vmatprep.subr.mxu0 0.0
    %2414 = vmatpush2.msra.mxu0 0.0
    %2415 = vmatprep.subr.mxu0 0.0
    %2416 = vmatpush2.msra.mxu0 0.0
    %2417 = vmatprep.mubr.f32.mxu0 0.0
    %v2418 = vand.u32 %v1195, 4294901760
    %v2419 = vsub.f32 %v1195, %v2418
    %v2420 = vand.u32 %v2419, 4294901760
    %2421 = vmatmul.mubr.f32.gmra.mxu0 %v2420
    %v2422 = vpop.f32.mrf.mxu0
    %v2423 = vadd.f32 %v2300, %v2422
    %v2424 = vpop.f32.mrf.mxu0
    %2425 = vmatprep.mubr.f32.mxu0 0.0
    %v2426 = vand.u32 %v1198, 4294901760
    %v2427 = vsub.f32 %v1198, %v2426
    %v2428 = vand.u32 %v2427, 4294901760
    %2429 = vmatmul.mubr.f32.gmra.mxu0 %v2428
    %v2430 = vpop.f32.mrf.mxu0
    %v2431 = vadd.f32 %v2307, %v2430
    %v2432 = vpop.f32.mrf.mxu0
    %2433 = vmatprep.mubr.f32.mxu0 0.0
    %v2434 = vand.u32 %v1201, 4294901760
    %v2435 = vsub.f32 %v1201, %v2434
    %v2436 = vand.u32 %v2435, 4294901760
    %2437 = vmatmul.mubr.f32.gmra.mxu0 %v2436
    %v2438 = vpop.f32.mrf.mxu0
    %v2439 = vadd.f32 %v2314, %v2438
    %v2440 = vpop.f32.mrf.mxu0
    %2441 = vmatprep.mubr.f32.mxu0 0.0
    %v2442 = vand.u32 %v1204, 4294901760
    %v2443 = vsub.f32 %v1204, %v2442
    %v2444 = vand.u32 %v2443, 4294901760
    %2445 = vmatmul.mubr.f32.gmra.mxu0 %v2444
    %v2446 = vpop.f32.mrf.mxu0
    %v2447 = vadd.f32 %v2321, %v2446
    %v2448 = vpop.f32.mrf.mxu0
    %2449 = vmatprep.mubr.f32.mxu0 0.0
    %v2450 = vand.u32 %v1207, 4294901760
    %v2451 = vsub.f32 %v1207, %v2450
    %v2452 = vand.u32 %v2451, 4294901760
    %2453 = vmatmul.mubr.f32.gmra.mxu0 %v2452
    %v2454 = vpop.f32.mrf.mxu0
    %v2455 = vadd.f32 %v2328, %v2454
    %v2456 = vpop.f32.mrf.mxu0
    %2457 = vmatprep.mubr.f32.mxu0 0.0
    %v2458 = vand.u32 %v1210, 4294901760
    %v2459 = vsub.f32 %v1210, %v2458
    %v2460 = vand.u32 %v2459, 4294901760
    %2461 = vmatmul.mubr.f32.gmra.mxu0 %v2460
    %v2462 = vpop.f32.mrf.mxu0
    %v2463 = vadd.f32 %v2335, %v2462
    %v2464 = vpop.f32.mrf.mxu0
    %2465 = vmatprep.mubr.f32.mxu0 0.0
    %v2466 = vand.u32 %v1213, 4294901760
    %v2467 = vsub.f32 %v1213, %v2466
    %v2468 = vand.u32 %v2467, 4294901760
    %2469 = vmatmul.mubr.f32.gmra.mxu0 %v2468
    %v2470 = vpop.f32.mrf.mxu0
    %v2471 = vadd.f32 %v2342, %v2470
    %v2472 = vpop.f32.mrf.mxu0
    %2473 = vmatprep.mubr.f32.mxu0 0.0
    %v2474 = vand.u32 %v1216, 4294901760
    %v2475 = vsub.f32 %v1216, %v2474
    %v2476 = vand.u32 %v2475, 4294901760
    %2477 = vmatmul.mubr.f32.gmra.mxu0 %v2476
    %v2478 = vpop.f32.mrf.mxu0
    %v2479 = vadd.f32 %v2349, %v2478
    %v2480 = vpop.f32.mrf.mxu0
    %2481 = vdwg.mxu0
    %2482 = vmatprep.subr.mxu0 0.0
    %2483 = vmatpush1.msra.mxu0 0.0
    %2484 = vmatprep.subr.mxu0 0.0
    %2485 = vmatpush1.msra.mxu0 0.0
    %2486 = vmatprep.subr.mxu0 0.0
    %2487 = vmatpush1.msra.mxu0 0.0
    %2488 = vmatprep.subr.mxu0 0.0
    %2489 = vmatpush1.msra.mxu0 0.0
    %2490 = vmatprep.subr.mxu0 0.0
    %2491 = vmatpush1.msra.mxu0 0.0
    %2492 = vmatprep.subr.mxu0 0.0
    %2493 = vmatpush1.msra.mxu0 0.0
    %2494 = vmatprep.subr.mxu0 0.0
    %2495 = vmatpush1.msra.mxu0 0.0
    %2496 = vmatprep.subr.mxu0 0.0
    %2497 = vmatpush1.msra.mxu0 0.0
    %2498 = vmatprep.subr.mxu0 0.0
    %2499 = vmatpush1.msra.mxu0 0.0
    %2500 = vmatprep.subr.mxu0 0.0
    %2501 = vmatpush1.msra.mxu0 0.0
    %2502 = vmatprep.subr.mxu0 0.0
    %2503 = vmatpush1.msra.mxu0 0.0
    %2504 = vmatprep.subr.mxu0 0.0
    %2505 = vmatpush1.msra.mxu0 0.0
    %2506 = vmatprep.subr.mxu0 0.0
    %2507 = vmatpush1.msra.mxu0 0.0
    %2508 = vmatprep.subr.mxu0 0.0
    %2509 = vmatpush1.msra.mxu0 0.0
    %2510 = vmatprep.subr.mxu0 0.0
    %2511 = vmatpush1.msra.mxu0 0.0
    %2512 = vmatprep.subr.mxu0 0.0
    %v2513 = vand.u32 %v72, 4294901760
    %v2514 = vsub.f32 %v72, %v2513
    %v2515 = vand.u32 %v2514, 4294901760
    %2516 = vmatpush1.msra.mxu0 %v2515
    %2517 = vmatprep.subr.mxu0 0.0
    %2518 = vmatpush2.msra.mxu0 0.0
    %2519 = vmatprep.subr.mxu0 0.0
    %2520 = vmatpush2.msra.mxu0 0.0
    %2521 = vmatprep.subr.mxu0 0.0
    %2522 = vmatpush2.msra.mxu0 0.0
    %2523 = vmatprep.subr.mxu0 0.0
    %2524 = vmatpush2.msra.mxu0 0.0
    %2525 = vmatprep.subr.mxu0 0.0
    %2526 = vmatpush2.msra.mxu0 0.0
    %2527 = vmatprep.subr.mxu0 0.0
    %2528 = vmatpush2.msra.mxu0 0.0
    %2529 = vmatprep.subr.mxu0 0.0
    %2530 = vmatpush2.msra.mxu0 0.0
    %2531 = vmatprep.subr.mxu0 0.0
    %2532 = vmatpush2.msra.mxu0 0.0
    %2533 = vmatprep.subr.mxu0 0.0
    %2534 = vmatpush2.msra.mxu0 0.0
    %2535 = vmatprep.subr.mxu0 0.0
    %2536 = vmatpush2.msra.mxu0 0.0
    %2537 = vmatprep.subr.mxu0 0.0
    %2538 = vmatpush2.msra.mxu0 0.0
    %2539 = vmatprep.subr.mxu0 0.0
    %2540 = vmatpush2.msra.mxu0 0.0
    %2541 = vmatprep.subr.mxu0 0.0
    %2542 = vmatpush2.msra.mxu0 0.0
    %2543 = vmatprep.subr.mxu0 0.0
    %2544 = vmatpush2.msra.mxu0 0.0
    %2545 = vmatprep.subr.mxu0 0.0
    %2546 = vmatpush2.msra.mxu0 0.0
    %2547 = vmatprep.subr.mxu0 0.0
    %2548 = vmatpush2.msra.mxu0 0.0
    %2549 = vmatprep.mubr.f32.mxu0 0.0
    %v2550 = vand.u32 %v1195, 4294901760
    %2551 = vmatmul.mubr.f32.gmra.mxu0 %v2550
    %v2552 = vpop.f32.mrf.mxu0
    %v2553 = vadd.f32 %v2423, %v2552
    %v2554 = vpop.f32.mrf.mxu0
    %2555 = vmatprep.mubr.f32.mxu0 0.0
    %v2556 = vand.u32 %v1198, 4294901760
    %2557 = vmatmul.mubr.f32.gmra.mxu0 %v2556
    %v2558 = vpop.f32.mrf.mxu0
    %v2559 = vadd.f32 %v2431, %v2558
    %v2560 = vpop.f32.mrf.mxu0
    %2561 = vmatprep.mubr.f32.mxu0 0.0
    %v2562 = vand.u32 %v1201, 4294901760
    %2563 = vmatmul.mubr.f32.gmra.mxu0 %v2562
    %v2564 = vpop.f32.mrf.mxu0
    %v2565 = vadd.f32 %v2439, %v2564
    %v2566 = vpop.f32.mrf.mxu0
    %2567 = vmatprep.mubr.f32.mxu0 0.0
    %v2568 = vand.u32 %v1204, 4294901760
    %2569 = vmatmul.mubr.f32.gmra.mxu0 %v2568
    %v2570 = vpop.f32.mrf.mxu0
    %v2571 = vadd.f32 %v2447, %v2570
    %v2572 = vpop.f32.mrf.mxu0
    %2573 = vmatprep.mubr.f32.mxu0 0.0
    %v2574 = vand.u32 %v1207, 4294901760
    %2575 = vmatmul.mubr.f32.gmra.mxu0 %v2574
    %v2576 = vpop.f32.mrf.mxu0
    %v2577 = vadd.f32 %v2455, %v2576
    %v2578 = vpop.f32.mrf.mxu0
    %2579 = vmatprep.mubr.f32.mxu0 0.0
    %v2580 = vand.u32 %v1210, 4294901760
    %2581 = vmatmul.mubr.f32.gmra.mxu0 %v2580
    %v2582 = vpop.f32.mrf.mxu0
    %v2583 = vadd.f32 %v2463, %v2582
    %v2584 = vpop.f32.mrf.mxu0
    %2585 = vmatprep.mubr.f32.mxu0 0.0
    %v2586 = vand.u32 %v1213, 4294901760
    %2587 = vmatmul.mubr.f32.gmra.mxu0 %v2586
    %v2588 = vpop.f32.mrf.mxu0
    %v2589 = vadd.f32 %v2471, %v2588
    %v2590 = vpop.f32.mrf.mxu0
    %2591 = vmatprep.mubr.f32.mxu0 0.0
    %v2592 = vand.u32 %v1216, 4294901760
    %2593 = vmatmul.mubr.f32.gmra.mxu0 %v2592
    %v2594 = vpop.f32.mrf.mxu0
    %v2595 = vadd.f32 %v2479, %v2594
    %v2596 = vpop.f32.mrf.mxu0
    %2597 = vdwg.mxu0
    %2598 = vmatprep.subr.mxu0 0.0
    %2599 = vmatpush1.msra.mxu0 0.0
    %2600 = vmatprep.subr.mxu0 0.0
    %2601 = vmatpush1.msra.mxu0 0.0
    %2602 = vmatprep.subr.mxu0 0.0
    %2603 = vmatpush1.msra.mxu0 0.0
    %2604 = vmatprep.subr.mxu0 0.0
    %2605 = vmatpush1.msra.mxu0 0.0
    %2606 = vmatprep.subr.mxu0 0.0
    %2607 = vmatpush1.msra.mxu0 0.0
    %2608 = vmatprep.subr.mxu0 0.0
    %2609 = vmatpush1.msra.mxu0 0.0
    %2610 = vmatprep.subr.mxu0 0.0
    %2611 = vmatpush1.msra.mxu0 0.0
    %2612 = vmatprep.subr.mxu0 0.0
    %2613 = vmatpush1.msra.mxu0 0.0
    %2614 = vmatprep.subr.mxu0 0.0
    %2615 = vmatpush1.msra.mxu0 0.0
    %2616 = vmatprep.subr.mxu0 0.0
    %2617 = vmatpush1.msra.mxu0 0.0
    %2618 = vmatprep.subr.mxu0 0.0
    %2619 = vmatpush1.msra.mxu0 0.0
    %2620 = vmatprep.subr.mxu0 0.0
    %2621 = vmatpush1.msra.mxu0 0.0
    %2622 = vmatprep.subr.mxu0 0.0
    %2623 = vmatpush1.msra.mxu0 0.0
    %2624 = vmatprep.subr.mxu0 0.0
    %2625 = vmatpush1.msra.mxu0 0.0
    %2626 = vmatprep.subr.mxu0 0.0
    %2627 = vmatpush1.msra.mxu0 0.0
    %2628 = vmatprep.subr.mxu0 0.0
    %v2629 = vand.u32 %v72, 4294901760
    %2630 = vmatpush1.msra.mxu0 %v2629
    %2631 = vmatprep.subr.mxu0 0.0
    %2632 = vmatpush2.msra.mxu0 0.0
    %2633 = vmatprep.subr.mxu0 0.0
    %2634 = vmatpush2.msra.mxu0 0.0
    %2635 = vmatprep.subr.mxu0 0.0
    %2636 = vmatpush2.msra.mxu0 0.0
    %2637 = vmatprep.subr.mxu0 0.0
    %2638 = vmatpush2.msra.mxu0 0.0
    %2639 = vmatprep.subr.mxu0 0.0
    %2640 = vmatpush2.msra.mxu0 0.0
    %2641 = vmatprep.subr.mxu0 0.0
    %2642 = vmatpush2.msra.mxu0 0.0
    %2643 = vmatprep.subr.mxu0 0.0
    %2644 = vmatpush2.msra.mxu0 0.0
    %2645 = vmatprep.subr.mxu0 0.0
    %2646 = vmatpush2.msra.mxu0 0.0
    %2647 = vmatprep.subr.mxu0 0.0
    %2648 = vmatpush2.msra.mxu0 0.0
    %2649 = vmatprep.subr.mxu0 0.0
    %2650 = vmatpush2.msra.mxu0 0.0
    %2651 = vmatprep.subr.mxu0 0.0
    %2652 = vmatpush2.msra.mxu0 0.0
    %2653 = vmatprep.subr.mxu0 0.0
    %2654 = vmatpush2.msra.mxu0 0.0
    %2655 = vmatprep.subr.mxu0 0.0
    %2656 = vmatpush2.msra.mxu0 0.0
    %2657 = vmatprep.subr.mxu0 0.0
    %2658 = vmatpush2.msra.mxu0 0.0
    %2659 = vmatprep.subr.mxu0 0.0
    %2660 = vmatpush2.msra.mxu0 0.0
    %2661 = vmatprep.subr.mxu0 0.0
    %2662 = vmatpush2.msra.mxu0 0.0
    %2663 = vmatprep.mubr.f32.mxu0 0.0
    %v2664 = vand.u32 %v1195, 4294901760
    %2665 = vmatmul.mubr.f32.gmra.mxu0 %v2664
    %v2666 = vpop.f32.mrf.mxu0
    %v2667 = vadd.f32 %v2553, %v2666
    %v2668 = vpop.f32.mrf.mxu0
    %2669 = vmatprep.mubr.f32.mxu0 0.0
    %v2670 = vand.u32 %v1198, 4294901760
    %2671 = vmatmul.mubr.f32.gmra.mxu0 %v2670
    %v2672 = vpop.f32.mrf.mxu0
    %v2673 = vadd.f32 %v2559, %v2672
    %v2674 = vpop.f32.mrf.mxu0
    %2675 = vmatprep.mubr.f32.mxu0 0.0
    %v2676 = vand.u32 %v1201, 4294901760
    %2677 = vmatmul.mubr.f32.gmra.mxu0 %v2676
    %v2678 = vpop.f32.mrf.mxu0
    %v2679 = vadd.f32 %v2565, %v2678
    %v2680 = vpop.f32.mrf.mxu0
    %2681 = vmatprep.mubr.f32.mxu0 0.0
    %v2682 = vand.u32 %v1204, 4294901760
    %2683 = vmatmul.mubr.f32.gmra.mxu0 %v2682
    %v2684 = vpop.f32.mrf.mxu0
    %v2685 = vadd.f32 %v2571, %v2684
    %v2686 = vpop.f32.mrf.mxu0
    %2687 = vmatprep.mubr.f32.mxu0 0.0
    %v2688 = vand.u32 %v1207, 4294901760
    %2689 = vmatmul.mubr.f32.gmra.mxu0 %v2688
    %v2690 = vpop.f32.mrf.mxu0
    %v2691 = vadd.f32 %v2577, %v2690
    %v2692 = vpop.f32.mrf.mxu0
    %2693 = vmatprep.mubr.f32.mxu0 0.0
    %v2694 = vand.u32 %v1210, 4294901760
    %2695 = vmatmul.mubr.f32.gmra.mxu0 %v2694
    %v2696 = vpop.f32.mrf.mxu0
    %v2697 = vadd.f32 %v2583, %v2696
    %v2698 = vpop.f32.mrf.mxu0
    %2699 = vmatprep.mubr.f32.mxu0 0.0
    %v2700 = vand.u32 %v1213, 4294901760
    %2701 = vmatmul.mubr.f32.gmra.mxu0 %v2700
    %v2702 = vpop.f32.mrf.mxu0
    %v2703 = vadd.f32 %v2589, %v2702
    %v2704 = vpop.f32.mrf.mxu0
    %2705 = vmatprep.mubr.f32.mxu0 0.0
    %v2706 = vand.u32 %v1216, 4294901760
    %2707 = vmatmul.mubr.f32.gmra.mxu0 %v2706
    %v2708 = vpop.f32.mrf.mxu0
    %v2709 = vadd.f32 %v2595, %v2708
    %v2710 = vpop.f32.mrf.mxu0
    %2711 = vdwg.mxu0
    %v2712 = vadd.f32 %v1920, %v625
    %v2713 = vadd.f32 %v1926, %v631
    %v2714 = vadd.f32 %v1932, %v625
    %v2715 = vadd.f32 %v1938, %v631
    %v2716 = vadd.f32 %v1944, %v625
    %v2717 = vadd.f32 %v1950, %v631
    %v2718 = vadd.f32 %v1956, %v625
    %v2719 = vadd.f32 %v1962, %v631
    %v2720 = vadd.f32 %v2667, %v1152
    %v2721 = vadd.f32 %v2673, %v1158
    %v2722 = vadd.f32 %v2679, %v1152
    %v2723 = vadd.f32 %v2685, %v1158
    %v2724 = vadd.f32 %v2691, %v1152
    %v2725 = vadd.f32 %v2697, %v1158
    %v2726 = vadd.f32 %v2703, %v1152
    %v2727 = vadd.f32 %v2709, %v1158
    %v2729 = vsel %vm83, %v73, 0
    %2731 = vmatprep.subr.mxu0 0.0
    %2732 = vmatpush1.msra.mxu0 0.0
    %2733 = vmatprep.subr.mxu0 0.0
    %2734 = vmatpush1.msra.mxu0 0.0
    %2735 = vmatprep.subr.mxu0 0.0
    %2736 = vmatpush1.msra.mxu0 0.0
    %2737 = vmatprep.subr.mxu0 0.0
    %2738 = vmatpush1.msra.mxu0 0.0
    %2739 = vmatprep.subr.mxu0 0.0
    %2740 = vmatpush1.msra.mxu0 0.0
    %2741 = vmatprep.subr.mxu0 0.0
    %2742 = vmatpush1.msra.mxu0 0.0
    %2743 = vmatprep.subr.mxu0 0.0
    %2744 = vmatpush1.msra.mxu0 0.0
    %2745 = vmatprep.subr.mxu0 0.0
    %2746 = vmatpush1.msra.mxu0 0.0
    %2747 = vmatprep.subr.mxu0 0.0
    %2748 = vmatpush1.msra.mxu0 0.0
    %2749 = vmatprep.subr.mxu0 0.0
    %2750 = vmatpush1.msra.mxu0 0.0
    %2751 = vmatprep.subr.mxu0 0.0
    %2752 = vmatpush1.msra.mxu0 0.0
    %2753 = vmatprep.subr.mxu0 0.0
    %2754 = vmatpush1.msra.mxu0 0.0
    %2755 = vmatprep.subr.mxu0 0.0
    %2756 = vmatpush1.msra.mxu0 0.0
    %2757 = vmatprep.subr.mxu0 0.0
    %2758 = vmatpush1.msra.mxu0 0.0
    %2759 = vmatprep.subr.mxu0 0.0
    %v2760 = vand.u32 %v2713, 4294901760
    %2761 = vmatpush1.msra.mxu0 %v2760
    %2762 = vmatprep.subr.mxu0 0.0
    %v2763 = vand.u32 %v2712, 4294901760
    %2764 = vmatpush1.msra.mxu0 %v2763
    %2765 = vmatprep.subr.mxu0 0.0
    %2766 = vmatpush2.msra.mxu0 0.0
    %2767 = vmatprep.subr.mxu0 0.0
    %2768 = vmatpush2.msra.mxu0 0.0
    %2769 = vmatprep.subr.mxu0 0.0
    %2770 = vmatpush2.msra.mxu0 0.0
    %2771 = vmatprep.subr.mxu0 0.0
    %2772 = vmatpush2.msra.mxu0 0.0
    %2773 = vmatprep.subr.mxu0 0.0
    %2774 = vmatpush2.msra.mxu0 0.0
    %2775 = vmatprep.subr.mxu0 0.0
    %2776 = vmatpush2.msra.mxu0 0.0
    %2777 = vmatprep.subr.mxu0 0.0
    %2778 = vmatpush2.msra.mxu0 0.0
    %2779 = vmatprep.subr.mxu0 0.0
    %2780 = vmatpush2.msra.mxu0 0.0
    %2781 = vmatprep.subr.mxu0 0.0
    %2782 = vmatpush2.msra.mxu0 0.0
    %2783 = vmatprep.subr.mxu0 0.0
    %2784 = vmatpush2.msra.mxu0 0.0
    %2785 = vmatprep.subr.mxu0 0.0
    %2786 = vmatpush2.msra.mxu0 0.0
    %2787 = vmatprep.subr.mxu0 0.0
    %2788 = vmatpush2.msra.mxu0 0.0
    %2789 = vmatprep.subr.mxu0 0.0
    %2790 = vmatpush2.msra.mxu0 0.0
    %2791 = vmatprep.subr.mxu0 0.0
    %2792 = vmatpush2.msra.mxu0 0.0
    %2793 = vmatprep.subr.mxu0 0.0
    %2794 = vmatpush2.msra.mxu0 0.0
    %2795 = vmatprep.subr.mxu0 0.0
    %2796 = vmatpush2.msra.mxu0 0.0
    %2797 = vmatprep.mubr.f32.mxu0 0.0
    %v2798 = vand.u32 %v2729, 4294901760
    %v2799 = vsub.f32 %v2729, %v2798
    %v2800 = vand.u32 %v2799, 4294901760
    %v2801 = vsub.f32 %v2799, %v2800
    %v2802 = vand.u32 %v2801, 4294901760
    %2803 = vmatmul.mubr.f32.gmra.mxu0 %v2802
    %v2804 = vpop.f32.mrf.mxu0
    %v2805 = vadd.f32 0.0, %v2804
    %v2806 = vpop.f32.mrf.mxu0
    %2807 = vdwg.mxu0
    %2808 = vmatprep.subr.mxu0 0.0
    %2809 = vmatpush1.msra.mxu0 0.0
    %2810 = vmatprep.subr.mxu0 0.0
    %2811 = vmatpush1.msra.mxu0 0.0
    %2812 = vmatprep.subr.mxu0 0.0
    %2813 = vmatpush1.msra.mxu0 0.0
    %2814 = vmatprep.subr.mxu0 0.0
    %2815 = vmatpush1.msra.mxu0 0.0
    %2816 = vmatprep.subr.mxu0 0.0
    %2817 = vmatpush1.msra.mxu0 0.0
    %2818 = vmatprep.subr.mxu0 0.0
    %2819 = vmatpush1.msra.mxu0 0.0
    %2820 = vmatprep.subr.mxu0 0.0
    %2821 = vmatpush1.msra.mxu0 0.0
    %2822 = vmatprep.subr.mxu0 0.0
    %2823 = vmatpush1.msra.mxu0 0.0
    %2824 = vmatprep.subr.mxu0 0.0
    %2825 = vmatpush1.msra.mxu0 0.0
    %2826 = vmatprep.subr.mxu0 0.0
    %2827 = vmatpush1.msra.mxu0 0.0
    %2828 = vmatprep.subr.mxu0 0.0
    %2829 = vmatpush1.msra.mxu0 0.0
    %2830 = vmatprep.subr.mxu0 0.0
    %2831 = vmatpush1.msra.mxu0 0.0
    %2832 = vmatprep.subr.mxu0 0.0
    %2833 = vmatpush1.msra.mxu0 0.0
    %2834 = vmatprep.subr.mxu0 0.0
    %2835 = vmatpush1.msra.mxu0 0.0
    %2836 = vmatprep.subr.mxu0 0.0
    %v2837 = vand.u32 %v2713, 4294901760
    %v2838 = vsub.f32 %v2713, %v2837
    %v2839 = vand.u32 %v2838, 4294901760
    %v2840 = vsub.f32 %v2838, %v2839
    %v2841 = vand.u32 %v2840, 4294901760
    %2842 = vmatpush1.msra.mxu0 %v2841
    %2843 = vmatprep.subr.mxu0 0.0
    %v2844 = vand.u32 %v2712, 4294901760
    %v2845 = vsub.f32 %v2712, %v2844
    %v2846 = vand.u32 %v2845, 4294901760
    %v2847 = vsub.f32 %v2845, %v2846
    %v2848 = vand.u32 %v2847, 4294901760
    %2849 = vmatpush1.msra.mxu0 %v2848
    %2850 = vmatprep.subr.mxu0 0.0
    %2851 = vmatpush2.msra.mxu0 0.0
    %2852 = vmatprep.subr.mxu0 0.0
    %2853 = vmatpush2.msra.mxu0 0.0
    %2854 = vmatprep.subr.mxu0 0.0
    %2855 = vmatpush2.msra.mxu0 0.0
    %2856 = vmatprep.subr.mxu0 0.0
    %2857 = vmatpush2.msra.mxu0 0.0
    %2858 = vmatprep.subr.mxu0 0.0
    %2859 = vmatpush2.msra.mxu0 0.0
    %2860 = vmatprep.subr.mxu0 0.0
    %2861 = vmatpush2.msra.mxu0 0.0
    %2862 = vmatprep.subr.mxu0 0.0
    %2863 = vmatpush2.msra.mxu0 0.0
    %2864 = vmatprep.subr.mxu0 0.0
    %2865 = vmatpush2.msra.mxu0 0.0
    %2866 = vmatprep.subr.mxu0 0.0
    %2867 = vmatpush2.msra.mxu0 0.0
    %2868 = vmatprep.subr.mxu0 0.0
    %2869 = vmatpush2.msra.mxu0 0.0
    %2870 = vmatprep.subr.mxu0 0.0
    %2871 = vmatpush2.msra.mxu0 0.0
    %2872 = vmatprep.subr.mxu0 0.0
    %2873 = vmatpush2.msra.mxu0 0.0
    %2874 = vmatprep.subr.mxu0 0.0
    %2875 = vmatpush2.msra.mxu0 0.0
    %2876 = vmatprep.subr.mxu0 0.0
    %2877 = vmatpush2.msra.mxu0 0.0
    %2878 = vmatprep.subr.mxu0 0.0
    %2879 = vmatpush2.msra.mxu0 0.0
    %2880 = vmatprep.subr.mxu0 0.0
    %2881 = vmatpush2.msra.mxu0 0.0
    %2882 = vmatprep.mubr.f32.mxu0 0.0
    %v2883 = vand.u32 %v2729, 4294901760
    %2884 = vmatmul.mubr.f32.gmra.mxu0 %v2883
    %v2885 = vpop.f32.mrf.mxu0
    %v2886 = vadd.f32 %v2805, %v2885
    %v2887 = vpop.f32.mrf.mxu0
    %2888 = vdwg.mxu0
    %2889 = vmatprep.subr.mxu0 0.0
    %2890 = vmatpush1.msra.mxu0 0.0
    %2891 = vmatprep.subr.mxu0 0.0
    %2892 = vmatpush1.msra.mxu0 0.0
    %2893 = vmatprep.subr.mxu0 0.0
    %2894 = vmatpush1.msra.mxu0 0.0
    %2895 = vmatprep.subr.mxu0 0.0
    %2896 = vmatpush1.msra.mxu0 0.0
    %2897 = vmatprep.subr.mxu0 0.0
    %2898 = vmatpush1.msra.mxu0 0.0
    %2899 = vmatprep.subr.mxu0 0.0
    %2900 = vmatpush1.msra.mxu0 0.0
    %2901 = vmatprep.subr.mxu0 0.0
    %2902 = vmatpush1.msra.mxu0 0.0
    %2903 = vmatprep.subr.mxu0 0.0
    %2904 = vmatpush1.msra.mxu0 0.0
    %2905 = vmatprep.subr.mxu0 0.0
    %2906 = vmatpush1.msra.mxu0 0.0
    %2907 = vmatprep.subr.mxu0 0.0
    %2908 = vmatpush1.msra.mxu0 0.0
    %2909 = vmatprep.subr.mxu0 0.0
    %2910 = vmatpush1.msra.mxu0 0.0
    %2911 = vmatprep.subr.mxu0 0.0
    %2912 = vmatpush1.msra.mxu0 0.0
    %2913 = vmatprep.subr.mxu0 0.0
    %2914 = vmatpush1.msra.mxu0 0.0
    %2915 = vmatprep.subr.mxu0 0.0
    %2916 = vmatpush1.msra.mxu0 0.0
    %2917 = vmatprep.subr.mxu0 0.0
    %v2918 = vand.u32 %v2713, 4294901760
    %v2919 = vsub.f32 %v2713, %v2918
    %2920 = vmatpush1.msra.mxu0 %v2919
    %2921 = vmatprep.subr.mxu0 0.0
    %v2922 = vand.u32 %v2712, 4294901760
    %v2923 = vsub.f32 %v2712, %v2922
    %2924 = vmatpush1.msra.mxu0 %v2923
    %2925 = vmatprep.subr.mxu0 0.0
    %2926 = vmatpush2.msra.mxu0 0.0
    %2927 = vmatprep.subr.mxu0 0.0
    %2928 = vmatpush2.msra.mxu0 0.0
    %2929 = vmatprep.subr.mxu0 0.0
    %2930 = vmatpush2.msra.mxu0 0.0
    %2931 = vmatprep.subr.mxu0 0.0
    %2932 = vmatpush2.msra.mxu0 0.0
    %2933 = vmatprep.subr.mxu0 0.0
    %2934 = vmatpush2.msra.mxu0 0.0
    %2935 = vmatprep.subr.mxu0 0.0
    %2936 = vmatpush2.msra.mxu0 0.0
    %2937 = vmatprep.subr.mxu0 0.0
    %2938 = vmatpush2.msra.mxu0 0.0
    %2939 = vmatprep.subr.mxu0 0.0
    %2940 = vmatpush2.msra.mxu0 0.0
    %2941 = vmatprep.subr.mxu0 0.0
    %2942 = vmatpush2.msra.mxu0 0.0
    %2943 = vmatprep.subr.mxu0 0.0
    %2944 = vmatpush2.msra.mxu0 0.0
    %2945 = vmatprep.subr.mxu0 0.0
    %2946 = vmatpush2.msra.mxu0 0.0
    %2947 = vmatprep.subr.mxu0 0.0
    %2948 = vmatpush2.msra.mxu0 0.0
    %2949 = vmatprep.subr.mxu0 0.0
    %2950 = vmatpush2.msra.mxu0 0.0
    %2951 = vmatprep.subr.mxu0 0.0
    %2952 = vmatpush2.msra.mxu0 0.0
    %2953 = vmatprep.subr.mxu0 0.0
    %2954 = vmatpush2.msra.mxu0 0.0
    %2955 = vmatprep.subr.mxu0 0.0
    %2956 = vmatpush2.msra.mxu0 0.0
    %2957 = vmatprep.mubr.f32.mxu0 0.0
    %v2958 = vand.u32 %v2729, 4294901760
    %v2959 = vsub.f32 %v2729, %v2958
    %2960 = vmatmul.mubr.f32.gmra.mxu0 %v2959
    %v2961 = vpop.f32.mrf.mxu0
    %v2962 = vadd.f32 %v2886, %v2961
    %v2963 = vpop.f32.mrf.mxu0
    %2964 = vdwg.mxu0
    %2965 = vmatprep.subr.mxu0 0.0
    %2966 = vmatpush1.msra.mxu0 0.0
    %2967 = vmatprep.subr.mxu0 0.0
    %2968 = vmatpush1.msra.mxu0 0.0
    %2969 = vmatprep.subr.mxu0 0.0
    %2970 = vmatpush1.msra.mxu0 0.0
    %2971 = vmatprep.subr.mxu0 0.0
    %2972 = vmatpush1.msra.mxu0 0.0
    %2973 = vmatprep.subr.mxu0 0.0
    %2974 = vmatpush1.msra.mxu0 0.0
    %2975 = vmatprep.subr.mxu0 0.0
    %2976 = vmatpush1.msra.mxu0 0.0
    %2977 = vmatprep.subr.mxu0 0.0
    %2978 = vmatpush1.msra.mxu0 0.0
    %2979 = vmatprep.subr.mxu0 0.0
    %2980 = vmatpush1.msra.mxu0 0.0
    %2981 = vmatprep.subr.mxu0 0.0
    %2982 = vmatpush1.msra.mxu0 0.0
    %2983 = vmatprep.subr.mxu0 0.0
    %2984 = vmatpush1.msra.mxu0 0.0
    %2985 = vmatprep.subr.mxu0 0.0
    %2986 = vmatpush1.msra.mxu0 0.0
    %2987 = vmatprep.subr.mxu0 0.0
    %2988 = vmatpush1.msra.mxu0 0.0
    %2989 = vmatprep.subr.mxu0 0.0
    %2990 = vmatpush1.msra.mxu0 0.0
    %2991 = vmatprep.subr.mxu0 0.0
    %2992 = vmatpush1.msra.mxu0 0.0
    %2993 = vmatprep.subr.mxu0 0.0
    %v2994 = vand.u32 %v2713, 4294901760
    %2995 = vmatpush1.msra.mxu0 %v2994
    %2996 = vmatprep.subr.mxu0 0.0
    %v2997 = vand.u32 %v2712, 4294901760
    %2998 = vmatpush1.msra.mxu0 %v2997
    %2999 = vmatprep.subr.mxu0 0.0
    %3000 = vmatpush2.msra.mxu0 0.0
    %3001 = vmatprep.subr.mxu0 0.0
    %3002 = vmatpush2.msra.mxu0 0.0
    %3003 = vmatprep.subr.mxu0 0.0
    %3004 = vmatpush2.msra.mxu0 0.0
    %3005 = vmatprep.subr.mxu0 0.0
    %3006 = vmatpush2.msra.mxu0 0.0
    %3007 = vmatprep.subr.mxu0 0.0
    %3008 = vmatpush2.msra.mxu0 0.0
    %3009 = vmatprep.subr.mxu0 0.0
    %3010 = vmatpush2.msra.mxu0 0.0
    %3011 = vmatprep.subr.mxu0 0.0
    %3012 = vmatpush2.msra.mxu0 0.0
    %3013 = vmatprep.subr.mxu0 0.0
    %3014 = vmatpush2.msra.mxu0 0.0
    %3015 = vmatprep.subr.mxu0 0.0
    %3016 = vmatpush2.msra.mxu0 0.0
    %3017 = vmatprep.subr.mxu0 0.0
    %3018 = vmatpush2.msra.mxu0 0.0
    %3019 = vmatprep.subr.mxu0 0.0
    %3020 = vmatpush2.msra.mxu0 0.0
    %3021 = vmatprep.subr.mxu0 0.0
    %3022 = vmatpush2.msra.mxu0 0.0
    %3023 = vmatprep.subr.mxu0 0.0
    %3024 = vmatpush2.msra.mxu0 0.0
    %3025 = vmatprep.subr.mxu0 0.0
    %3026 = vmatpush2.msra.mxu0 0.0
    %3027 = vmatprep.subr.mxu0 0.0
    %3028 = vmatpush2.msra.mxu0 0.0
    %3029 = vmatprep.subr.mxu0 0.0
    %3030 = vmatpush2.msra.mxu0 0.0
    %3031 = vmatprep.mubr.f32.mxu0 0.0
    %v3032 = vand.u32 %v2729, 4294901760
    %v3033 = vsub.f32 %v2729, %v3032
    %v3034 = vand.u32 %v3033, 4294901760
    %3035 = vmatmul.mubr.f32.gmra.mxu0 %v3034
    %v3036 = vpop.f32.mrf.mxu0
    %v3037 = vadd.f32 %v2962, %v3036
    %v3038 = vpop.f32.mrf.mxu0
    %3039 = vdwg.mxu0
    %3040 = vmatprep.subr.mxu0 0.0
    %3041 = vmatpush1.msra.mxu0 0.0
    %3042 = vmatprep.subr.mxu0 0.0
    %3043 = vmatpush1.msra.mxu0 0.0
    %3044 = vmatprep.subr.mxu0 0.0
    %3045 = vmatpush1.msra.mxu0 0.0
    %3046 = vmatprep.subr.mxu0 0.0
    %3047 = vmatpush1.msra.mxu0 0.0
    %3048 = vmatprep.subr.mxu0 0.0
    %3049 = vmatpush1.msra.mxu0 0.0
    %3050 = vmatprep.subr.mxu0 0.0
    %3051 = vmatpush1.msra.mxu0 0.0
    %3052 = vmatprep.subr.mxu0 0.0
    %3053 = vmatpush1.msra.mxu0 0.0
    %3054 = vmatprep.subr.mxu0 0.0
    %3055 = vmatpush1.msra.mxu0 0.0
    %3056 = vmatprep.subr.mxu0 0.0
    %3057 = vmatpush1.msra.mxu0 0.0
    %3058 = vmatprep.subr.mxu0 0.0
    %3059 = vmatpush1.msra.mxu0 0.0
    %3060 = vmatprep.subr.mxu0 0.0
    %3061 = vmatpush1.msra.mxu0 0.0
    %3062 = vmatprep.subr.mxu0 0.0
    %3063 = vmatpush1.msra.mxu0 0.0
    %3064 = vmatprep.subr.mxu0 0.0
    %3065 = vmatpush1.msra.mxu0 0.0
    %3066 = vmatprep.subr.mxu0 0.0
    %3067 = vmatpush1.msra.mxu0 0.0
    %3068 = vmatprep.subr.mxu0 0.0
    %v3069 = vand.u32 %v2713, 4294901760
    %v3070 = vsub.f32 %v2713, %v3069
    %v3071 = vand.u32 %v3070, 4294901760
    %3072 = vmatpush1.msra.mxu0 %v3071
    %3073 = vmatprep.subr.mxu0 0.0
    %v3074 = vand.u32 %v2712, 4294901760
    %v3075 = vsub.f32 %v2712, %v3074
    %v3076 = vand.u32 %v3075, 4294901760
    %3077 = vmatpush1.msra.mxu0 %v3076
    %3078 = vmatprep.subr.mxu0 0.0
    %3079 = vmatpush2.msra.mxu0 0.0
    %3080 = vmatprep.subr.mxu0 0.0
    %3081 = vmatpush2.msra.mxu0 0.0
    %3082 = vmatprep.subr.mxu0 0.0
    %3083 = vmatpush2.msra.mxu0 0.0
    %3084 = vmatprep.subr.mxu0 0.0
    %3085 = vmatpush2.msra.mxu0 0.0
    %3086 = vmatprep.subr.mxu0 0.0
    %3087 = vmatpush2.msra.mxu0 0.0
    %3088 = vmatprep.subr.mxu0 0.0
    %3089 = vmatpush2.msra.mxu0 0.0
    %3090 = vmatprep.subr.mxu0 0.0
    %3091 = vmatpush2.msra.mxu0 0.0
    %3092 = vmatprep.subr.mxu0 0.0
    %3093 = vmatpush2.msra.mxu0 0.0
    %3094 = vmatprep.subr.mxu0 0.0
    %3095 = vmatpush2.msra.mxu0 0.0
    %3096 = vmatprep.subr.mxu0 0.0
    %3097 = vmatpush2.msra.mxu0 0.0
    %3098 = vmatprep.subr.mxu0 0.0
    %3099 = vmatpush2.msra.mxu0 0.0
    %3100 = vmatprep.subr.mxu0 0.0
    %3101 = vmatpush2.msra.mxu0 0.0
    %3102 = vmatprep.subr.mxu0 0.0
    %3103 = vmatpush2.msra.mxu0 0.0
    %3104 = vmatprep.subr.mxu0 0.0
    %3105 = vmatpush2.msra.mxu0 0.0
    %3106 = vmatprep.subr.mxu0 0.0
    %3107 = vmatpush2.msra.mxu0 0.0
    %3108 = vmatprep.subr.mxu0 0.0
    %3109 = vmatpush2.msra.mxu0 0.0
    %3110 = vmatprep.mubr.f32.mxu0 0.0
    %v3111 = vand.u32 %v2729, 4294901760
    %3112 = vmatmul.mubr.f32.gmra.mxu0 %v3111
    %v3113 = vpop.f32.mrf.mxu0
    %v3114 = vadd.f32 %v3037, %v3113
    %v3115 = vpop.f32.mrf.mxu0
    %3116 = vdwg.mxu0
    %3117 = vmatprep.subr.mxu0 0.0
    %3118 = vmatpush1.msra.mxu0 0.0
    %3119 = vmatprep.subr.mxu0 0.0
    %3120 = vmatpush1.msra.mxu0 0.0
    %3121 = vmatprep.subr.mxu0 0.0
    %3122 = vmatpush1.msra.mxu0 0.0
    %3123 = vmatprep.subr.mxu0 0.0
    %3124 = vmatpush1.msra.mxu0 0.0
    %3125 = vmatprep.subr.mxu0 0.0
    %3126 = vmatpush1.msra.mxu0 0.0
    %3127 = vmatprep.subr.mxu0 0.0
    %3128 = vmatpush1.msra.mxu0 0.0
    %3129 = vmatprep.subr.mxu0 0.0
    %3130 = vmatpush1.msra.mxu0 0.0
    %3131 = vmatprep.subr.mxu0 0.0
    %3132 = vmatpush1.msra.mxu0 0.0
    %3133 = vmatprep.subr.mxu0 0.0
    %3134 = vmatpush1.msra.mxu0 0.0
    %3135 = vmatprep.subr.mxu0 0.0
    %3136 = vmatpush1.msra.mxu0 0.0
    %3137 = vmatprep.subr.mxu0 0.0
    %3138 = vmatpush1.msra.mxu0 0.0
    %3139 = vmatprep.subr.mxu0 0.0
    %3140 = vmatpush1.msra.mxu0 0.0
    %3141 = vmatprep.subr.mxu0 0.0
    %3142 = vmatpush1.msra.mxu0 0.0
    %3143 = vmatprep.subr.mxu0 0.0
    %3144 = vmatpush1.msra.mxu0 0.0
    %3145 = vmatprep.subr.mxu0 0.0
    %v3146 = vand.u32 %v2713, 4294901760
    %3147 = vmatpush1.msra.mxu0 %v3146
    %3148 = vmatprep.subr.mxu0 0.0
    %v3149 = vand.u32 %v2712, 4294901760
    %3150 = vmatpush1.msra.mxu0 %v3149
    %3151 = vmatprep.subr.mxu0 0.0
    %3152 = vmatpush2.msra.mxu0 0.0
    %3153 = vmatprep.subr.mxu0 0.0
    %3154 = vmatpush2.msra.mxu0 0.0
    %3155 = vmatprep.subr.mxu0 0.0
    %3156 = vmatpush2.msra.mxu0 0.0
    %3157 = vmatprep.subr.mxu0 0.0
    %3158 = vmatpush2.msra.mxu0 0.0
    %3159 = vmatprep.subr.mxu0 0.0
    %3160 = vmatpush2.msra.mxu0 0.0
    %3161 = vmatprep.subr.mxu0 0.0
    %3162 = vmatpush2.msra.mxu0 0.0
    %3163 = vmatprep.subr.mxu0 0.0
    %3164 = vmatpush2.msra.mxu0 0.0
    %3165 = vmatprep.subr.mxu0 0.0
    %3166 = vmatpush2.msra.mxu0 0.0
    %3167 = vmatprep.subr.mxu0 0.0
    %3168 = vmatpush2.msra.mxu0 0.0
    %3169 = vmatprep.subr.mxu0 0.0
    %3170 = vmatpush2.msra.mxu0 0.0
    %3171 = vmatprep.subr.mxu0 0.0
    %3172 = vmatpush2.msra.mxu0 0.0
    %3173 = vmatprep.subr.mxu0 0.0
    %3174 = vmatpush2.msra.mxu0 0.0
    %3175 = vmatprep.subr.mxu0 0.0
    %3176 = vmatpush2.msra.mxu0 0.0
    %3177 = vmatprep.subr.mxu0 0.0
    %3178 = vmatpush2.msra.mxu0 0.0
    %3179 = vmatprep.subr.mxu0 0.0
    %3180 = vmatpush2.msra.mxu0 0.0
    %3181 = vmatprep.subr.mxu0 0.0
    %3182 = vmatpush2.msra.mxu0 0.0
    %3183 = vmatprep.mubr.f32.mxu0 0.0
    %v3184 = vand.u32 %v2729, 4294901760
    %3185 = vmatmul.mubr.f32.gmra.mxu0 %v3184
    %v3186 = vpop.f32.mrf.mxu0
    %v3187 = vadd.f32 %v3114, %v3186
    %v3188 = vpop.f32.mrf.mxu0
    %3189 = vdwg.mxu0
    %v3191 = vsel %vm83, %v74, 0
    %3193 = vmatprep.subr.mxu0 0.0
    %3194 = vmatpush1.msra.mxu0 0.0
    %3195 = vmatprep.subr.mxu0 0.0
    %3196 = vmatpush1.msra.mxu0 0.0
    %3197 = vmatprep.subr.mxu0 0.0
    %3198 = vmatpush1.msra.mxu0 0.0
    %3199 = vmatprep.subr.mxu0 0.0
    %3200 = vmatpush1.msra.mxu0 0.0
    %3201 = vmatprep.subr.mxu0 0.0
    %3202 = vmatpush1.msra.mxu0 0.0
    %3203 = vmatprep.subr.mxu0 0.0
    %3204 = vmatpush1.msra.mxu0 0.0
    %3205 = vmatprep.subr.mxu0 0.0
    %3206 = vmatpush1.msra.mxu0 0.0
    %3207 = vmatprep.subr.mxu0 0.0
    %3208 = vmatpush1.msra.mxu0 0.0
    %3209 = vmatprep.subr.mxu0 0.0
    %3210 = vmatpush1.msra.mxu0 0.0
    %3211 = vmatprep.subr.mxu0 0.0
    %3212 = vmatpush1.msra.mxu0 0.0
    %3213 = vmatprep.subr.mxu0 0.0
    %3214 = vmatpush1.msra.mxu0 0.0
    %3215 = vmatprep.subr.mxu0 0.0
    %3216 = vmatpush1.msra.mxu0 0.0
    %3217 = vmatprep.subr.mxu0 0.0
    %3218 = vmatpush1.msra.mxu0 0.0
    %3219 = vmatprep.subr.mxu0 0.0
    %3220 = vmatpush1.msra.mxu0 0.0
    %3221 = vmatprep.subr.mxu0 0.0
    %v3222 = vand.u32 %v2715, 4294901760
    %3223 = vmatpush1.msra.mxu0 %v3222
    %3224 = vmatprep.subr.mxu0 0.0
    %v3225 = vand.u32 %v2714, 4294901760
    %3226 = vmatpush1.msra.mxu0 %v3225
    %3227 = vmatprep.subr.mxu0 0.0
    %3228 = vmatpush2.msra.mxu0 0.0
    %3229 = vmatprep.subr.mxu0 0.0
    %3230 = vmatpush2.msra.mxu0 0.0
    %3231 = vmatprep.subr.mxu0 0.0
    %3232 = vmatpush2.msra.mxu0 0.0
    %3233 = vmatprep.subr.mxu0 0.0
    %3234 = vmatpush2.msra.mxu0 0.0
    %3235 = vmatprep.subr.mxu0 0.0
    %3236 = vmatpush2.msra.mxu0 0.0
    %3237 = vmatprep.subr.mxu0 0.0
    %3238 = vmatpush2.msra.mxu0 0.0
    %3239 = vmatprep.subr.mxu0 0.0
    %3240 = vmatpush2.msra.mxu0 0.0
    %3241 = vmatprep.subr.mxu0 0.0
    %3242 = vmatpush2.msra.mxu0 0.0
    %3243 = vmatprep.subr.mxu0 0.0
    %3244 = vmatpush2.msra.mxu0 0.0
    %3245 = vmatprep.subr.mxu0 0.0
    %3246 = vmatpush2.msra.mxu0 0.0
    %3247 = vmatprep.subr.mxu0 0.0
    %3248 = vmatpush2.msra.mxu0 0.0
    %3249 = vmatprep.subr.mxu0 0.0
    %3250 = vmatpush2.msra.mxu0 0.0
    %3251 = vmatprep.subr.mxu0 0.0
    %3252 = vmatpush2.msra.mxu0 0.0
    %3253 = vmatprep.subr.mxu0 0.0
    %3254 = vmatpush2.msra.mxu0 0.0
    %3255 = vmatprep.subr.mxu0 0.0
    %3256 = vmatpush2.msra.mxu0 0.0
    %3257 = vmatprep.subr.mxu0 0.0
    %3258 = vmatpush2.msra.mxu0 0.0
    %3259 = vmatprep.mubr.f32.mxu0 0.0
    %v3260 = vand.u32 %v3191, 4294901760
    %v3261 = vsub.f32 %v3191, %v3260
    %v3262 = vand.u32 %v3261, 4294901760
    %v3263 = vsub.f32 %v3261, %v3262
    %v3264 = vand.u32 %v3263, 4294901760
    %3265 = vmatmul.mubr.f32.gmra.mxu0 %v3264
    %v3266 = vpop.f32.mrf.mxu0
    %v3267 = vadd.f32 0.0, %v3266
    %v3268 = vpop.f32.mrf.mxu0
    %3269 = vdwg.mxu0
    %3270 = vmatprep.subr.mxu0 0.0
    %3271 = vmatpush1.msra.mxu0 0.0
    %3272 = vmatprep.subr.mxu0 0.0
    %3273 = vmatpush1.msra.mxu0 0.0
    %3274 = vmatprep.subr.mxu0 0.0
    %3275 = vmatpush1.msra.mxu0 0.0
    %3276 = vmatprep.subr.mxu0 0.0
    %3277 = vmatpush1.msra.mxu0 0.0
    %3278 = vmatprep.subr.mxu0 0.0
    %3279 = vmatpush1.msra.mxu0 0.0
    %3280 = vmatprep.subr.mxu0 0.0
    %3281 = vmatpush1.msra.mxu0 0.0
    %3282 = vmatprep.subr.mxu0 0.0
    %3283 = vmatpush1.msra.mxu0 0.0
    %3284 = vmatprep.subr.mxu0 0.0
    %3285 = vmatpush1.msra.mxu0 0.0
    %3286 = vmatprep.subr.mxu0 0.0
    %3287 = vmatpush1.msra.mxu0 0.0
    %3288 = vmatprep.subr.mxu0 0.0
    %3289 = vmatpush1.msra.mxu0 0.0
    %3290 = vmatprep.subr.mxu0 0.0
    %3291 = vmatpush1.msra.mxu0 0.0
    %3292 = vmatprep.subr.mxu0 0.0
    %3293 = vmatpush1.msra.mxu0 0.0
    %3294 = vmatprep.subr.mxu0 0.0
    %3295 = vmatpush1.msra.mxu0 0.0
    %3296 = vmatprep.subr.mxu0 0.0
    %3297 = vmatpush1.msra.mxu0 0.0
    %3298 = vmatprep.subr.mxu0 0.0
    %v3299 = vand.u32 %v2715, 4294901760
    %v3300 = vsub.f32 %v2715, %v3299
    %v3301 = vand.u32 %v3300, 4294901760
    %v3302 = vsub.f32 %v3300, %v3301
    %v3303 = vand.u32 %v3302, 4294901760
    %3304 = vmatpush1.msra.mxu0 %v3303
    %3305 = vmatprep.subr.mxu0 0.0
    %v3306 = vand.u32 %v2714, 4294901760
    %v3307 = vsub.f32 %v2714, %v3306
    %v3308 = vand.u32 %v3307, 4294901760
    %v3309 = vsub.f32 %v3307, %v3308
    %v3310 = vand.u32 %v3309, 4294901760
    %3311 = vmatpush1.msra.mxu0 %v3310
    %3312 = vmatprep.subr.mxu0 0.0
    %3313 = vmatpush2.msra.mxu0 0.0
    %3314 = vmatprep.subr.mxu0 0.0
    %3315 = vmatpush2.msra.mxu0 0.0
    %3316 = vmatprep.subr.mxu0 0.0
    %3317 = vmatpush2.msra.mxu0 0.0
    %3318 = vmatprep.subr.mxu0 0.0
    %3319 = vmatpush2.msra.mxu0 0.0
    %3320 = vmatprep.subr.mxu0 0.0
    %3321 = vmatpush2.msra.mxu0 0.0
    %3322 = vmatprep.subr.mxu0 0.0
    %3323 = vmatpush2.msra.mxu0 0.0
    %3324 = vmatprep.subr.mxu0 0.0
    %3325 = vmatpush2.msra.mxu0 0.0
    %3326 = vmatprep.subr.mxu0 0.0
    %3327 = vmatpush2.msra.mxu0 0.0
    %3328 = vmatprep.subr.mxu0 0.0
    %3329 = vmatpush2.msra.mxu0 0.0
    %3330 = vmatprep.subr.mxu0 0.0
    %3331 = vmatpush2.msra.mxu0 0.0
    %3332 = vmatprep.subr.mxu0 0.0
    %3333 = vmatpush2.msra.mxu0 0.0
    %3334 = vmatprep.subr.mxu0 0.0
    %3335 = vmatpush2.msra.mxu0 0.0
    %3336 = vmatprep.subr.mxu0 0.0
    %3337 = vmatpush2.msra.mxu0 0.0
    %3338 = vmatprep.subr.mxu0 0.0
    %3339 = vmatpush2.msra.mxu0 0.0
    %3340 = vmatprep.subr.mxu0 0.0
    %3341 = vmatpush2.msra.mxu0 0.0
    %3342 = vmatprep.subr.mxu0 0.0
    %3343 = vmatpush2.msra.mxu0 0.0
    %3344 = vmatprep.mubr.f32.mxu0 0.0
    %v3345 = vand.u32 %v3191, 4294901760
    %3346 = vmatmul.mubr.f32.gmra.mxu0 %v3345
    %v3347 = vpop.f32.mrf.mxu0
    %v3348 = vadd.f32 %v3267, %v3347
    %v3349 = vpop.f32.mrf.mxu0
    %3350 = vdwg.mxu0
    %3351 = vmatprep.subr.mxu0 0.0
    %3352 = vmatpush1.msra.mxu0 0.0
    %3353 = vmatprep.subr.mxu0 0.0
    %3354 = vmatpush1.msra.mxu0 0.0
    %3355 = vmatprep.subr.mxu0 0.0
    %3356 = vmatpush1.msra.mxu0 0.0
    %3357 = vmatprep.subr.mxu0 0.0
    %3358 = vmatpush1.msra.mxu0 0.0
    %3359 = vmatprep.subr.mxu0 0.0
    %3360 = vmatpush1.msra.mxu0 0.0
    %3361 = vmatprep.subr.mxu0 0.0
    %3362 = vmatpush1.msra.mxu0 0.0
    %3363 = vmatprep.subr.mxu0 0.0
    %3364 = vmatpush1.msra.mxu0 0.0
    %3365 = vmatprep.subr.mxu0 0.0
    %3366 = vmatpush1.msra.mxu0 0.0
    %3367 = vmatprep.subr.mxu0 0.0
    %3368 = vmatpush1.msra.mxu0 0.0
    %3369 = vmatprep.subr.mxu0 0.0
    %3370 = vmatpush1.msra.mxu0 0.0
    %3371 = vmatprep.subr.mxu0 0.0
    %3372 = vmatpush1.msra.mxu0 0.0
    %3373 = vmatprep.subr.mxu0 0.0
    %3374 = vmatpush1.msra.mxu0 0.0
    %3375 = vmatprep.subr.mxu0 0.0
    %3376 = vmatpush1.msra.mxu0 0.0
    %3377 = vmatprep.subr.mxu0 0.0
    %3378 = vmatpush1.msra.mxu0 0.0
    %3379 = vmatprep.subr.mxu0 0.0
    %v3380 = vand.u32 %v2715, 4294901760
    %v3381 = vsub.f32 %v2715, %v3380
    %3382 = vmatpush1.msra.mxu0 %v3381
    %3383 = vmatprep.subr.mxu0 0.0
    %v3384 = vand.u32 %v2714, 4294901760
    %v3385 = vsub.f32 %v2714, %v3384
    %3386 = vmatpush1.msra.mxu0 %v3385
    %3387 = vmatprep.subr.mxu0 0.0
    %3388 = vmatpush2.msra.mxu0 0.0
    %3389 = vmatprep.subr.mxu0 0.0
    %3390 = vmatpush2.msra.mxu0 0.0
    %3391 = vmatprep.subr.mxu0 0.0
    %3392 = vmatpush2.msra.mxu0 0.0
    %3393 = vmatprep.subr.mxu0 0.0
    %3394 = vmatpush2.msra.mxu0 0.0
    %3395 = vmatprep.subr.mxu0 0.0
    %3396 = vmatpush2.msra.mxu0 0.0
    %3397 = vmatprep.subr.mxu0 0.0
    %3398 = vmatpush2.msra.mxu0 0.0
    %3399 = vmatprep.subr.mxu0 0.0
    %3400 = vmatpush2.msra.mxu0 0.0
    %3401 = vmatprep.subr.mxu0 0.0
    %3402 = vmatpush2.msra.mxu0 0.0
    %3403 = vmatprep.subr.mxu0 0.0
    %3404 = vmatpush2.msra.mxu0 0.0
    %3405 = vmatprep.subr.mxu0 0.0
    %3406 = vmatpush2.msra.mxu0 0.0
    %3407 = vmatprep.subr.mxu0 0.0
    %3408 = vmatpush2.msra.mxu0 0.0
    %3409 = vmatprep.subr.mxu0 0.0
    %3410 = vmatpush2.msra.mxu0 0.0
    %3411 = vmatprep.subr.mxu0 0.0
    %3412 = vmatpush2.msra.mxu0 0.0
    %3413 = vmatprep.subr.mxu0 0.0
    %3414 = vmatpush2.msra.mxu0 0.0
    %3415 = vmatprep.subr.mxu0 0.0
    %3416 = vmatpush2.msra.mxu0 0.0
    %3417 = vmatprep.subr.mxu0 0.0
    %3418 = vmatpush2.msra.mxu0 0.0
    %3419 = vmatprep.mubr.f32.mxu0 0.0
    %v3420 = vand.u32 %v3191, 4294901760
    %v3421 = vsub.f32 %v3191, %v3420
    %3422 = vmatmul.mubr.f32.gmra.mxu0 %v3421
    %v3423 = vpop.f32.mrf.mxu0
    %v3424 = vadd.f32 %v3348, %v3423
    %v3425 = vpop.f32.mrf.mxu0
    %3426 = vdwg.mxu0
    %3427 = vmatprep.subr.mxu0 0.0
    %3428 = vmatpush1.msra.mxu0 0.0
    %3429 = vmatprep.subr.mxu0 0.0
    %3430 = vmatpush1.msra.mxu0 0.0
    %3431 = vmatprep.subr.mxu0 0.0
    %3432 = vmatpush1.msra.mxu0 0.0
    %3433 = vmatprep.subr.mxu0 0.0
    %3434 = vmatpush1.msra.mxu0 0.0
    %3435 = vmatprep.subr.mxu0 0.0
    %3436 = vmatpush1.msra.mxu0 0.0
    %3437 = vmatprep.subr.mxu0 0.0
    %3438 = vmatpush1.msra.mxu0 0.0
    %3439 = vmatprep.subr.mxu0 0.0
    %3440 = vmatpush1.msra.mxu0 0.0
    %3441 = vmatprep.subr.mxu0 0.0
    %3442 = vmatpush1.msra.mxu0 0.0
    %3443 = vmatprep.subr.mxu0 0.0
    %3444 = vmatpush1.msra.mxu0 0.0
    %3445 = vmatprep.subr.mxu0 0.0
    %3446 = vmatpush1.msra.mxu0 0.0
    %3447 = vmatprep.subr.mxu0 0.0
    %3448 = vmatpush1.msra.mxu0 0.0
    %3449 = vmatprep.subr.mxu0 0.0
    %3450 = vmatpush1.msra.mxu0 0.0
    %3451 = vmatprep.subr.mxu0 0.0
    %3452 = vmatpush1.msra.mxu0 0.0
    %3453 = vmatprep.subr.mxu0 0.0
    %3454 = vmatpush1.msra.mxu0 0.0
    %3455 = vmatprep.subr.mxu0 0.0
    %v3456 = vand.u32 %v2715, 4294901760
    %3457 = vmatpush1.msra.mxu0 %v3456
    %3458 = vmatprep.subr.mxu0 0.0
    %v3459 = vand.u32 %v2714, 4294901760
    %3460 = vmatpush1.msra.mxu0 %v3459
    %3461 = vmatprep.subr.mxu0 0.0
    %3462 = vmatpush2.msra.mxu0 0.0
    %3463 = vmatprep.subr.mxu0 0.0
    %3464 = vmatpush2.msra.mxu0 0.0
    %3465 = vmatprep.subr.mxu0 0.0
    %3466 = vmatpush2.msra.mxu0 0.0
    %3467 = vmatprep.subr.mxu0 0.0
    %3468 = vmatpush2.msra.mxu0 0.0
    %3469 = vmatprep.subr.mxu0 0.0
    %3470 = vmatpush2.msra.mxu0 0.0
    %3471 = vmatprep.subr.mxu0 0.0
    %3472 = vmatpush2.msra.mxu0 0.0
    %3473 = vmatprep.subr.mxu0 0.0
    %3474 = vmatpush2.msra.mxu0 0.0
    %3475 = vmatprep.subr.mxu0 0.0
    %3476 = vmatpush2.msra.mxu0 0.0
    %3477 = vmatprep.subr.mxu0 0.0
    %3478 = vmatpush2.msra.mxu0 0.0
    %3479 = vmatprep.subr.mxu0 0.0
    %3480 = vmatpush2.msra.mxu0 0.0
    %3481 = vmatprep.subr.mxu0 0.0
    %3482 = vmatpush2.msra.mxu0 0.0
    %3483 = vmatprep.subr.mxu0 0.0
    %3484 = vmatpush2.msra.mxu0 0.0
    %3485 = vmatprep.subr.mxu0 0.0
    %3486 = vmatpush2.msra.mxu0 0.0
    %3487 = vmatprep.subr.mxu0 0.0
    %3488 = vmatpush2.msra.mxu0 0.0
    %3489 = vmatprep.subr.mxu0 0.0
    %3490 = vmatpush2.msra.mxu0 0.0
    %3491 = vmatprep.subr.mxu0 0.0
    %3492 = vmatpush2.msra.mxu0 0.0
    %3493 = vmatprep.mubr.f32.mxu0 0.0
    %v3494 = vand.u32 %v3191, 4294901760
    %v3495 = vsub.f32 %v3191, %v3494
    %v3496 = vand.u32 %v3495, 4294901760
    %3497 = vmatmul.mubr.f32.gmra.mxu0 %v3496
    %v3498 = vpop.f32.mrf.mxu0
    %v3499 = vadd.f32 %v3424, %v3498
    %v3500 = vpop.f32.mrf.mxu0
    %3501 = vdwg.mxu0
    %3502 = vmatprep.subr.mxu0 0.0
    %3503 = vmatpush1.msra.mxu0 0.0
    %3504 = vmatprep.subr.mxu0 0.0
    %3505 = vmatpush1.msra.mxu0 0.0
    %3506 = vmatprep.subr.mxu0 0.0
    %3507 = vmatpush1.msra.mxu0 0.0
    %3508 = vmatprep.subr.mxu0 0.0
    %3509 = vmatpush1.msra.mxu0 0.0
    %3510 = vmatprep.subr.mxu0 0.0
    %3511 = vmatpush1.msra.mxu0 0.0
    %3512 = vmatprep.subr.mxu0 0.0
    %3513 = vmatpush1.msra.mxu0 0.0
    %3514 = vmatprep.subr.mxu0 0.0
    %3515 = vmatpush1.msra.mxu0 0.0
    %3516 = vmatprep.subr.mxu0 0.0
    %3517 = vmatpush1.msra.mxu0 0.0
    %3518 = vmatprep.subr.mxu0 0.0
    %3519 = vmatpush1.msra.mxu0 0.0
    %3520 = vmatprep.subr.mxu0 0.0
    %3521 = vmatpush1.msra.mxu0 0.0
    %3522 = vmatprep.subr.mxu0 0.0
    %3523 = vmatpush1.msra.mxu0 0.0
    %3524 = vmatprep.subr.mxu0 0.0
    %3525 = vmatpush1.msra.mxu0 0.0
    %3526 = vmatprep.subr.mxu0 0.0
    %3527 = vmatpush1.msra.mxu0 0.0
    %3528 = vmatprep.subr.mxu0 0.0
    %3529 = vmatpush1.msra.mxu0 0.0
    %3530 = vmatprep.subr.mxu0 0.0
    %v3531 = vand.u32 %v2715, 4294901760
    %v3532 = vsub.f32 %v2715, %v3531
    %v3533 = vand.u32 %v3532, 4294901760
    %3534 = vmatpush1.msra.mxu0 %v3533
    %3535 = vmatprep.subr.mxu0 0.0
    %v3536 = vand.u32 %v2714, 4294901760
    %v3537 = vsub.f32 %v2714, %v3536
    %v3538 = vand.u32 %v3537, 4294901760
    %3539 = vmatpush1.msra.mxu0 %v3538
    %3540 = vmatprep.subr.mxu0 0.0
    %3541 = vmatpush2.msra.mxu0 0.0
    %3542 = vmatprep.subr.mxu0 0.0
    %3543 = vmatpush2.msra.mxu0 0.0
    %3544 = vmatprep.subr.mxu0 0.0
    %3545 = vmatpush2.msra.mxu0 0.0
    %3546 = vmatprep.subr.mxu0 0.0
    %3547 = vmatpush2.msra.mxu0 0.0
    %3548 = vmatprep.subr.mxu0 0.0
    %3549 = vmatpush2.msra.mxu0 0.0
    %3550 = vmatprep.subr.mxu0 0.0
    %3551 = vmatpush2.msra.mxu0 0.0
    %3552 = vmatprep.subr.mxu0 0.0
    %3553 = vmatpush2.msra.mxu0 0.0
    %3554 = vmatprep.subr.mxu0 0.0
    %3555 = vmatpush2.msra.mxu0 0.0
    %3556 = vmatprep.subr.mxu0 0.0
    %3557 = vmatpush2.msra.mxu0 0.0
    %3558 = vmatprep.subr.mxu0 0.0
    %3559 = vmatpush2.msra.mxu0 0.0
    %3560 = vmatprep.subr.mxu0 0.0
    %3561 = vmatpush2.msra.mxu0 0.0
    %3562 = vmatprep.subr.mxu0 0.0
    %3563 = vmatpush2.msra.mxu0 0.0
    %3564 = vmatprep.subr.mxu0 0.0
    %3565 = vmatpush2.msra.mxu0 0.0
    %3566 = vmatprep.subr.mxu0 0.0
    %3567 = vmatpush2.msra.mxu0 0.0
    %3568 = vmatprep.subr.mxu0 0.0
    %3569 = vmatpush2.msra.mxu0 0.0
    %3570 = vmatprep.subr.mxu0 0.0
    %3571 = vmatpush2.msra.mxu0 0.0
    %3572 = vmatprep.mubr.f32.mxu0 0.0
    %v3573 = vand.u32 %v3191, 4294901760
    %3574 = vmatmul.mubr.f32.gmra.mxu0 %v3573
    %v3575 = vpop.f32.mrf.mxu0
    %v3576 = vadd.f32 %v3499, %v3575
    %v3577 = vpop.f32.mrf.mxu0
    %3578 = vdwg.mxu0
    %3579 = vmatprep.subr.mxu0 0.0
    %3580 = vmatpush1.msra.mxu0 0.0
    %3581 = vmatprep.subr.mxu0 0.0
    %3582 = vmatpush1.msra.mxu0 0.0
    %3583 = vmatprep.subr.mxu0 0.0
    %3584 = vmatpush1.msra.mxu0 0.0
    %3585 = vmatprep.subr.mxu0 0.0
    %3586 = vmatpush1.msra.mxu0 0.0
    %3587 = vmatprep.subr.mxu0 0.0
    %3588 = vmatpush1.msra.mxu0 0.0
    %3589 = vmatprep.subr.mxu0 0.0
    %3590 = vmatpush1.msra.mxu0 0.0
    %3591 = vmatprep.subr.mxu0 0.0
    %3592 = vmatpush1.msra.mxu0 0.0
    %3593 = vmatprep.subr.mxu0 0.0
    %3594 = vmatpush1.msra.mxu0 0.0
    %3595 = vmatprep.subr.mxu0 0.0
    %3596 = vmatpush1.msra.mxu0 0.0
    %3597 = vmatprep.subr.mxu0 0.0
    %3598 = vmatpush1.msra.mxu0 0.0
    %3599 = vmatprep.subr.mxu0 0.0
    %3600 = vmatpush1.msra.mxu0 0.0
    %3601 = vmatprep.subr.mxu0 0.0
    %3602 = vmatpush1.msra.mxu0 0.0
    %3603 = vmatprep.subr.mxu0 0.0
    %3604 = vmatpush1.msra.mxu0 0.0
    %3605 = vmatprep.subr.mxu0 0.0
    %3606 = vmatpush1.msra.mxu0 0.0
    %3607 = vmatprep.subr.mxu0 0.0
    %v3608 = vand.u32 %v2715, 4294901760
    %3609 = vmatpush1.msra.mxu0 %v3608
    %3610 = vmatprep.subr.mxu0 0.0
    %v3611 = vand.u32 %v2714, 4294901760
    %3612 = vmatpush1.msra.mxu0 %v3611
    %3613 = vmatprep.subr.mxu0 0.0
    %3614 = vmatpush2.msra.mxu0 0.0
    %3615 = vmatprep.subr.mxu0 0.0
    %3616 = vmatpush2.msra.mxu0 0.0
    %3617 = vmatprep.subr.mxu0 0.0
    %3618 = vmatpush2.msra.mxu0 0.0
    %3619 = vmatprep.subr.mxu0 0.0
    %3620 = vmatpush2.msra.mxu0 0.0
    %3621 = vmatprep.subr.mxu0 0.0
    %3622 = vmatpush2.msra.mxu0 0.0
    %3623 = vmatprep.subr.mxu0 0.0
    %3624 = vmatpush2.msra.mxu0 0.0
    %3625 = vmatprep.subr.mxu0 0.0
    %3626 = vmatpush2.msra.mxu0 0.0
    %3627 = vmatprep.subr.mxu0 0.0
    %3628 = vmatpush2.msra.mxu0 0.0
    %3629 = vmatprep.subr.mxu0 0.0
    %3630 = vmatpush2.msra.mxu0 0.0
    %3631 = vmatprep.subr.mxu0 0.0
    %3632 = vmatpush2.msra.mxu0 0.0
    %3633 = vmatprep.subr.mxu0 0.0
    %3634 = vmatpush2.msra.mxu0 0.0
    %3635 = vmatprep.subr.mxu0 0.0
    %3636 = vmatpush2.msra.mxu0 0.0
    %3637 = vmatprep.subr.mxu0 0.0
    %3638 = vmatpush2.msra.mxu0 0.0
    %3639 = vmatprep.subr.mxu0 0.0
    %3640 = vmatpush2.msra.mxu0 0.0
    %3641 = vmatprep.subr.mxu0 0.0
    %3642 = vmatpush2.msra.mxu0 0.0
    %3643 = vmatprep.subr.mxu0 0.0
    %3644 = vmatpush2.msra.mxu0 0.0
    %3645 = vmatprep.mubr.f32.mxu0 0.0
    %v3646 = vand.u32 %v3191, 4294901760
    %3647 = vmatmul.mubr.f32.gmra.mxu0 %v3646
    %v3648 = vpop.f32.mrf.mxu0
    %v3649 = vadd.f32 %v3576, %v3648
    %v3650 = vpop.f32.mrf.mxu0
    %3651 = vdwg.mxu0
    %v3653 = vsel %vm83, %v75, 0
    %3655 = vmatprep.subr.mxu0 0.0
    %3656 = vmatpush1.msra.mxu0 0.0
    %3657 = vmatprep.subr.mxu0 0.0
    %3658 = vmatpush1.msra.mxu0 0.0
    %3659 = vmatprep.subr.mxu0 0.0
    %3660 = vmatpush1.msra.mxu0 0.0
    %3661 = vmatprep.subr.mxu0 0.0
    %3662 = vmatpush1.msra.mxu0 0.0
    %3663 = vmatprep.subr.mxu0 0.0
    %3664 = vmatpush1.msra.mxu0 0.0
    %3665 = vmatprep.subr.mxu0 0.0
    %3666 = vmatpush1.msra.mxu0 0.0
    %3667 = vmatprep.subr.mxu0 0.0
    %3668 = vmatpush1.msra.mxu0 0.0
    %3669 = vmatprep.subr.mxu0 0.0
    %3670 = vmatpush1.msra.mxu0 0.0
    %3671 = vmatprep.subr.mxu0 0.0
    %3672 = vmatpush1.msra.mxu0 0.0
    %3673 = vmatprep.subr.mxu0 0.0
    %3674 = vmatpush1.msra.mxu0 0.0
    %3675 = vmatprep.subr.mxu0 0.0
    %3676 = vmatpush1.msra.mxu0 0.0
    %3677 = vmatprep.subr.mxu0 0.0
    %3678 = vmatpush1.msra.mxu0 0.0
    %3679 = vmatprep.subr.mxu0 0.0
    %3680 = vmatpush1.msra.mxu0 0.0
    %3681 = vmatprep.subr.mxu0 0.0
    %3682 = vmatpush1.msra.mxu0 0.0
    %3683 = vmatprep.subr.mxu0 0.0
    %v3684 = vand.u32 %v2717, 4294901760
    %3685 = vmatpush1.msra.mxu0 %v3684
    %3686 = vmatprep.subr.mxu0 0.0
    %v3687 = vand.u32 %v2716, 4294901760
    %3688 = vmatpush1.msra.mxu0 %v3687
    %3689 = vmatprep.subr.mxu0 0.0
    %3690 = vmatpush2.msra.mxu0 0.0
    %3691 = vmatprep.subr.mxu0 0.0
    %3692 = vmatpush2.msra.mxu0 0.0
    %3693 = vmatprep.subr.mxu0 0.0
    %3694 = vmatpush2.msra.mxu0 0.0
    %3695 = vmatprep.subr.mxu0 0.0
    %3696 = vmatpush2.msra.mxu0 0.0
    %3697 = vmatprep.subr.mxu0 0.0
    %3698 = vmatpush2.msra.mxu0 0.0
    %3699 = vmatprep.subr.mxu0 0.0
    %3700 = vmatpush2.msra.mxu0 0.0
    %3701 = vmatprep.subr.mxu0 0.0
    %3702 = vmatpush2.msra.mxu0 0.0
    %3703 = vmatprep.subr.mxu0 0.0
    %3704 = vmatpush2.msra.mxu0 0.0
    %3705 = vmatprep.subr.mxu0 0.0
    %3706 = vmatpush2.msra.mxu0 0.0
    %3707 = vmatprep.subr.mxu0 0.0
    %3708 = vmatpush2.msra.mxu0 0.0
    %3709 = vmatprep.subr.mxu0 0.0
    %3710 = vmatpush2.msra.mxu0 0.0
    %3711 = vmatprep.subr.mxu0 0.0
    %3712 = vmatpush2.msra.mxu0 0.0
    %3713 = vmatprep.subr.mxu0 0.0
    %3714 = vmatpush2.msra.mxu0 0.0
    %3715 = vmatprep.subr.mxu0 0.0
    %3716 = vmatpush2.msra.mxu0 0.0
    %3717 = vmatprep.subr.mxu0 0.0
    %3718 = vmatpush2.msra.mxu0 0.0
    %3719 = vmatprep.subr.mxu0 0.0
    %3720 = vmatpush2.msra.mxu0 0.0
    %3721 = vmatprep.mubr.f32.mxu0 0.0
    %v3722 = vand.u32 %v3653, 4294901760
    %v3723 = vsub.f32 %v3653, %v3722
    %v3724 = vand.u32 %v3723, 4294901760
    %v3725 = vsub.f32 %v3723, %v3724
    %v3726 = vand.u32 %v3725, 4294901760
    %3727 = vmatmul.mubr.f32.gmra.mxu0 %v3726
    %v3728 = vpop.f32.mrf.mxu0
    %v3729 = vadd.f32 0.0, %v3728
    %v3730 = vpop.f32.mrf.mxu0
    %3731 = vdwg.mxu0
    %3732 = vmatprep.subr.mxu0 0.0
    %3733 = vmatpush1.msra.mxu0 0.0
    %3734 = vmatprep.subr.mxu0 0.0
    %3735 = vmatpush1.msra.mxu0 0.0
    %3736 = vmatprep.subr.mxu0 0.0
    %3737 = vmatpush1.msra.mxu0 0.0
    %3738 = vmatprep.subr.mxu0 0.0
    %3739 = vmatpush1.msra.mxu0 0.0
    %3740 = vmatprep.subr.mxu0 0.0
    %3741 = vmatpush1.msra.mxu0 0.0
    %3742 = vmatprep.subr.mxu0 0.0
    %3743 = vmatpush1.msra.mxu0 0.0
    %3744 = vmatprep.subr.mxu0 0.0
    %3745 = vmatpush1.msra.mxu0 0.0
    %3746 = vmatprep.subr.mxu0 0.0
    %3747 = vmatpush1.msra.mxu0 0.0
    %3748 = vmatprep.subr.mxu0 0.0
    %3749 = vmatpush1.msra.mxu0 0.0
    %3750 = vmatprep.subr.mxu0 0.0
    %3751 = vmatpush1.msra.mxu0 0.0
    %3752 = vmatprep.subr.mxu0 0.0
    %3753 = vmatpush1.msra.mxu0 0.0
    %3754 = vmatprep.subr.mxu0 0.0
    %3755 = vmatpush1.msra.mxu0 0.0
    %3756 = vmatprep.subr.mxu0 0.0
    %3757 = vmatpush1.msra.mxu0 0.0
    %3758 = vmatprep.subr.mxu0 0.0
    %3759 = vmatpush1.msra.mxu0 0.0
    %3760 = vmatprep.subr.mxu0 0.0
    %v3761 = vand.u32 %v2717, 4294901760
    %v3762 = vsub.f32 %v2717, %v3761
    %v3763 = vand.u32 %v3762, 4294901760
    %v3764 = vsub.f32 %v3762, %v3763
    %v3765 = vand.u32 %v3764, 4294901760
    %3766 = vmatpush1.msra.mxu0 %v3765
    %3767 = vmatprep.subr.mxu0 0.0
    %v3768 = vand.u32 %v2716, 4294901760
    %v3769 = vsub.f32 %v2716, %v3768
    %v3770 = vand.u32 %v3769, 4294901760
    %v3771 = vsub.f32 %v3769, %v3770
    %v3772 = vand.u32 %v3771, 4294901760
    %3773 = vmatpush1.msra.mxu0 %v3772
    %3774 = vmatprep.subr.mxu0 0.0
    %3775 = vmatpush2.msra.mxu0 0.0
    %3776 = vmatprep.subr.mxu0 0.0
    %3777 = vmatpush2.msra.mxu0 0.0
    %3778 = vmatprep.subr.mxu0 0.0
    %3779 = vmatpush2.msra.mxu0 0.0
    %3780 = vmatprep.subr.mxu0 0.0
    %3781 = vmatpush2.msra.mxu0 0.0
    %3782 = vmatprep.subr.mxu0 0.0
    %3783 = vmatpush2.msra.mxu0 0.0
    %3784 = vmatprep.subr.mxu0 0.0
    %3785 = vmatpush2.msra.mxu0 0.0
    %3786 = vmatprep.subr.mxu0 0.0
    %3787 = vmatpush2.msra.mxu0 0.0
    %3788 = vmatprep.subr.mxu0 0.0
    %3789 = vmatpush2.msra.mxu0 0.0
    %3790 = vmatprep.subr.mxu0 0.0
    %3791 = vmatpush2.msra.mxu0 0.0
    %3792 = vmatprep.subr.mxu0 0.0
    %3793 = vmatpush2.msra.mxu0 0.0
    %3794 = vmatprep.subr.mxu0 0.0
    %3795 = vmatpush2.msra.mxu0 0.0
    %3796 = vmatprep.subr.mxu0 0.0
    %3797 = vmatpush2.msra.mxu0 0.0
    %3798 = vmatprep.subr.mxu0 0.0
    %3799 = vmatpush2.msra.mxu0 0.0
    %3800 = vmatprep.subr.mxu0 0.0
    %3801 = vmatpush2.msra.mxu0 0.0
    %3802 = vmatprep.subr.mxu0 0.0
    %3803 = vmatpush2.msra.mxu0 0.0
    %3804 = vmatprep.subr.mxu0 0.0
    %3805 = vmatpush2.msra.mxu0 0.0
    %3806 = vmatprep.mubr.f32.mxu0 0.0
    %v3807 = vand.u32 %v3653, 4294901760
    %3808 = vmatmul.mubr.f32.gmra.mxu0 %v3807
    %v3809 = vpop.f32.mrf.mxu0
    %v3810 = vadd.f32 %v3729, %v3809
    %v3811 = vpop.f32.mrf.mxu0
    %3812 = vdwg.mxu0
    %3813 = vmatprep.subr.mxu0 0.0
    %3814 = vmatpush1.msra.mxu0 0.0
    %3815 = vmatprep.subr.mxu0 0.0
    %3816 = vmatpush1.msra.mxu0 0.0
    %3817 = vmatprep.subr.mxu0 0.0
    %3818 = vmatpush1.msra.mxu0 0.0
    %3819 = vmatprep.subr.mxu0 0.0
    %3820 = vmatpush1.msra.mxu0 0.0
    %3821 = vmatprep.subr.mxu0 0.0
    %3822 = vmatpush1.msra.mxu0 0.0
    %3823 = vmatprep.subr.mxu0 0.0
    %3824 = vmatpush1.msra.mxu0 0.0
    %3825 = vmatprep.subr.mxu0 0.0
    %3826 = vmatpush1.msra.mxu0 0.0
    %3827 = vmatprep.subr.mxu0 0.0
    %3828 = vmatpush1.msra.mxu0 0.0
    %3829 = vmatprep.subr.mxu0 0.0
    %3830 = vmatpush1.msra.mxu0 0.0
    %3831 = vmatprep.subr.mxu0 0.0
    %3832 = vmatpush1.msra.mxu0 0.0
    %3833 = vmatprep.subr.mxu0 0.0
    %3834 = vmatpush1.msra.mxu0 0.0
    %3835 = vmatprep.subr.mxu0 0.0
    %3836 = vmatpush1.msra.mxu0 0.0
    %3837 = vmatprep.subr.mxu0 0.0
    %3838 = vmatpush1.msra.mxu0 0.0
    %3839 = vmatprep.subr.mxu0 0.0
    %3840 = vmatpush1.msra.mxu0 0.0
    %3841 = vmatprep.subr.mxu0 0.0
    %v3842 = vand.u32 %v2717, 4294901760
    %v3843 = vsub.f32 %v2717, %v3842
    %3844 = vmatpush1.msra.mxu0 %v3843
    %3845 = vmatprep.subr.mxu0 0.0
    %v3846 = vand.u32 %v2716, 4294901760
    %v3847 = vsub.f32 %v2716, %v3846
    %3848 = vmatpush1.msra.mxu0 %v3847
    %3849 = vmatprep.subr.mxu0 0.0
    %3850 = vmatpush2.msra.mxu0 0.0
    %3851 = vmatprep.subr.mxu0 0.0
    %3852 = vmatpush2.msra.mxu0 0.0
    %3853 = vmatprep.subr.mxu0 0.0
    %3854 = vmatpush2.msra.mxu0 0.0
    %3855 = vmatprep.subr.mxu0 0.0
    %3856 = vmatpush2.msra.mxu0 0.0
    %3857 = vmatprep.subr.mxu0 0.0
    %3858 = vmatpush2.msra.mxu0 0.0
    %3859 = vmatprep.subr.mxu0 0.0
    %3860 = vmatpush2.msra.mxu0 0.0
    %3861 = vmatprep.subr.mxu0 0.0
    %3862 = vmatpush2.msra.mxu0 0.0
    %3863 = vmatprep.subr.mxu0 0.0
    %3864 = vmatpush2.msra.mxu0 0.0
    %3865 = vmatprep.subr.mxu0 0.0
    %3866 = vmatpush2.msra.mxu0 0.0
    %3867 = vmatprep.subr.mxu0 0.0
    %3868 = vmatpush2.msra.mxu0 0.0
    %3869 = vmatprep.subr.mxu0 0.0
    %3870 = vmatpush2.msra.mxu0 0.0
    %3871 = vmatprep.subr.mxu0 0.0
    %3872 = vmatpush2.msra.mxu0 0.0
    %3873 = vmatprep.subr.mxu0 0.0
    %3874 = vmatpush2.msra.mxu0 0.0
    %3875 = vmatprep.subr.mxu0 0.0
    %3876 = vmatpush2.msra.mxu0 0.0
    %3877 = vmatprep.subr.mxu0 0.0
    %3878 = vmatpush2.msra.mxu0 0.0
    %3879 = vmatprep.subr.mxu0 0.0
    %3880 = vmatpush2.msra.mxu0 0.0
    %3881 = vmatprep.mubr.f32.mxu0 0.0
    %v3882 = vand.u32 %v3653, 4294901760
    %v3883 = vsub.f32 %v3653, %v3882
    %3884 = vmatmul.mubr.f32.gmra.mxu0 %v3883
    %v3885 = vpop.f32.mrf.mxu0
    %v3886 = vadd.f32 %v3810, %v3885
    %v3887 = vpop.f32.mrf.mxu0
    %3888 = vdwg.mxu0
    %3889 = vmatprep.subr.mxu0 0.0
    %3890 = vmatpush1.msra.mxu0 0.0
    %3891 = vmatprep.subr.mxu0 0.0
    %3892 = vmatpush1.msra.mxu0 0.0
    %3893 = vmatprep.subr.mxu0 0.0
    %3894 = vmatpush1.msra.mxu0 0.0
    %3895 = vmatprep.subr.mxu0 0.0
    %3896 = vmatpush1.msra.mxu0 0.0
    %3897 = vmatprep.subr.mxu0 0.0
    %3898 = vmatpush1.msra.mxu0 0.0
    %3899 = vmatprep.subr.mxu0 0.0
    %3900 = vmatpush1.msra.mxu0 0.0
    %3901 = vmatprep.subr.mxu0 0.0
    %3902 = vmatpush1.msra.mxu0 0.0
    %3903 = vmatprep.subr.mxu0 0.0
    %3904 = vmatpush1.msra.mxu0 0.0
    %3905 = vmatprep.subr.mxu0 0.0
    %3906 = vmatpush1.msra.mxu0 0.0
    %3907 = vmatprep.subr.mxu0 0.0
    %3908 = vmatpush1.msra.mxu0 0.0
    %3909 = vmatprep.subr.mxu0 0.0
    %3910 = vmatpush1.msra.mxu0 0.0
    %3911 = vmatprep.subr.mxu0 0.0
    %3912 = vmatpush1.msra.mxu0 0.0
    %3913 = vmatprep.subr.mxu0 0.0
    %3914 = vmatpush1.msra.mxu0 0.0
    %3915 = vmatprep.subr.mxu0 0.0
    %3916 = vmatpush1.msra.mxu0 0.0
    %3917 = vmatprep.subr.mxu0 0.0
    %v3918 = vand.u32 %v2717, 4294901760
    %3919 = vmatpush1.msra.mxu0 %v3918
    %3920 = vmatprep.subr.mxu0 0.0
    %v3921 = vand.u32 %v2716, 4294901760
    %3922 = vmatpush1.msra.mxu0 %v3921
    %3923 = vmatprep.subr.mxu0 0.0
    %3924 = vmatpush2.msra.mxu0 0.0
    %3925 = vmatprep.subr.mxu0 0.0
    %3926 = vmatpush2.msra.mxu0 0.0
    %3927 = vmatprep.subr.mxu0 0.0
    %3928 = vmatpush2.msra.mxu0 0.0
    %3929 = vmatprep.subr.mxu0 0.0
    %3930 = vmatpush2.msra.mxu0 0.0
    %3931 = vmatprep.subr.mxu0 0.0
    %3932 = vmatpush2.msra.mxu0 0.0
    %3933 = vmatprep.subr.mxu0 0.0
    %3934 = vmatpush2.msra.mxu0 0.0
    %3935 = vmatprep.subr.mxu0 0.0
    %3936 = vmatpush2.msra.mxu0 0.0
    %3937 = vmatprep.subr.mxu0 0.0
    %3938 = vmatpush2.msra.mxu0 0.0
    %3939 = vmatprep.subr.mxu0 0.0
    %3940 = vmatpush2.msra.mxu0 0.0
    %3941 = vmatprep.subr.mxu0 0.0
    %3942 = vmatpush2.msra.mxu0 0.0
    %3943 = vmatprep.subr.mxu0 0.0
    %3944 = vmatpush2.msra.mxu0 0.0
    %3945 = vmatprep.subr.mxu0 0.0
    %3946 = vmatpush2.msra.mxu0 0.0
    %3947 = vmatprep.subr.mxu0 0.0
    %3948 = vmatpush2.msra.mxu0 0.0
    %3949 = vmatprep.subr.mxu0 0.0
    %3950 = vmatpush2.msra.mxu0 0.0
    %3951 = vmatprep.subr.mxu0 0.0
    %3952 = vmatpush2.msra.mxu0 0.0
    %3953 = vmatprep.subr.mxu0 0.0
    %3954 = vmatpush2.msra.mxu0 0.0
    %3955 = vmatprep.mubr.f32.mxu0 0.0
    %v3956 = vand.u32 %v3653, 4294901760
    %v3957 = vsub.f32 %v3653, %v3956
    %v3958 = vand.u32 %v3957, 4294901760
    %3959 = vmatmul.mubr.f32.gmra.mxu0 %v3958
    %v3960 = vpop.f32.mrf.mxu0
    %v3961 = vadd.f32 %v3886, %v3960
    %v3962 = vpop.f32.mrf.mxu0
    %3963 = vdwg.mxu0
    %3964 = vmatprep.subr.mxu0 0.0
    %3965 = vmatpush1.msra.mxu0 0.0
    %3966 = vmatprep.subr.mxu0 0.0
    %3967 = vmatpush1.msra.mxu0 0.0
    %3968 = vmatprep.subr.mxu0 0.0
    %3969 = vmatpush1.msra.mxu0 0.0
    %3970 = vmatprep.subr.mxu0 0.0
    %3971 = vmatpush1.msra.mxu0 0.0
    %3972 = vmatprep.subr.mxu0 0.0
    %3973 = vmatpush1.msra.mxu0 0.0
    %3974 = vmatprep.subr.mxu0 0.0
    %3975 = vmatpush1.msra.mxu0 0.0
    %3976 = vmatprep.subr.mxu0 0.0
    %3977 = vmatpush1.msra.mxu0 0.0
    %3978 = vmatprep.subr.mxu0 0.0
    %3979 = vmatpush1.msra.mxu0 0.0
    %3980 = vmatprep.subr.mxu0 0.0
    %3981 = vmatpush1.msra.mxu0 0.0
    %3982 = vmatprep.subr.mxu0 0.0
    %3983 = vmatpush1.msra.mxu0 0.0
    %3984 = vmatprep.subr.mxu0 0.0
    %3985 = vmatpush1.msra.mxu0 0.0
    %3986 = vmatprep.subr.mxu0 0.0
    %3987 = vmatpush1.msra.mxu0 0.0
    %3988 = vmatprep.subr.mxu0 0.0
    %3989 = vmatpush1.msra.mxu0 0.0
    %3990 = vmatprep.subr.mxu0 0.0
    %3991 = vmatpush1.msra.mxu0 0.0
    %3992 = vmatprep.subr.mxu0 0.0
    %v3993 = vand.u32 %v2717, 4294901760
    %v3994 = vsub.f32 %v2717, %v3993
    %v3995 = vand.u32 %v3994, 4294901760
    %3996 = vmatpush1.msra.mxu0 %v3995
    %3997 = vmatprep.subr.mxu0 0.0
    %v3998 = vand.u32 %v2716, 4294901760
    %v3999 = vsub.f32 %v2716, %v3998
    %v4000 = vand.u32 %v3999, 4294901760
    %4001 = vmatpush1.msra.mxu0 %v4000
    %4002 = vmatprep.subr.mxu0 0.0
    %4003 = vmatpush2.msra.mxu0 0.0
    %4004 = vmatprep.subr.mxu0 0.0
    %4005 = vmatpush2.msra.mxu0 0.0
    %4006 = vmatprep.subr.mxu0 0.0
    %4007 = vmatpush2.msra.mxu0 0.0
    %4008 = vmatprep.subr.mxu0 0.0
    %4009 = vmatpush2.msra.mxu0 0.0
    %4010 = vmatprep.subr.mxu0 0.0
    %4011 = vmatpush2.msra.mxu0 0.0
    %4012 = vmatprep.subr.mxu0 0.0
    %4013 = vmatpush2.msra.mxu0 0.0
    %4014 = vmatprep.subr.mxu0 0.0
    %4015 = vmatpush2.msra.mxu0 0.0
    %4016 = vmatprep.subr.mxu0 0.0
    %4017 = vmatpush2.msra.mxu0 0.0
    %4018 = vmatprep.subr.mxu0 0.0
    %4019 = vmatpush2.msra.mxu0 0.0
    %4020 = vmatprep.subr.mxu0 0.0
    %4021 = vmatpush2.msra.mxu0 0.0
    %4022 = vmatprep.subr.mxu0 0.0
    %4023 = vmatpush2.msra.mxu0 0.0
    %4024 = vmatprep.subr.mxu0 0.0
    %4025 = vmatpush2.msra.mxu0 0.0
    %4026 = vmatprep.subr.mxu0 0.0
    %4027 = vmatpush2.msra.mxu0 0.0
    %4028 = vmatprep.subr.mxu0 0.0
    %4029 = vmatpush2.msra.mxu0 0.0
    %4030 = vmatprep.subr.mxu0 0.0
    %4031 = vmatpush2.msra.mxu0 0.0
    %4032 = vmatprep.subr.mxu0 0.0
    %4033 = vmatpush2.msra.mxu0 0.0
    %4034 = vmatprep.mubr.f32.mxu0 0.0
    %v4035 = vand.u32 %v3653, 4294901760
    %4036 = vmatmul.mubr.f32.gmra.mxu0 %v4035
    %v4037 = vpop.f32.mrf.mxu0
    %v4038 = vadd.f32 %v3961, %v4037
    %v4039 = vpop.f32.mrf.mxu0
    %4040 = vdwg.mxu0
    %4041 = vmatprep.subr.mxu0 0.0
    %4042 = vmatpush1.msra.mxu0 0.0
    %4043 = vmatprep.subr.mxu0 0.0
    %4044 = vmatpush1.msra.mxu0 0.0
    %4045 = vmatprep.subr.mxu0 0.0
    %4046 = vmatpush1.msra.mxu0 0.0
    %4047 = vmatprep.subr.mxu0 0.0
    %4048 = vmatpush1.msra.mxu0 0.0
    %4049 = vmatprep.subr.mxu0 0.0
    %4050 = vmatpush1.msra.mxu0 0.0
    %4051 = vmatprep.subr.mxu0 0.0
    %4052 = vmatpush1.msra.mxu0 0.0
    %4053 = vmatprep.subr.mxu0 0.0
    %4054 = vmatpush1.msra.mxu0 0.0
    %4055 = vmatprep.subr.mxu0 0.0
    %4056 = vmatpush1.msra.mxu0 0.0
    %4057 = vmatprep.subr.mxu0 0.0
    %4058 = vmatpush1.msra.mxu0 0.0
    %4059 = vmatprep.subr.mxu0 0.0
    %4060 = vmatpush1.msra.mxu0 0.0
    %4061 = vmatprep.subr.mxu0 0.0
    %4062 = vmatpush1.msra.mxu0 0.0
    %4063 = vmatprep.subr.mxu0 0.0
    %4064 = vmatpush1.msra.mxu0 0.0
    %4065 = vmatprep.subr.mxu0 0.0
    %4066 = vmatpush1.msra.mxu0 0.0
    %4067 = vmatprep.subr.mxu0 0.0
    %4068 = vmatpush1.msra.mxu0 0.0
    %4069 = vmatprep.subr.mxu0 0.0
    %v4070 = vand.u32 %v2717, 4294901760
    %4071 = vmatpush1.msra.mxu0 %v4070
    %4072 = vmatprep.subr.mxu0 0.0
    %v4073 = vand.u32 %v2716, 4294901760
    %4074 = vmatpush1.msra.mxu0 %v4073
    %4075 = vmatprep.subr.mxu0 0.0
    %4076 = vmatpush2.msra.mxu0 0.0
    %4077 = vmatprep.subr.mxu0 0.0
    %4078 = vmatpush2.msra.mxu0 0.0
    %4079 = vmatprep.subr.mxu0 0.0
    %4080 = vmatpush2.msra.mxu0 0.0
    %4081 = vmatprep.subr.mxu0 0.0
    %4082 = vmatpush2.msra.mxu0 0.0
    %4083 = vmatprep.subr.mxu0 0.0
    %4084 = vmatpush2.msra.mxu0 0.0
    %4085 = vmatprep.subr.mxu0 0.0
    %4086 = vmatpush2.msra.mxu0 0.0
    %4087 = vmatprep.subr.mxu0 0.0
    %4088 = vmatpush2.msra.mxu0 0.0
    %4089 = vmatprep.subr.mxu0 0.0
    %4090 = vmatpush2.msra.mxu0 0.0
    %4091 = vmatprep.subr.mxu0 0.0
    %4092 = vmatpush2.msra.mxu0 0.0
    %4093 = vmatprep.subr.mxu0 0.0
    %4094 = vmatpush2.msra.mxu0 0.0
    %4095 = vmatprep.subr.mxu0 0.0
    %4096 = vmatpush2.msra.mxu0 0.0
    %4097 = vmatprep.subr.mxu0 0.0
    %4098 = vmatpush2.msra.mxu0 0.0
    %4099 = vmatprep.subr.mxu0 0.0
    %4100 = vmatpush2.msra.mxu0 0.0
    %4101 = vmatprep.subr.mxu0 0.0
    %4102 = vmatpush2.msra.mxu0 0.0
    %4103 = vmatprep.subr.mxu0 0.0
    %4104 = vmatpush2.msra.mxu0 0.0
    %4105 = vmatprep.subr.mxu0 0.0
    %4106 = vmatpush2.msra.mxu0 0.0
    %4107 = vmatprep.mubr.f32.mxu0 0.0
    %v4108 = vand.u32 %v3653, 4294901760
    %4109 = vmatmul.mubr.f32.gmra.mxu0 %v4108
    %v4110 = vpop.f32.mrf.mxu0
    %v4111 = vadd.f32 %v4038, %v4110
    %v4112 = vpop.f32.mrf.mxu0
    %4113 = vdwg.mxu0
    %v4115 = vsel %vm83, %v76, 0
    %4117 = vmatprep.subr.mxu0 0.0
    %4118 = vmatpush1.msra.mxu0 0.0
    %4119 = vmatprep.subr.mxu0 0.0
    %4120 = vmatpush1.msra.mxu0 0.0
    %4121 = vmatprep.subr.mxu0 0.0
    %4122 = vmatpush1.msra.mxu0 0.0
    %4123 = vmatprep.subr.mxu0 0.0
    %4124 = vmatpush1.msra.mxu0 0.0
    %4125 = vmatprep.subr.mxu0 0.0
    %4126 = vmatpush1.msra.mxu0 0.0
    %4127 = vmatprep.subr.mxu0 0.0
    %4128 = vmatpush1.msra.mxu0 0.0
    %4129 = vmatprep.subr.mxu0 0.0
    %4130 = vmatpush1.msra.mxu0 0.0
    %4131 = vmatprep.subr.mxu0 0.0
    %4132 = vmatpush1.msra.mxu0 0.0
    %4133 = vmatprep.subr.mxu0 0.0
    %4134 = vmatpush1.msra.mxu0 0.0
    %4135 = vmatprep.subr.mxu0 0.0
    %4136 = vmatpush1.msra.mxu0 0.0
    %4137 = vmatprep.subr.mxu0 0.0
    %4138 = vmatpush1.msra.mxu0 0.0
    %4139 = vmatprep.subr.mxu0 0.0
    %4140 = vmatpush1.msra.mxu0 0.0
    %4141 = vmatprep.subr.mxu0 0.0
    %4142 = vmatpush1.msra.mxu0 0.0
    %4143 = vmatprep.subr.mxu0 0.0
    %4144 = vmatpush1.msra.mxu0 0.0
    %4145 = vmatprep.subr.mxu0 0.0
    %v4146 = vand.u32 %v2719, 4294901760
    %4147 = vmatpush1.msra.mxu0 %v4146
    %4148 = vmatprep.subr.mxu0 0.0
    %v4149 = vand.u32 %v2718, 4294901760
    %4150 = vmatpush1.msra.mxu0 %v4149
    %4151 = vmatprep.subr.mxu0 0.0
    %4152 = vmatpush2.msra.mxu0 0.0
    %4153 = vmatprep.subr.mxu0 0.0
    %4154 = vmatpush2.msra.mxu0 0.0
    %4155 = vmatprep.subr.mxu0 0.0
    %4156 = vmatpush2.msra.mxu0 0.0
    %4157 = vmatprep.subr.mxu0 0.0
    %4158 = vmatpush2.msra.mxu0 0.0
    %4159 = vmatprep.subr.mxu0 0.0
    %4160 = vmatpush2.msra.mxu0 0.0
    %4161 = vmatprep.subr.mxu0 0.0
    %4162 = vmatpush2.msra.mxu0 0.0
    %4163 = vmatprep.subr.mxu0 0.0
    %4164 = vmatpush2.msra.mxu0 0.0
    %4165 = vmatprep.subr.mxu0 0.0
    %4166 = vmatpush2.msra.mxu0 0.0
    %4167 = vmatprep.subr.mxu0 0.0
    %4168 = vmatpush2.msra.mxu0 0.0
    %4169 = vmatprep.subr.mxu0 0.0
    %4170 = vmatpush2.msra.mxu0 0.0
    %4171 = vmatprep.subr.mxu0 0.0
    %4172 = vmatpush2.msra.mxu0 0.0
    %4173 = vmatprep.subr.mxu0 0.0
    %4174 = vmatpush2.msra.mxu0 0.0
    %4175 = vmatprep.subr.mxu0 0.0
    %4176 = vmatpush2.msra.mxu0 0.0
    %4177 = vmatprep.subr.mxu0 0.0
    %4178 = vmatpush2.msra.mxu0 0.0
    %4179 = vmatprep.subr.mxu0 0.0
    %4180 = vmatpush2.msra.mxu0 0.0
    %4181 = vmatprep.subr.mxu0 0.0
    %4182 = vmatpush2.msra.mxu0 0.0
    %4183 = vmatprep.mubr.f32.mxu0 0.0
    %v4184 = vand.u32 %v4115, 4294901760
    %v4185 = vsub.f32 %v4115, %v4184
    %v4186 = vand.u32 %v4185, 4294901760
    %v4187 = vsub.f32 %v4185, %v4186
    %v4188 = vand.u32 %v4187, 4294901760
    %4189 = vmatmul.mubr.f32.gmra.mxu0 %v4188
    %v4190 = vpop.f32.mrf.mxu0
    %v4191 = vadd.f32 0.0, %v4190
    %v4192 = vpop.f32.mrf.mxu0
    %4193 = vdwg.mxu0
    %4194 = vmatprep.subr.mxu0 0.0
    %4195 = vmatpush1.msra.mxu0 0.0
    %4196 = vmatprep.subr.mxu0 0.0
    %4197 = vmatpush1.msra.mxu0 0.0
    %4198 = vmatprep.subr.mxu0 0.0
    %4199 = vmatpush1.msra.mxu0 0.0
    %4200 = vmatprep.subr.mxu0 0.0
    %4201 = vmatpush1.msra.mxu0 0.0
    %4202 = vmatprep.subr.mxu0 0.0
    %4203 = vmatpush1.msra.mxu0 0.0
    %4204 = vmatprep.subr.mxu0 0.0
    %4205 = vmatpush1.msra.mxu0 0.0
    %4206 = vmatprep.subr.mxu0 0.0
    %4207 = vmatpush1.msra.mxu0 0.0
    %4208 = vmatprep.subr.mxu0 0.0
    %4209 = vmatpush1.msra.mxu0 0.0
    %4210 = vmatprep.subr.mxu0 0.0
    %4211 = vmatpush1.msra.mxu0 0.0
    %4212 = vmatprep.subr.mxu0 0.0
    %4213 = vmatpush1.msra.mxu0 0.0
    %4214 = vmatprep.subr.mxu0 0.0
    %4215 = vmatpush1.msra.mxu0 0.0
    %4216 = vmatprep.subr.mxu0 0.0
    %4217 = vmatpush1.msra.mxu0 0.0
    %4218 = vmatprep.subr.mxu0 0.0
    %4219 = vmatpush1.msra.mxu0 0.0
    %4220 = vmatprep.subr.mxu0 0.0
    %4221 = vmatpush1.msra.mxu0 0.0
    %4222 = vmatprep.subr.mxu0 0.0
    %v4223 = vand.u32 %v2719, 4294901760
    %v4224 = vsub.f32 %v2719, %v4223
    %v4225 = vand.u32 %v4224, 4294901760
    %v4226 = vsub.f32 %v4224, %v4225
    %v4227 = vand.u32 %v4226, 4294901760
    %4228 = vmatpush1.msra.mxu0 %v4227
    %4229 = vmatprep.subr.mxu0 0.0
    %v4230 = vand.u32 %v2718, 4294901760
    %v4231 = vsub.f32 %v2718, %v4230
    %v4232 = vand.u32 %v4231, 4294901760
    %v4233 = vsub.f32 %v4231, %v4232
    %v4234 = vand.u32 %v4233, 4294901760
    %4235 = vmatpush1.msra.mxu0 %v4234
    %4236 = vmatprep.subr.mxu0 0.0
    %4237 = vmatpush2.msra.mxu0 0.0
    %4238 = vmatprep.subr.mxu0 0.0
    %4239 = vmatpush2.msra.mxu0 0.0
    %4240 = vmatprep.subr.mxu0 0.0
    %4241 = vmatpush2.msra.mxu0 0.0
    %4242 = vmatprep.subr.mxu0 0.0
    %4243 = vmatpush2.msra.mxu0 0.0
    %4244 = vmatprep.subr.mxu0 0.0
    %4245 = vmatpush2.msra.mxu0 0.0
    %4246 = vmatprep.subr.mxu0 0.0
    %4247 = vmatpush2.msra.mxu0 0.0
    %4248 = vmatprep.subr.mxu0 0.0
    %4249 = vmatpush2.msra.mxu0 0.0
    %4250 = vmatprep.subr.mxu0 0.0
    %4251 = vmatpush2.msra.mxu0 0.0
    %4252 = vmatprep.subr.mxu0 0.0
    %4253 = vmatpush2.msra.mxu0 0.0
    %4254 = vmatprep.subr.mxu0 0.0
    %4255 = vmatpush2.msra.mxu0 0.0
    %4256 = vmatprep.subr.mxu0 0.0
    %4257 = vmatpush2.msra.mxu0 0.0
    %4258 = vmatprep.subr.mxu0 0.0
    %4259 = vmatpush2.msra.mxu0 0.0
    %4260 = vmatprep.subr.mxu0 0.0
    %4261 = vmatpush2.msra.mxu0 0.0
    %4262 = vmatprep.subr.mxu0 0.0
    %4263 = vmatpush2.msra.mxu0 0.0
    %4264 = vmatprep.subr.mxu0 0.0
    %4265 = vmatpush2.msra.mxu0 0.0
    %4266 = vmatprep.subr.mxu0 0.0
    %4267 = vmatpush2.msra.mxu0 0.0
    %4268 = vmatprep.mubr.f32.mxu0 0.0
    %v4269 = vand.u32 %v4115, 4294901760
    %4270 = vmatmul.mubr.f32.gmra.mxu0 %v4269
    %v4271 = vpop.f32.mrf.mxu0
    %v4272 = vadd.f32 %v4191, %v4271
    %v4273 = vpop.f32.mrf.mxu0
    %4274 = vdwg.mxu0
    %4275 = vmatprep.subr.mxu0 0.0
    %4276 = vmatpush1.msra.mxu0 0.0
    %4277 = vmatprep.subr.mxu0 0.0
    %4278 = vmatpush1.msra.mxu0 0.0
    %4279 = vmatprep.subr.mxu0 0.0
    %4280 = vmatpush1.msra.mxu0 0.0
    %4281 = vmatprep.subr.mxu0 0.0
    %4282 = vmatpush1.msra.mxu0 0.0
    %4283 = vmatprep.subr.mxu0 0.0
    %4284 = vmatpush1.msra.mxu0 0.0
    %4285 = vmatprep.subr.mxu0 0.0
    %4286 = vmatpush1.msra.mxu0 0.0
    %4287 = vmatprep.subr.mxu0 0.0
    %4288 = vmatpush1.msra.mxu0 0.0
    %4289 = vmatprep.subr.mxu0 0.0
    %4290 = vmatpush1.msra.mxu0 0.0
    %4291 = vmatprep.subr.mxu0 0.0
    %4292 = vmatpush1.msra.mxu0 0.0
    %4293 = vmatprep.subr.mxu0 0.0
    %4294 = vmatpush1.msra.mxu0 0.0
    %4295 = vmatprep.subr.mxu0 0.0
    %4296 = vmatpush1.msra.mxu0 0.0
    %4297 = vmatprep.subr.mxu0 0.0
    %4298 = vmatpush1.msra.mxu0 0.0
    %4299 = vmatprep.subr.mxu0 0.0
    %4300 = vmatpush1.msra.mxu0 0.0
    %4301 = vmatprep.subr.mxu0 0.0
    %4302 = vmatpush1.msra.mxu0 0.0
    %4303 = vmatprep.subr.mxu0 0.0
    %v4304 = vand.u32 %v2719, 4294901760
    %v4305 = vsub.f32 %v2719, %v4304
    %4306 = vmatpush1.msra.mxu0 %v4305
    %4307 = vmatprep.subr.mxu0 0.0
    %v4308 = vand.u32 %v2718, 4294901760
    %v4309 = vsub.f32 %v2718, %v4308
    %4310 = vmatpush1.msra.mxu0 %v4309
    %4311 = vmatprep.subr.mxu0 0.0
    %4312 = vmatpush2.msra.mxu0 0.0
    %4313 = vmatprep.subr.mxu0 0.0
    %4314 = vmatpush2.msra.mxu0 0.0
    %4315 = vmatprep.subr.mxu0 0.0
    %4316 = vmatpush2.msra.mxu0 0.0
    %4317 = vmatprep.subr.mxu0 0.0
    %4318 = vmatpush2.msra.mxu0 0.0
    %4319 = vmatprep.subr.mxu0 0.0
    %4320 = vmatpush2.msra.mxu0 0.0
    %4321 = vmatprep.subr.mxu0 0.0
    %4322 = vmatpush2.msra.mxu0 0.0
    %4323 = vmatprep.subr.mxu0 0.0
    %4324 = vmatpush2.msra.mxu0 0.0
    %4325 = vmatprep.subr.mxu0 0.0
    %4326 = vmatpush2.msra.mxu0 0.0
    %4327 = vmatprep.subr.mxu0 0.0
    %4328 = vmatpush2.msra.mxu0 0.0
    %4329 = vmatprep.subr.mxu0 0.0
    %4330 = vmatpush2.msra.mxu0 0.0
    %4331 = vmatprep.subr.mxu0 0.0
    %4332 = vmatpush2.msra.mxu0 0.0
    %4333 = vmatprep.subr.mxu0 0.0
    %4334 = vmatpush2.msra.mxu0 0.0
    %4335 = vmatprep.subr.mxu0 0.0
    %4336 = vmatpush2.msra.mxu0 0.0
    %4337 = vmatprep.subr.mxu0 0.0
    %4338 = vmatpush2.msra.mxu0 0.0
    %4339 = vmatprep.subr.mxu0 0.0
    %4340 = vmatpush2.msra.mxu0 0.0
    %4341 = vmatprep.subr.mxu0 0.0
    %4342 = vmatpush2.msra.mxu0 0.0
    %4343 = vmatprep.mubr.f32.mxu0 0.0
    %v4344 = vand.u32 %v4115, 4294901760
    %v4345 = vsub.f32 %v4115, %v4344
    %4346 = vmatmul.mubr.f32.gmra.mxu0 %v4345
    %v4347 = vpop.f32.mrf.mxu0
    %v4348 = vadd.f32 %v4272, %v4347
    %v4349 = vpop.f32.mrf.mxu0
    %4350 = vdwg.mxu0
    %4351 = vmatprep.subr.mxu0 0.0
    %4352 = vmatpush1.msra.mxu0 0.0
    %4353 = vmatprep.subr.mxu0 0.0
    %4354 = vmatpush1.msra.mxu0 0.0
    %4355 = vmatprep.subr.mxu0 0.0
    %4356 = vmatpush1.msra.mxu0 0.0
    %4357 = vmatprep.subr.mxu0 0.0
    %4358 = vmatpush1.msra.mxu0 0.0
    %4359 = vmatprep.subr.mxu0 0.0
    %4360 = vmatpush1.msra.mxu0 0.0
    %4361 = vmatprep.subr.mxu0 0.0
    %4362 = vmatpush1.msra.mxu0 0.0
    %4363 = vmatprep.subr.mxu0 0.0
    %4364 = vmatpush1.msra.mxu0 0.0
    %4365 = vmatprep.subr.mxu0 0.0
    %4366 = vmatpush1.msra.mxu0 0.0
    %4367 = vmatprep.subr.mxu0 0.0
    %4368 = vmatpush1.msra.mxu0 0.0
    %4369 = vmatprep.subr.mxu0 0.0
    %4370 = vmatpush1.msra.mxu0 0.0
    %4371 = vmatprep.subr.mxu0 0.0
    %4372 = vmatpush1.msra.mxu0 0.0
    %4373 = vmatprep.subr.mxu0 0.0
    %4374 = vmatpush1.msra.mxu0 0.0
    %4375 = vmatprep.subr.mxu0 0.0
    %4376 = vmatpush1.msra.mxu0 0.0
    %4377 = vmatprep.subr.mxu0 0.0
    %4378 = vmatpush1.msra.mxu0 0.0
    %4379 = vmatprep.subr.mxu0 0.0
    %v4380 = vand.u32 %v2719, 4294901760
    %4381 = vmatpush1.msra.mxu0 %v4380
    %4382 = vmatprep.subr.mxu0 0.0
    %v4383 = vand.u32 %v2718, 4294901760
    %4384 = vmatpush1.msra.mxu0 %v4383
    %4385 = vmatprep.subr.mxu0 0.0
    %4386 = vmatpush2.msra.mxu0 0.0
    %4387 = vmatprep.subr.mxu0 0.0
    %4388 = vmatpush2.msra.mxu0 0.0
    %4389 = vmatprep.subr.mxu0 0.0
    %4390 = vmatpush2.msra.mxu0 0.0
    %4391 = vmatprep.subr.mxu0 0.0
    %4392 = vmatpush2.msra.mxu0 0.0
    %4393 = vmatprep.subr.mxu0 0.0
    %4394 = vmatpush2.msra.mxu0 0.0
    %4395 = vmatprep.subr.mxu0 0.0
    %4396 = vmatpush2.msra.mxu0 0.0
    %4397 = vmatprep.subr.mxu0 0.0
    %4398 = vmatpush2.msra.mxu0 0.0
    %4399 = vmatprep.subr.mxu0 0.0
    %4400 = vmatpush2.msra.mxu0 0.0
    %4401 = vmatprep.subr.mxu0 0.0
    %4402 = vmatpush2.msra.mxu0 0.0
    %4403 = vmatprep.subr.mxu0 0.0
    %4404 = vmatpush2.msra.mxu0 0.0
    %4405 = vmatprep.subr.mxu0 0.0
    %4406 = vmatpush2.msra.mxu0 0.0
    %4407 = vmatprep.subr.mxu0 0.0
    %4408 = vmatpush2.msra.mxu0 0.0
    %4409 = vmatprep.subr.mxu0 0.0
    %4410 = vmatpush2.msra.mxu0 0.0
    %4411 = vmatprep.subr.mxu0 0.0
    %4412 = vmatpush2.msra.mxu0 0.0
    %4413 = vmatprep.subr.mxu0 0.0
    %4414 = vmatpush2.msra.mxu0 0.0
    %4415 = vmatprep.subr.mxu0 0.0
    %4416 = vmatpush2.msra.mxu0 0.0
    %4417 = vmatprep.mubr.f32.mxu0 0.0
    %v4418 = vand.u32 %v4115, 4294901760
    %v4419 = vsub.f32 %v4115, %v4418
    %v4420 = vand.u32 %v4419, 4294901760
    %4421 = vmatmul.mubr.f32.gmra.mxu0 %v4420
    %v4422 = vpop.f32.mrf.mxu0
    %v4423 = vadd.f32 %v4348, %v4422
    %v4424 = vpop.f32.mrf.mxu0
    %4425 = vdwg.mxu0
    %4426 = vmatprep.subr.mxu0 0.0
    %4427 = vmatpush1.msra.mxu0 0.0
    %4428 = vmatprep.subr.mxu0 0.0
    %4429 = vmatpush1.msra.mxu0 0.0
    %4430 = vmatprep.subr.mxu0 0.0
    %4431 = vmatpush1.msra.mxu0 0.0
    %4432 = vmatprep.subr.mxu0 0.0
    %4433 = vmatpush1.msra.mxu0 0.0
    %4434 = vmatprep.subr.mxu0 0.0
    %4435 = vmatpush1.msra.mxu0 0.0
    %4436 = vmatprep.subr.mxu0 0.0
    %4437 = vmatpush1.msra.mxu0 0.0
    %4438 = vmatprep.subr.mxu0 0.0
    %4439 = vmatpush1.msra.mxu0 0.0
    %4440 = vmatprep.subr.mxu0 0.0
    %4441 = vmatpush1.msra.mxu0 0.0
    %4442 = vmatprep.subr.mxu0 0.0
    %4443 = vmatpush1.msra.mxu0 0.0
    %4444 = vmatprep.subr.mxu0 0.0
    %4445 = vmatpush1.msra.mxu0 0.0
    %4446 = vmatprep.subr.mxu0 0.0
    %4447 = vmatpush1.msra.mxu0 0.0
    %4448 = vmatprep.subr.mxu0 0.0
    %4449 = vmatpush1.msra.mxu0 0.0
    %4450 = vmatprep.subr.mxu0 0.0
    %4451 = vmatpush1.msra.mxu0 0.0
    %4452 = vmatprep.subr.mxu0 0.0
    %4453 = vmatpush1.msra.mxu0 0.0
    %4454 = vmatprep.subr.mxu0 0.0
    %v4455 = vand.u32 %v2719, 4294901760
    %v4456 = vsub.f32 %v2719, %v4455
    %v4457 = vand.u32 %v4456, 4294901760
    %4458 = vmatpush1.msra.mxu0 %v4457
    %4459 = vmatprep.subr.mxu0 0.0
    %v4460 = vand.u32 %v2718, 4294901760
    %v4461 = vsub.f32 %v2718, %v4460
    %v4462 = vand.u32 %v4461, 4294901760
    %4463 = vmatpush1.msra.mxu0 %v4462
    %4464 = vmatprep.subr.mxu0 0.0
    %4465 = vmatpush2.msra.mxu0 0.0
    %4466 = vmatprep.subr.mxu0 0.0
    %4467 = vmatpush2.msra.mxu0 0.0
    %4468 = vmatprep.subr.mxu0 0.0
    %4469 = vmatpush2.msra.mxu0 0.0
    %4470 = vmatprep.subr.mxu0 0.0
    %4471 = vmatpush2.msra.mxu0 0.0
    %4472 = vmatprep.subr.mxu0 0.0
    %4473 = vmatpush2.msra.mxu0 0.0
    %4474 = vmatprep.subr.mxu0 0.0
    %4475 = vmatpush2.msra.mxu0 0.0
    %4476 = vmatprep.subr.mxu0 0.0
    %4477 = vmatpush2.msra.mxu0 0.0
    %4478 = vmatprep.subr.mxu0 0.0
    %4479 = vmatpush2.msra.mxu0 0.0
    %4480 = vmatprep.subr.mxu0 0.0
    %4481 = vmatpush2.msra.mxu0 0.0
    %4482 = vmatprep.subr.mxu0 0.0
    %4483 = vmatpush2.msra.mxu0 0.0
    %4484 = vmatprep.subr.mxu0 0.0
    %4485 = vmatpush2.msra.mxu0 0.0
    %4486 = vmatprep.subr.mxu0 0.0
    %4487 = vmatpush2.msra.mxu0 0.0
    %4488 = vmatprep.subr.mxu0 0.0
    %4489 = vmatpush2.msra.mxu0 0.0
    %4490 = vmatprep.subr.mxu0 0.0
    %4491 = vmatpush2.msra.mxu0 0.0
    %4492 = vmatprep.subr.mxu0 0.0
    %4493 = vmatpush2.msra.mxu0 0.0
    %4494 = vmatprep.subr.mxu0 0.0
    %4495 = vmatpush2.msra.mxu0 0.0
    %4496 = vmatprep.mubr.f32.mxu0 0.0
    %v4497 = vand.u32 %v4115, 4294901760
    %4498 = vmatmul.mubr.f32.gmra.mxu0 %v4497
    %v4499 = vpop.f32.mrf.mxu0
    %v4500 = vadd.f32 %v4423, %v4499
    %v4501 = vpop.f32.mrf.mxu0
    %4502 = vdwg.mxu0
    %4503 = vmatprep.subr.mxu0 0.0
    %4504 = vmatpush1.msra.mxu0 0.0
    %4505 = vmatprep.subr.mxu0 0.0
    %4506 = vmatpush1.msra.mxu0 0.0
    %4507 = vmatprep.subr.mxu0 0.0
    %4508 = vmatpush1.msra.mxu0 0.0
    %4509 = vmatprep.subr.mxu0 0.0
    %4510 = vmatpush1.msra.mxu0 0.0
    %4511 = vmatprep.subr.mxu0 0.0
    %4512 = vmatpush1.msra.mxu0 0.0
    %4513 = vmatprep.subr.mxu0 0.0
    %4514 = vmatpush1.msra.mxu0 0.0
    %4515 = vmatprep.subr.mxu0 0.0
    %4516 = vmatpush1.msra.mxu0 0.0
    %4517 = vmatprep.subr.mxu0 0.0
    %4518 = vmatpush1.msra.mxu0 0.0
    %4519 = vmatprep.subr.mxu0 0.0
    %4520 = vmatpush1.msra.mxu0 0.0
    %4521 = vmatprep.subr.mxu0 0.0
    %4522 = vmatpush1.msra.mxu0 0.0
    %4523 = vmatprep.subr.mxu0 0.0
    %4524 = vmatpush1.msra.mxu0 0.0
    %4525 = vmatprep.subr.mxu0 0.0
    %4526 = vmatpush1.msra.mxu0 0.0
    %4527 = vmatprep.subr.mxu0 0.0
    %4528 = vmatpush1.msra.mxu0 0.0
    %4529 = vmatprep.subr.mxu0 0.0
    %4530 = vmatpush1.msra.mxu0 0.0
    %4531 = vmatprep.subr.mxu0 0.0
    %v4532 = vand.u32 %v2719, 4294901760
    %4533 = vmatpush1.msra.mxu0 %v4532
    %4534 = vmatprep.subr.mxu0 0.0
    %v4535 = vand.u32 %v2718, 4294901760
    %4536 = vmatpush1.msra.mxu0 %v4535
    %4537 = vmatprep.subr.mxu0 0.0
    %4538 = vmatpush2.msra.mxu0 0.0
    %4539 = vmatprep.subr.mxu0 0.0
    %4540 = vmatpush2.msra.mxu0 0.0
    %4541 = vmatprep.subr.mxu0 0.0
    %4542 = vmatpush2.msra.mxu0 0.0
    %4543 = vmatprep.subr.mxu0 0.0
    %4544 = vmatpush2.msra.mxu0 0.0
    %4545 = vmatprep.subr.mxu0 0.0
    %4546 = vmatpush2.msra.mxu0 0.0
    %4547 = vmatprep.subr.mxu0 0.0
    %4548 = vmatpush2.msra.mxu0 0.0
    %4549 = vmatprep.subr.mxu0 0.0
    %4550 = vmatpush2.msra.mxu0 0.0
    %4551 = vmatprep.subr.mxu0 0.0
    %4552 = vmatpush2.msra.mxu0 0.0
    %4553 = vmatprep.subr.mxu0 0.0
    %4554 = vmatpush2.msra.mxu0 0.0
    %4555 = vmatprep.subr.mxu0 0.0
    %4556 = vmatpush2.msra.mxu0 0.0
    %4557 = vmatprep.subr.mxu0 0.0
    %4558 = vmatpush2.msra.mxu0 0.0
    %4559 = vmatprep.subr.mxu0 0.0
    %4560 = vmatpush2.msra.mxu0 0.0
    %4561 = vmatprep.subr.mxu0 0.0
    %4562 = vmatpush2.msra.mxu0 0.0
    %4563 = vmatprep.subr.mxu0 0.0
    %4564 = vmatpush2.msra.mxu0 0.0
    %4565 = vmatprep.subr.mxu0 0.0
    %4566 = vmatpush2.msra.mxu0 0.0
    %4567 = vmatprep.subr.mxu0 0.0
    %4568 = vmatpush2.msra.mxu0 0.0
    %4569 = vmatprep.mubr.f32.mxu0 0.0
    %v4570 = vand.u32 %v4115, 4294901760
    %4571 = vmatmul.mubr.f32.gmra.mxu0 %v4570
    %v4572 = vpop.f32.mrf.mxu0
    %v4573 = vadd.f32 %v4500, %v4572
    %v4574 = vpop.f32.mrf.mxu0
    %4575 = vdwg.mxu0
    %v4577 = vsel %vm83, %v77, 0
    %4579 = vmatprep.subr.mxu0 0.0
    %4580 = vmatpush1.msra.mxu0 0.0
    %4581 = vmatprep.subr.mxu0 0.0
    %4582 = vmatpush1.msra.mxu0 0.0
    %4583 = vmatprep.subr.mxu0 0.0
    %4584 = vmatpush1.msra.mxu0 0.0
    %4585 = vmatprep.subr.mxu0 0.0
    %4586 = vmatpush1.msra.mxu0 0.0
    %4587 = vmatprep.subr.mxu0 0.0
    %4588 = vmatpush1.msra.mxu0 0.0
    %4589 = vmatprep.subr.mxu0 0.0
    %4590 = vmatpush1.msra.mxu0 0.0
    %4591 = vmatprep.subr.mxu0 0.0
    %4592 = vmatpush1.msra.mxu0 0.0
    %4593 = vmatprep.subr.mxu0 0.0
    %4594 = vmatpush1.msra.mxu0 0.0
    %4595 = vmatprep.subr.mxu0 0.0
    %4596 = vmatpush1.msra.mxu0 0.0
    %4597 = vmatprep.subr.mxu0 0.0
    %4598 = vmatpush1.msra.mxu0 0.0
    %4599 = vmatprep.subr.mxu0 0.0
    %4600 = vmatpush1.msra.mxu0 0.0
    %4601 = vmatprep.subr.mxu0 0.0
    %4602 = vmatpush1.msra.mxu0 0.0
    %4603 = vmatprep.subr.mxu0 0.0
    %4604 = vmatpush1.msra.mxu0 0.0
    %4605 = vmatprep.subr.mxu0 0.0
    %4606 = vmatpush1.msra.mxu0 0.0
    %4607 = vmatprep.subr.mxu0 0.0
    %v4608 = vand.u32 %v2721, 4294901760
    %4609 = vmatpush1.msra.mxu0 %v4608
    %4610 = vmatprep.subr.mxu0 0.0
    %v4611 = vand.u32 %v2720, 4294901760
    %4612 = vmatpush1.msra.mxu0 %v4611
    %4613 = vmatprep.subr.mxu0 0.0
    %4614 = vmatpush2.msra.mxu0 0.0
    %4615 = vmatprep.subr.mxu0 0.0
    %4616 = vmatpush2.msra.mxu0 0.0
    %4617 = vmatprep.subr.mxu0 0.0
    %4618 = vmatpush2.msra.mxu0 0.0
    %4619 = vmatprep.subr.mxu0 0.0
    %4620 = vmatpush2.msra.mxu0 0.0
    %4621 = vmatprep.subr.mxu0 0.0
    %4622 = vmatpush2.msra.mxu0 0.0
    %4623 = vmatprep.subr.mxu0 0.0
    %4624 = vmatpush2.msra.mxu0 0.0
    %4625 = vmatprep.subr.mxu0 0.0
    %4626 = vmatpush2.msra.mxu0 0.0
    %4627 = vmatprep.subr.mxu0 0.0
    %4628 = vmatpush2.msra.mxu0 0.0
    %4629 = vmatprep.subr.mxu0 0.0
    %4630 = vmatpush2.msra.mxu0 0.0
    %4631 = vmatprep.subr.mxu0 0.0
    %4632 = vmatpush2.msra.mxu0 0.0
    %4633 = vmatprep.subr.mxu0 0.0
    %4634 = vmatpush2.msra.mxu0 0.0
    %4635 = vmatprep.subr.mxu0 0.0
    %4636 = vmatpush2.msra.mxu0 0.0
    %4637 = vmatprep.subr.mxu0 0.0
    %4638 = vmatpush2.msra.mxu0 0.0
    %4639 = vmatprep.subr.mxu0 0.0
    %4640 = vmatpush2.msra.mxu0 0.0
    %4641 = vmatprep.subr.mxu0 0.0
    %4642 = vmatpush2.msra.mxu0 0.0
    %4643 = vmatprep.subr.mxu0 0.0
    %4644 = vmatpush2.msra.mxu0 0.0
    %4645 = vmatprep.mubr.f32.mxu0 0.0
    %v4646 = vand.u32 %v4577, 4294901760
    %v4647 = vsub.f32 %v4577, %v4646
    %v4648 = vand.u32 %v4647, 4294901760
    %v4649 = vsub.f32 %v4647, %v4648
    %v4650 = vand.u32 %v4649, 4294901760
    %4651 = vmatmul.mubr.f32.gmra.mxu0 %v4650
    %v4652 = vpop.f32.mrf.mxu0
    %v4653 = vadd.f32 0.0, %v4652
    %v4654 = vpop.f32.mrf.mxu0
    %4655 = vdwg.mxu0
    %4656 = vmatprep.subr.mxu0 0.0
    %4657 = vmatpush1.msra.mxu0 0.0
    %4658 = vmatprep.subr.mxu0 0.0
    %4659 = vmatpush1.msra.mxu0 0.0
    %4660 = vmatprep.subr.mxu0 0.0
    %4661 = vmatpush1.msra.mxu0 0.0
    %4662 = vmatprep.subr.mxu0 0.0
    %4663 = vmatpush1.msra.mxu0 0.0
    %4664 = vmatprep.subr.mxu0 0.0
    %4665 = vmatpush1.msra.mxu0 0.0
    %4666 = vmatprep.subr.mxu0 0.0
    %4667 = vmatpush1.msra.mxu0 0.0
    %4668 = vmatprep.subr.mxu0 0.0
    %4669 = vmatpush1.msra.mxu0 0.0
    %4670 = vmatprep.subr.mxu0 0.0
    %4671 = vmatpush1.msra.mxu0 0.0
    %4672 = vmatprep.subr.mxu0 0.0
    %4673 = vmatpush1.msra.mxu0 0.0
    %4674 = vmatprep.subr.mxu0 0.0
    %4675 = vmatpush1.msra.mxu0 0.0
    %4676 = vmatprep.subr.mxu0 0.0
    %4677 = vmatpush1.msra.mxu0 0.0
    %4678 = vmatprep.subr.mxu0 0.0
    %4679 = vmatpush1.msra.mxu0 0.0
    %4680 = vmatprep.subr.mxu0 0.0
    %4681 = vmatpush1.msra.mxu0 0.0
    %4682 = vmatprep.subr.mxu0 0.0
    %4683 = vmatpush1.msra.mxu0 0.0
    %4684 = vmatprep.subr.mxu0 0.0
    %v4685 = vand.u32 %v2721, 4294901760
    %v4686 = vsub.f32 %v2721, %v4685
    %v4687 = vand.u32 %v4686, 4294901760
    %v4688 = vsub.f32 %v4686, %v4687
    %v4689 = vand.u32 %v4688, 4294901760
    %4690 = vmatpush1.msra.mxu0 %v4689
    %4691 = vmatprep.subr.mxu0 0.0
    %v4692 = vand.u32 %v2720, 4294901760
    %v4693 = vsub.f32 %v2720, %v4692
    %v4694 = vand.u32 %v4693, 4294901760
    %v4695 = vsub.f32 %v4693, %v4694
    %v4696 = vand.u32 %v4695, 4294901760
    %4697 = vmatpush1.msra.mxu0 %v4696
    %4698 = vmatprep.subr.mxu0 0.0
    %4699 = vmatpush2.msra.mxu0 0.0
    %4700 = vmatprep.subr.mxu0 0.0
    %4701 = vmatpush2.msra.mxu0 0.0
    %4702 = vmatprep.subr.mxu0 0.0
    %4703 = vmatpush2.msra.mxu0 0.0
    %4704 = vmatprep.subr.mxu0 0.0
    %4705 = vmatpush2.msra.mxu0 0.0
    %4706 = vmatprep.subr.mxu0 0.0
    %4707 = vmatpush2.msra.mxu0 0.0
    %4708 = vmatprep.subr.mxu0 0.0
    %4709 = vmatpush2.msra.mxu0 0.0
    %4710 = vmatprep.subr.mxu0 0.0
    %4711 = vmatpush2.msra.mxu0 0.0
    %4712 = vmatprep.subr.mxu0 0.0
    %4713 = vmatpush2.msra.mxu0 0.0
    %4714 = vmatprep.subr.mxu0 0.0
    %4715 = vmatpush2.msra.mxu0 0.0
    %4716 = vmatprep.subr.mxu0 0.0
    %4717 = vmatpush2.msra.mxu0 0.0
    %4718 = vmatprep.subr.mxu0 0.0
    %4719 = vmatpush2.msra.mxu0 0.0
    %4720 = vmatprep.subr.mxu0 0.0
    %4721 = vmatpush2.msra.mxu0 0.0
    %4722 = vmatprep.subr.mxu0 0.0
    %4723 = vmatpush2.msra.mxu0 0.0
    %4724 = vmatprep.subr.mxu0 0.0
    %4725 = vmatpush2.msra.mxu0 0.0
    %4726 = vmatprep.subr.mxu0 0.0
    %4727 = vmatpush2.msra.mxu0 0.0
    %4728 = vmatprep.subr.mxu0 0.0
    %4729 = vmatpush2.msra.mxu0 0.0
    %4730 = vmatprep.mubr.f32.mxu0 0.0
    %v4731 = vand.u32 %v4577, 4294901760
    %4732 = vmatmul.mubr.f32.gmra.mxu0 %v4731
    %v4733 = vpop.f32.mrf.mxu0
    %v4734 = vadd.f32 %v4653, %v4733
    %v4735 = vpop.f32.mrf.mxu0
    %4736 = vdwg.mxu0
    %4737 = vmatprep.subr.mxu0 0.0
    %4738 = vmatpush1.msra.mxu0 0.0
    %4739 = vmatprep.subr.mxu0 0.0
    %4740 = vmatpush1.msra.mxu0 0.0
    %4741 = vmatprep.subr.mxu0 0.0
    %4742 = vmatpush1.msra.mxu0 0.0
    %4743 = vmatprep.subr.mxu0 0.0
    %4744 = vmatpush1.msra.mxu0 0.0
    %4745 = vmatprep.subr.mxu0 0.0
    %4746 = vmatpush1.msra.mxu0 0.0
    %4747 = vmatprep.subr.mxu0 0.0
    %4748 = vmatpush1.msra.mxu0 0.0
    %4749 = vmatprep.subr.mxu0 0.0
    %4750 = vmatpush1.msra.mxu0 0.0
    %4751 = vmatprep.subr.mxu0 0.0
    %4752 = vmatpush1.msra.mxu0 0.0
    %4753 = vmatprep.subr.mxu0 0.0
    %4754 = vmatpush1.msra.mxu0 0.0
    %4755 = vmatprep.subr.mxu0 0.0
    %4756 = vmatpush1.msra.mxu0 0.0
    %4757 = vmatprep.subr.mxu0 0.0
    %4758 = vmatpush1.msra.mxu0 0.0
    %4759 = vmatprep.subr.mxu0 0.0
    %4760 = vmatpush1.msra.mxu0 0.0
    %4761 = vmatprep.subr.mxu0 0.0
    %4762 = vmatpush1.msra.mxu0 0.0
    %4763 = vmatprep.subr.mxu0 0.0
    %4764 = vmatpush1.msra.mxu0 0.0
    %4765 = vmatprep.subr.mxu0 0.0
    %v4766 = vand.u32 %v2721, 4294901760
    %v4767 = vsub.f32 %v2721, %v4766
    %4768 = vmatpush1.msra.mxu0 %v4767
    %4769 = vmatprep.subr.mxu0 0.0
    %v4770 = vand.u32 %v2720, 4294901760
    %v4771 = vsub.f32 %v2720, %v4770
    %4772 = vmatpush1.msra.mxu0 %v4771
    %4773 = vmatprep.subr.mxu0 0.0
    %4774 = vmatpush2.msra.mxu0 0.0
    %4775 = vmatprep.subr.mxu0 0.0
    %4776 = vmatpush2.msra.mxu0 0.0
    %4777 = vmatprep.subr.mxu0 0.0
    %4778 = vmatpush2.msra.mxu0 0.0
    %4779 = vmatprep.subr.mxu0 0.0
    %4780 = vmatpush2.msra.mxu0 0.0
    %4781 = vmatprep.subr.mxu0 0.0
    %4782 = vmatpush2.msra.mxu0 0.0
    %4783 = vmatprep.subr.mxu0 0.0
    %4784 = vmatpush2.msra.mxu0 0.0
    %4785 = vmatprep.subr.mxu0 0.0
    %4786 = vmatpush2.msra.mxu0 0.0
    %4787 = vmatprep.subr.mxu0 0.0
    %4788 = vmatpush2.msra.mxu0 0.0
    %4789 = vmatprep.subr.mxu0 0.0
    %4790 = vmatpush2.msra.mxu0 0.0
    %4791 = vmatprep.subr.mxu0 0.0
    %4792 = vmatpush2.msra.mxu0 0.0
    %4793 = vmatprep.subr.mxu0 0.0
    %4794 = vmatpush2.msra.mxu0 0.0
    %4795 = vmatprep.subr.mxu0 0.0
    %4796 = vmatpush2.msra.mxu0 0.0
    %4797 = vmatprep.subr.mxu0 0.0
    %4798 = vmatpush2.msra.mxu0 0.0
    %4799 = vmatprep.subr.mxu0 0.0
    %4800 = vmatpush2.msra.mxu0 0.0
    %4801 = vmatprep.subr.mxu0 0.0
    %4802 = vmatpush2.msra.mxu0 0.0
    %4803 = vmatprep.subr.mxu0 0.0
    %4804 = vmatpush2.msra.mxu0 0.0
    %4805 = vmatprep.mubr.f32.mxu0 0.0
    %v4806 = vand.u32 %v4577, 4294901760
    %v4807 = vsub.f32 %v4577, %v4806
    %4808 = vmatmul.mubr.f32.gmra.mxu0 %v4807
    %v4809 = vpop.f32.mrf.mxu0
    %v4810 = vadd.f32 %v4734, %v4809
    %v4811 = vpop.f32.mrf.mxu0
    %4812 = vdwg.mxu0
    %4813 = vmatprep.subr.mxu0 0.0
    %4814 = vmatpush1.msra.mxu0 0.0
    %4815 = vmatprep.subr.mxu0 0.0
    %4816 = vmatpush1.msra.mxu0 0.0
    %4817 = vmatprep.subr.mxu0 0.0
    %4818 = vmatpush1.msra.mxu0 0.0
    %4819 = vmatprep.subr.mxu0 0.0
    %4820 = vmatpush1.msra.mxu0 0.0
    %4821 = vmatprep.subr.mxu0 0.0
    %4822 = vmatpush1.msra.mxu0 0.0
    %4823 = vmatprep.subr.mxu0 0.0
    %4824 = vmatpush1.msra.mxu0 0.0
    %4825 = vmatprep.subr.mxu0 0.0
    %4826 = vmatpush1.msra.mxu0 0.0
    %4827 = vmatprep.subr.mxu0 0.0
    %4828 = vmatpush1.msra.mxu0 0.0
    %4829 = vmatprep.subr.mxu0 0.0
    %4830 = vmatpush1.msra.mxu0 0.0
    %4831 = vmatprep.subr.mxu0 0.0
    %4832 = vmatpush1.msra.mxu0 0.0
    %4833 = vmatprep.subr.mxu0 0.0
    %4834 = vmatpush1.msra.mxu0 0.0
    %4835 = vmatprep.subr.mxu0 0.0
    %4836 = vmatpush1.msra.mxu0 0.0
    %4837 = vmatprep.subr.mxu0 0.0
    %4838 = vmatpush1.msra.mxu0 0.0
    %4839 = vmatprep.subr.mxu0 0.0
    %4840 = vmatpush1.msra.mxu0 0.0
    %4841 = vmatprep.subr.mxu0 0.0
    %v4842 = vand.u32 %v2721, 4294901760
    %4843 = vmatpush1.msra.mxu0 %v4842
    %4844 = vmatprep.subr.mxu0 0.0
    %v4845 = vand.u32 %v2720, 4294901760
    %4846 = vmatpush1.msra.mxu0 %v4845
    %4847 = vmatprep.subr.mxu0 0.0
    %4848 = vmatpush2.msra.mxu0 0.0
    %4849 = vmatprep.subr.mxu0 0.0
    %4850 = vmatpush2.msra.mxu0 0.0
    %4851 = vmatprep.subr.mxu0 0.0
    %4852 = vmatpush2.msra.mxu0 0.0
    %4853 = vmatprep.subr.mxu0 0.0
    %4854 = vmatpush2.msra.mxu0 0.0
    %4855 = vmatprep.subr.mxu0 0.0
    %4856 = vmatpush2.msra.mxu0 0.0
    %4857 = vmatprep.subr.mxu0 0.0
    %4858 = vmatpush2.msra.mxu0 0.0
    %4859 = vmatprep.subr.mxu0 0.0
    %4860 = vmatpush2.msra.mxu0 0.0
    %4861 = vmatprep.subr.mxu0 0.0
    %4862 = vmatpush2.msra.mxu0 0.0
    %4863 = vmatprep.subr.mxu0 0.0
    %4864 = vmatpush2.msra.mxu0 0.0
    %4865 = vmatprep.subr.mxu0 0.0
    %4866 = vmatpush2.msra.mxu0 0.0
    %4867 = vmatprep.subr.mxu0 0.0
    %4868 = vmatpush2.msra.mxu0 0.0
    %4869 = vmatprep.subr.mxu0 0.0
    %4870 = vmatpush2.msra.mxu0 0.0
    %4871 = vmatprep.subr.mxu0 0.0
    %4872 = vmatpush2.msra.mxu0 0.0
    %4873 = vmatprep.subr.mxu0 0.0
    %4874 = vmatpush2.msra.mxu0 0.0
    %4875 = vmatprep.subr.mxu0 0.0
    %4876 = vmatpush2.msra.mxu0 0.0
    %4877 = vmatprep.subr.mxu0 0.0
    %4878 = vmatpush2.msra.mxu0 0.0
    %4879 = vmatprep.mubr.f32.mxu0 0.0
    %v4880 = vand.u32 %v4577, 4294901760
    %v4881 = vsub.f32 %v4577, %v4880
    %v4882 = vand.u32 %v4881, 4294901760
    %4883 = vmatmul.mubr.f32.gmra.mxu0 %v4882
    %v4884 = vpop.f32.mrf.mxu0
    %v4885 = vadd.f32 %v4810, %v4884
    %v4886 = vpop.f32.mrf.mxu0
    %4887 = vdwg.mxu0
    %4888 = vmatprep.subr.mxu0 0.0
    %4889 = vmatpush1.msra.mxu0 0.0
    %4890 = vmatprep.subr.mxu0 0.0
    %4891 = vmatpush1.msra.mxu0 0.0
    %4892 = vmatprep.subr.mxu0 0.0
    %4893 = vmatpush1.msra.mxu0 0.0
    %4894 = vmatprep.subr.mxu0 0.0
    %4895 = vmatpush1.msra.mxu0 0.0
    %4896 = vmatprep.subr.mxu0 0.0
    %4897 = vmatpush1.msra.mxu0 0.0
    %4898 = vmatprep.subr.mxu0 0.0
    %4899 = vmatpush1.msra.mxu0 0.0
    %4900 = vmatprep.subr.mxu0 0.0
    %4901 = vmatpush1.msra.mxu0 0.0
    %4902 = vmatprep.subr.mxu0 0.0
    %4903 = vmatpush1.msra.mxu0 0.0
    %4904 = vmatprep.subr.mxu0 0.0
    %4905 = vmatpush1.msra.mxu0 0.0
    %4906 = vmatprep.subr.mxu0 0.0
    %4907 = vmatpush1.msra.mxu0 0.0
    %4908 = vmatprep.subr.mxu0 0.0
    %4909 = vmatpush1.msra.mxu0 0.0
    %4910 = vmatprep.subr.mxu0 0.0
    %4911 = vmatpush1.msra.mxu0 0.0
    %4912 = vmatprep.subr.mxu0 0.0
    %4913 = vmatpush1.msra.mxu0 0.0
    %4914 = vmatprep.subr.mxu0 0.0
    %4915 = vmatpush1.msra.mxu0 0.0
    %4916 = vmatprep.subr.mxu0 0.0
    %v4917 = vand.u32 %v2721, 4294901760
    %v4918 = vsub.f32 %v2721, %v4917
    %v4919 = vand.u32 %v4918, 4294901760
    %4920 = vmatpush1.msra.mxu0 %v4919
    %4921 = vmatprep.subr.mxu0 0.0
    %v4922 = vand.u32 %v2720, 4294901760
    %v4923 = vsub.f32 %v2720, %v4922
    %v4924 = vand.u32 %v4923, 4294901760
    %4925 = vmatpush1.msra.mxu0 %v4924
    %4926 = vmatprep.subr.mxu0 0.0
    %4927 = vmatpush2.msra.mxu0 0.0
    %4928 = vmatprep.subr.mxu0 0.0
    %4929 = vmatpush2.msra.mxu0 0.0
    %4930 = vmatprep.subr.mxu0 0.0
    %4931 = vmatpush2.msra.mxu0 0.0
    %4932 = vmatprep.subr.mxu0 0.0
    %4933 = vmatpush2.msra.mxu0 0.0
    %4934 = vmatprep.subr.mxu0 0.0
    %4935 = vmatpush2.msra.mxu0 0.0
    %4936 = vmatprep.subr.mxu0 0.0
    %4937 = vmatpush2.msra.mxu0 0.0
    %4938 = vmatprep.subr.mxu0 0.0
    %4939 = vmatpush2.msra.mxu0 0.0
    %4940 = vmatprep.subr.mxu0 0.0
    %4941 = vmatpush2.msra.mxu0 0.0
    %4942 = vmatprep.subr.mxu0 0.0
    %4943 = vmatpush2.msra.mxu0 0.0
    %4944 = vmatprep.subr.mxu0 0.0
    %4945 = vmatpush2.msra.mxu0 0.0
    %4946 = vmatprep.subr.mxu0 0.0
    %4947 = vmatpush2.msra.mxu0 0.0
    %4948 = vmatprep.subr.mxu0 0.0
    %4949 = vmatpush2.msra.mxu0 0.0
    %4950 = vmatprep.subr.mxu0 0.0
    %4951 = vmatpush2.msra.mxu0 0.0
    %4952 = vmatprep.subr.mxu0 0.0
    %4953 = vmatpush2.msra.mxu0 0.0
    %4954 = vmatprep.subr.mxu0 0.0
    %4955 = vmatpush2.msra.mxu0 0.0
    %4956 = vmatprep.subr.mxu0 0.0
    %4957 = vmatpush2.msra.mxu0 0.0
    %4958 = vmatprep.mubr.f32.mxu0 0.0
    %v4959 = vand.u32 %v4577, 4294901760
    %4960 = vmatmul.mubr.f32.gmra.mxu0 %v4959
    %v4961 = vpop.f32.mrf.mxu0
    %v4962 = vadd.f32 %v4885, %v4961
    %v4963 = vpop.f32.mrf.mxu0
    %4964 = vdwg.mxu0
    %4965 = vmatprep.subr.mxu0 0.0
    %4966 = vmatpush1.msra.mxu0 0.0
    %4967 = vmatprep.subr.mxu0 0.0
    %4968 = vmatpush1.msra.mxu0 0.0
    %4969 = vmatprep.subr.mxu0 0.0
    %4970 = vmatpush1.msra.mxu0 0.0
    %4971 = vmatprep.subr.mxu0 0.0
    %4972 = vmatpush1.msra.mxu0 0.0
    %4973 = vmatprep.subr.mxu0 0.0
    %4974 = vmatpush1.msra.mxu0 0.0
    %4975 = vmatprep.subr.mxu0 0.0
    %4976 = vmatpush1.msra.mxu0 0.0
    %4977 = vmatprep.subr.mxu0 0.0
    %4978 = vmatpush1.msra.mxu0 0.0
    %4979 = vmatprep.subr.mxu0 0.0
    %4980 = vmatpush1.msra.mxu0 0.0
    %4981 = vmatprep.subr.mxu0 0.0
    %4982 = vmatpush1.msra.mxu0 0.0
    %4983 = vmatprep.subr.mxu0 0.0
    %4984 = vmatpush1.msra.mxu0 0.0
    %4985 = vmatprep.subr.mxu0 0.0
    %4986 = vmatpush1.msra.mxu0 0.0
    %4987 = vmatprep.subr.mxu0 0.0
    %4988 = vmatpush1.msra.mxu0 0.0
    %4989 = vmatprep.subr.mxu0 0.0
    %4990 = vmatpush1.msra.mxu0 0.0
    %4991 = vmatprep.subr.mxu0 0.0
    %4992 = vmatpush1.msra.mxu0 0.0
    %4993 = vmatprep.subr.mxu0 0.0
    %v4994 = vand.u32 %v2721, 4294901760
    %4995 = vmatpush1.msra.mxu0 %v4994
    %4996 = vmatprep.subr.mxu0 0.0
    %v4997 = vand.u32 %v2720, 4294901760
    %4998 = vmatpush1.msra.mxu0 %v4997
    %4999 = vmatprep.subr.mxu0 0.0
    %5000 = vmatpush2.msra.mxu0 0.0
    %5001 = vmatprep.subr.mxu0 0.0
    %5002 = vmatpush2.msra.mxu0 0.0
    %5003 = vmatprep.subr.mxu0 0.0
    %5004 = vmatpush2.msra.mxu0 0.0
    %5005 = vmatprep.subr.mxu0 0.0
    %5006 = vmatpush2.msra.mxu0 0.0
    %5007 = vmatprep.subr.mxu0 0.0
    %5008 = vmatpush2.msra.mxu0 0.0
    %5009 = vmatprep.subr.mxu0 0.0
    %5010 = vmatpush2.msra.mxu0 0.0
    %5011 = vmatprep.subr.mxu0 0.0
    %5012 = vmatpush2.msra.mxu0 0.0
    %5013 = vmatprep.subr.mxu0 0.0
    %5014 = vmatpush2.msra.mxu0 0.0
    %5015 = vmatprep.subr.mxu0 0.0
    %5016 = vmatpush2.msra.mxu0 0.0
    %5017 = vmatprep.subr.mxu0 0.0
    %5018 = vmatpush2.msra.mxu0 0.0
    %5019 = vmatprep.subr.mxu0 0.0
    %5020 = vmatpush2.msra.mxu0 0.0
    %5021 = vmatprep.subr.mxu0 0.0
    %5022 = vmatpush2.msra.mxu0 0.0
    %5023 = vmatprep.subr.mxu0 0.0
    %5024 = vmatpush2.msra.mxu0 0.0
    %5025 = vmatprep.subr.mxu0 0.0
    %5026 = vmatpush2.msra.mxu0 0.0
    %5027 = vmatprep.subr.mxu0 0.0
    %5028 = vmatpush2.msra.mxu0 0.0
    %5029 = vmatprep.subr.mxu0 0.0
    %5030 = vmatpush2.msra.mxu0 0.0
    %5031 = vmatprep.mubr.f32.mxu0 0.0
    %v5032 = vand.u32 %v4577, 4294901760
    %5033 = vmatmul.mubr.f32.gmra.mxu0 %v5032
    %v5034 = vpop.f32.mrf.mxu0
    %v5035 = vadd.f32 %v4962, %v5034
    %v5036 = vpop.f32.mrf.mxu0
    %5037 = vdwg.mxu0
    %v5039 = vsel %vm83, %v78, 0
    %5041 = vmatprep.subr.mxu0 0.0
    %5042 = vmatpush1.msra.mxu0 0.0
    %5043 = vmatprep.subr.mxu0 0.0
    %5044 = vmatpush1.msra.mxu0 0.0
    %5045 = vmatprep.subr.mxu0 0.0
    %5046 = vmatpush1.msra.mxu0 0.0
    %5047 = vmatprep.subr.mxu0 0.0
    %5048 = vmatpush1.msra.mxu0 0.0
    %5049 = vmatprep.subr.mxu0 0.0
    %5050 = vmatpush1.msra.mxu0 0.0
    %5051 = vmatprep.subr.mxu0 0.0
    %5052 = vmatpush1.msra.mxu0 0.0
    %5053 = vmatprep.subr.mxu0 0.0
    %5054 = vmatpush1.msra.mxu0 0.0
    %5055 = vmatprep.subr.mxu0 0.0
    %5056 = vmatpush1.msra.mxu0 0.0
    %5057 = vmatprep.subr.mxu0 0.0
    %5058 = vmatpush1.msra.mxu0 0.0
    %5059 = vmatprep.subr.mxu0 0.0
    %5060 = vmatpush1.msra.mxu0 0.0
    %5061 = vmatprep.subr.mxu0 0.0
    %5062 = vmatpush1.msra.mxu0 0.0
    %5063 = vmatprep.subr.mxu0 0.0
    %5064 = vmatpush1.msra.mxu0 0.0
    %5065 = vmatprep.subr.mxu0 0.0
    %5066 = vmatpush1.msra.mxu0 0.0
    %5067 = vmatprep.subr.mxu0 0.0
    %5068 = vmatpush1.msra.mxu0 0.0
    %5069 = vmatprep.subr.mxu0 0.0
    %v5070 = vand.u32 %v2723, 4294901760
    %5071 = vmatpush1.msra.mxu0 %v5070
    %5072 = vmatprep.subr.mxu0 0.0
    %v5073 = vand.u32 %v2722, 4294901760
    %5074 = vmatpush1.msra.mxu0 %v5073
    %5075 = vmatprep.subr.mxu0 0.0
    %5076 = vmatpush2.msra.mxu0 0.0
    %5077 = vmatprep.subr.mxu0 0.0
    %5078 = vmatpush2.msra.mxu0 0.0
    %5079 = vmatprep.subr.mxu0 0.0
    %5080 = vmatpush2.msra.mxu0 0.0
    %5081 = vmatprep.subr.mxu0 0.0
    %5082 = vmatpush2.msra.mxu0 0.0
    %5083 = vmatprep.subr.mxu0 0.0
    %5084 = vmatpush2.msra.mxu0 0.0
    %5085 = vmatprep.subr.mxu0 0.0
    %5086 = vmatpush2.msra.mxu0 0.0
    %5087 = vmatprep.subr.mxu0 0.0
    %5088 = vmatpush2.msra.mxu0 0.0
    %5089 = vmatprep.subr.mxu0 0.0
    %5090 = vmatpush2.msra.mxu0 0.0
    %5091 = vmatprep.subr.mxu0 0.0
    %5092 = vmatpush2.msra.mxu0 0.0
    %5093 = vmatprep.subr.mxu0 0.0
    %5094 = vmatpush2.msra.mxu0 0.0
    %5095 = vmatprep.subr.mxu0 0.0
    %5096 = vmatpush2.msra.mxu0 0.0
    %5097 = vmatprep.subr.mxu0 0.0
    %5098 = vmatpush2.msra.mxu0 0.0
    %5099 = vmatprep.subr.mxu0 0.0
    %5100 = vmatpush2.msra.mxu0 0.0
    %5101 = vmatprep.subr.mxu0 0.0
    %5102 = vmatpush2.msra.mxu0 0.0
    %5103 = vmatprep.subr.mxu0 0.0
    %5104 = vmatpush2.msra.mxu0 0.0
    %5105 = vmatprep.subr.mxu0 0.0
    %5106 = vmatpush2.msra.mxu0 0.0
    %5107 = vmatprep.mubr.f32.mxu0 0.0
    %v5108 = vand.u32 %v5039, 4294901760
    %v5109 = vsub.f32 %v5039, %v5108
    %v5110 = vand.u32 %v5109, 4294901760
    %v5111 = vsub.f32 %v5109, %v5110
    %v5112 = vand.u32 %v5111, 4294901760
    %5113 = vmatmul.mubr.f32.gmra.mxu0 %v5112
    %v5114 = vpop.f32.mrf.mxu0
    %v5115 = vadd.f32 0.0, %v5114
    %v5116 = vpop.f32.mrf.mxu0
    %5117 = vdwg.mxu0
    %5118 = vmatprep.subr.mxu0 0.0
    %5119 = vmatpush1.msra.mxu0 0.0
    %5120 = vmatprep.subr.mxu0 0.0
    %5121 = vmatpush1.msra.mxu0 0.0
    %5122 = vmatprep.subr.mxu0 0.0
    %5123 = vmatpush1.msra.mxu0 0.0
    %5124 = vmatprep.subr.mxu0 0.0
    %5125 = vmatpush1.msra.mxu0 0.0
    %5126 = vmatprep.subr.mxu0 0.0
    %5127 = vmatpush1.msra.mxu0 0.0
    %5128 = vmatprep.subr.mxu0 0.0
    %5129 = vmatpush1.msra.mxu0 0.0
    %5130 = vmatprep.subr.mxu0 0.0
    %5131 = vmatpush1.msra.mxu0 0.0
    %5132 = vmatprep.subr.mxu0 0.0
    %5133 = vmatpush1.msra.mxu0 0.0
    %5134 = vmatprep.subr.mxu0 0.0
    %5135 = vmatpush1.msra.mxu0 0.0
    %5136 = vmatprep.subr.mxu0 0.0
    %5137 = vmatpush1.msra.mxu0 0.0
    %5138 = vmatprep.subr.mxu0 0.0
    %5139 = vmatpush1.msra.mxu0 0.0
    %5140 = vmatprep.subr.mxu0 0.0
    %5141 = vmatpush1.msra.mxu0 0.0
    %5142 = vmatprep.subr.mxu0 0.0
    %5143 = vmatpush1.msra.mxu0 0.0
    %5144 = vmatprep.subr.mxu0 0.0
    %5145 = vmatpush1.msra.mxu0 0.0
    %5146 = vmatprep.subr.mxu0 0.0
    %v5147 = vand.u32 %v2723, 4294901760
    %v5148 = vsub.f32 %v2723, %v5147
    %v5149 = vand.u32 %v5148, 4294901760
    %v5150 = vsub.f32 %v5148, %v5149
    %v5151 = vand.u32 %v5150, 4294901760
    %5152 = vmatpush1.msra.mxu0 %v5151
    %5153 = vmatprep.subr.mxu0 0.0
    %v5154 = vand.u32 %v2722, 4294901760
    %v5155 = vsub.f32 %v2722, %v5154
    %v5156 = vand.u32 %v5155, 4294901760
    %v5157 = vsub.f32 %v5155, %v5156
    %v5158 = vand.u32 %v5157, 4294901760
    %5159 = vmatpush1.msra.mxu0 %v5158
    %5160 = vmatprep.subr.mxu0 0.0
    %5161 = vmatpush2.msra.mxu0 0.0
    %5162 = vmatprep.subr.mxu0 0.0
    %5163 = vmatpush2.msra.mxu0 0.0
    %5164 = vmatprep.subr.mxu0 0.0
    %5165 = vmatpush2.msra.mxu0 0.0
    %5166 = vmatprep.subr.mxu0 0.0
    %5167 = vmatpush2.msra.mxu0 0.0
    %5168 = vmatprep.subr.mxu0 0.0
    %5169 = vmatpush2.msra.mxu0 0.0
    %5170 = vmatprep.subr.mxu0 0.0
    %5171 = vmatpush2.msra.mxu0 0.0
    %5172 = vmatprep.subr.mxu0 0.0
    %5173 = vmatpush2.msra.mxu0 0.0
    %5174 = vmatprep.subr.mxu0 0.0
    %5175 = vmatpush2.msra.mxu0 0.0
    %5176 = vmatprep.subr.mxu0 0.0
    %5177 = vmatpush2.msra.mxu0 0.0
    %5178 = vmatprep.subr.mxu0 0.0
    %5179 = vmatpush2.msra.mxu0 0.0
    %5180 = vmatprep.subr.mxu0 0.0
    %5181 = vmatpush2.msra.mxu0 0.0
    %5182 = vmatprep.subr.mxu0 0.0
    %5183 = vmatpush2.msra.mxu0 0.0
    %5184 = vmatprep.subr.mxu0 0.0
    %5185 = vmatpush2.msra.mxu0 0.0
    %5186 = vmatprep.subr.mxu0 0.0
    %5187 = vmatpush2.msra.mxu0 0.0
    %5188 = vmatprep.subr.mxu0 0.0
    %5189 = vmatpush2.msra.mxu0 0.0
    %5190 = vmatprep.subr.mxu0 0.0
    %5191 = vmatpush2.msra.mxu0 0.0
    %5192 = vmatprep.mubr.f32.mxu0 0.0
    %v5193 = vand.u32 %v5039, 4294901760
    %5194 = vmatmul.mubr.f32.gmra.mxu0 %v5193
    %v5195 = vpop.f32.mrf.mxu0
    %v5196 = vadd.f32 %v5115, %v5195
    %v5197 = vpop.f32.mrf.mxu0
    %5198 = vdwg.mxu0
    %5199 = vmatprep.subr.mxu0 0.0
    %5200 = vmatpush1.msra.mxu0 0.0
    %5201 = vmatprep.subr.mxu0 0.0
    %5202 = vmatpush1.msra.mxu0 0.0
    %5203 = vmatprep.subr.mxu0 0.0
    %5204 = vmatpush1.msra.mxu0 0.0
    %5205 = vmatprep.subr.mxu0 0.0
    %5206 = vmatpush1.msra.mxu0 0.0
    %5207 = vmatprep.subr.mxu0 0.0
    %5208 = vmatpush1.msra.mxu0 0.0
    %5209 = vmatprep.subr.mxu0 0.0
    %5210 = vmatpush1.msra.mxu0 0.0
    %5211 = vmatprep.subr.mxu0 0.0
    %5212 = vmatpush1.msra.mxu0 0.0
    %5213 = vmatprep.subr.mxu0 0.0
    %5214 = vmatpush1.msra.mxu0 0.0
    %5215 = vmatprep.subr.mxu0 0.0
    %5216 = vmatpush1.msra.mxu0 0.0
    %5217 = vmatprep.subr.mxu0 0.0
    %5218 = vmatpush1.msra.mxu0 0.0
    %5219 = vmatprep.subr.mxu0 0.0
    %5220 = vmatpush1.msra.mxu0 0.0
    %5221 = vmatprep.subr.mxu0 0.0
    %5222 = vmatpush1.msra.mxu0 0.0
    %5223 = vmatprep.subr.mxu0 0.0
    %5224 = vmatpush1.msra.mxu0 0.0
    %5225 = vmatprep.subr.mxu0 0.0
    %5226 = vmatpush1.msra.mxu0 0.0
    %5227 = vmatprep.subr.mxu0 0.0
    %v5228 = vand.u32 %v2723, 4294901760
    %v5229 = vsub.f32 %v2723, %v5228
    %5230 = vmatpush1.msra.mxu0 %v5229
    %5231 = vmatprep.subr.mxu0 0.0
    %v5232 = vand.u32 %v2722, 4294901760
    %v5233 = vsub.f32 %v2722, %v5232
    %5234 = vmatpush1.msra.mxu0 %v5233
    %5235 = vmatprep.subr.mxu0 0.0
    %5236 = vmatpush2.msra.mxu0 0.0
    %5237 = vmatprep.subr.mxu0 0.0
    %5238 = vmatpush2.msra.mxu0 0.0
    %5239 = vmatprep.subr.mxu0 0.0
    %5240 = vmatpush2.msra.mxu0 0.0
    %5241 = vmatprep.subr.mxu0 0.0
    %5242 = vmatpush2.msra.mxu0 0.0
    %5243 = vmatprep.subr.mxu0 0.0
    %5244 = vmatpush2.msra.mxu0 0.0
    %5245 = vmatprep.subr.mxu0 0.0
    %5246 = vmatpush2.msra.mxu0 0.0
    %5247 = vmatprep.subr.mxu0 0.0
    %5248 = vmatpush2.msra.mxu0 0.0
    %5249 = vmatprep.subr.mxu0 0.0
    %5250 = vmatpush2.msra.mxu0 0.0
    %5251 = vmatprep.subr.mxu0 0.0
    %5252 = vmatpush2.msra.mxu0 0.0
    %5253 = vmatprep.subr.mxu0 0.0
    %5254 = vmatpush2.msra.mxu0 0.0
    %5255 = vmatprep.subr.mxu0 0.0
    %5256 = vmatpush2.msra.mxu0 0.0
    %5257 = vmatprep.subr.mxu0 0.0
    %5258 = vmatpush2.msra.mxu0 0.0
    %5259 = vmatprep.subr.mxu0 0.0
    %5260 = vmatpush2.msra.mxu0 0.0
    %5261 = vmatprep.subr.mxu0 0.0
    %5262 = vmatpush2.msra.mxu0 0.0
    %5263 = vmatprep.subr.mxu0 0.0
    %5264 = vmatpush2.msra.mxu0 0.0
    %5265 = vmatprep.subr.mxu0 0.0
    %5266 = vmatpush2.msra.mxu0 0.0
    %5267 = vmatprep.mubr.f32.mxu0 0.0
    %v5268 = vand.u32 %v5039, 4294901760
    %v5269 = vsub.f32 %v5039, %v5268
    %5270 = vmatmul.mubr.f32.gmra.mxu0 %v5269
    %v5271 = vpop.f32.mrf.mxu0
    %v5272 = vadd.f32 %v5196, %v5271
    %v5273 = vpop.f32.mrf.mxu0
    %5274 = vdwg.mxu0
    %5275 = vmatprep.subr.mxu0 0.0
    %5276 = vmatpush1.msra.mxu0 0.0
    %5277 = vmatprep.subr.mxu0 0.0
    %5278 = vmatpush1.msra.mxu0 0.0
    %5279 = vmatprep.subr.mxu0 0.0
    %5280 = vmatpush1.msra.mxu0 0.0
    %5281 = vmatprep.subr.mxu0 0.0
    %5282 = vmatpush1.msra.mxu0 0.0
    %5283 = vmatprep.subr.mxu0 0.0
    %5284 = vmatpush1.msra.mxu0 0.0
    %5285 = vmatprep.subr.mxu0 0.0
    %5286 = vmatpush1.msra.mxu0 0.0
    %5287 = vmatprep.subr.mxu0 0.0
    %5288 = vmatpush1.msra.mxu0 0.0
    %5289 = vmatprep.subr.mxu0 0.0
    %5290 = vmatpush1.msra.mxu0 0.0
    %5291 = vmatprep.subr.mxu0 0.0
    %5292 = vmatpush1.msra.mxu0 0.0
    %5293 = vmatprep.subr.mxu0 0.0
    %5294 = vmatpush1.msra.mxu0 0.0
    %5295 = vmatprep.subr.mxu0 0.0
    %5296 = vmatpush1.msra.mxu0 0.0
    %5297 = vmatprep.subr.mxu0 0.0
    %5298 = vmatpush1.msra.mxu0 0.0
    %5299 = vmatprep.subr.mxu0 0.0
    %5300 = vmatpush1.msra.mxu0 0.0
    %5301 = vmatprep.subr.mxu0 0.0
    %5302 = vmatpush1.msra.mxu0 0.0
    %5303 = vmatprep.subr.mxu0 0.0
    %v5304 = vand.u32 %v2723, 4294901760
    %5305 = vmatpush1.msra.mxu0 %v5304
    %5306 = vmatprep.subr.mxu0 0.0
    %v5307 = vand.u32 %v2722, 4294901760
    %5308 = vmatpush1.msra.mxu0 %v5307
    %5309 = vmatprep.subr.mxu0 0.0
    %5310 = vmatpush2.msra.mxu0 0.0
    %5311 = vmatprep.subr.mxu0 0.0
    %5312 = vmatpush2.msra.mxu0 0.0
    %5313 = vmatprep.subr.mxu0 0.0
    %5314 = vmatpush2.msra.mxu0 0.0
    %5315 = vmatprep.subr.mxu0 0.0
    %5316 = vmatpush2.msra.mxu0 0.0
    %5317 = vmatprep.subr.mxu0 0.0
    %5318 = vmatpush2.msra.mxu0 0.0
    %5319 = vmatprep.subr.mxu0 0.0
    %5320 = vmatpush2.msra.mxu0 0.0
    %5321 = vmatprep.subr.mxu0 0.0
    %5322 = vmatpush2.msra.mxu0 0.0
    %5323 = vmatprep.subr.mxu0 0.0
    %5324 = vmatpush2.msra.mxu0 0.0
    %5325 = vmatprep.subr.mxu0 0.0
    %5326 = vmatpush2.msra.mxu0 0.0
    %5327 = vmatprep.subr.mxu0 0.0
    %5328 = vmatpush2.msra.mxu0 0.0
    %5329 = vmatprep.subr.mxu0 0.0
    %5330 = vmatpush2.msra.mxu0 0.0
    %5331 = vmatprep.subr.mxu0 0.0
    %5332 = vmatpush2.msra.mxu0 0.0
    %5333 = vmatprep.subr.mxu0 0.0
    %5334 = vmatpush2.msra.mxu0 0.0
    %5335 = vmatprep.subr.mxu0 0.0
    %5336 = vmatpush2.msra.mxu0 0.0
    %5337 = vmatprep.subr.mxu0 0.0
    %5338 = vmatpush2.msra.mxu0 0.0
    %5339 = vmatprep.subr.mxu0 0.0
    %5340 = vmatpush2.msra.mxu0 0.0
    %5341 = vmatprep.mubr.f32.mxu0 0.0
    %v5342 = vand.u32 %v5039, 4294901760
    %v5343 = vsub.f32 %v5039, %v5342
    %v5344 = vand.u32 %v5343, 4294901760
    %5345 = vmatmul.mubr.f32.gmra.mxu0 %v5344
    %v5346 = vpop.f32.mrf.mxu0
    %v5347 = vadd.f32 %v5272, %v5346
    %v5348 = vpop.f32.mrf.mxu0
    %5349 = vdwg.mxu0
    %5350 = vmatprep.subr.mxu0 0.0
    %5351 = vmatpush1.msra.mxu0 0.0
    %5352 = vmatprep.subr.mxu0 0.0
    %5353 = vmatpush1.msra.mxu0 0.0
    %5354 = vmatprep.subr.mxu0 0.0
    %5355 = vmatpush1.msra.mxu0 0.0
    %5356 = vmatprep.subr.mxu0 0.0
    %5357 = vmatpush1.msra.mxu0 0.0
    %5358 = vmatprep.subr.mxu0 0.0
    %5359 = vmatpush1.msra.mxu0 0.0
    %5360 = vmatprep.subr.mxu0 0.0
    %5361 = vmatpush1.msra.mxu0 0.0
    %5362 = vmatprep.subr.mxu0 0.0
    %5363 = vmatpush1.msra.mxu0 0.0
    %5364 = vmatprep.subr.mxu0 0.0
    %5365 = vmatpush1.msra.mxu0 0.0
    %5366 = vmatprep.subr.mxu0 0.0
    %5367 = vmatpush1.msra.mxu0 0.0
    %5368 = vmatprep.subr.mxu0 0.0
    %5369 = vmatpush1.msra.mxu0 0.0
    %5370 = vmatprep.subr.mxu0 0.0
    %5371 = vmatpush1.msra.mxu0 0.0
    %5372 = vmatprep.subr.mxu0 0.0
    %5373 = vmatpush1.msra.mxu0 0.0
    %5374 = vmatprep.subr.mxu0 0.0
    %5375 = vmatpush1.msra.mxu0 0.0
    %5376 = vmatprep.subr.mxu0 0.0
    %5377 = vmatpush1.msra.mxu0 0.0
    %5378 = vmatprep.subr.mxu0 0.0
    %v5379 = vand.u32 %v2723, 4294901760
    %v5380 = vsub.f32 %v2723, %v5379
    %v5381 = vand.u32 %v5380, 4294901760
    %5382 = vmatpush1.msra.mxu0 %v5381
    %5383 = vmatprep.subr.mxu0 0.0
    %v5384 = vand.u32 %v2722, 4294901760
    %v5385 = vsub.f32 %v2722, %v5384
    %v5386 = vand.u32 %v5385, 4294901760
    %5387 = vmatpush1.msra.mxu0 %v5386
    %5388 = vmatprep.subr.mxu0 0.0
    %5389 = vmatpush2.msra.mxu0 0.0
    %5390 = vmatprep.subr.mxu0 0.0
    %5391 = vmatpush2.msra.mxu0 0.0
    %5392 = vmatprep.subr.mxu0 0.0
    %5393 = vmatpush2.msra.mxu0 0.0
    %5394 = vmatprep.subr.mxu0 0.0
    %5395 = vmatpush2.msra.mxu0 0.0
    %5396 = vmatprep.subr.mxu0 0.0
    %5397 = vmatpush2.msra.mxu0 0.0
    %5398 = vmatprep.subr.mxu0 0.0
    %5399 = vmatpush2.msra.mxu0 0.0
    %5400 = vmatprep.subr.mxu0 0.0
    %5401 = vmatpush2.msra.mxu0 0.0
    %5402 = vmatprep.subr.mxu0 0.0
    %5403 = vmatpush2.msra.mxu0 0.0
    %5404 = vmatprep.subr.mxu0 0.0
    %5405 = vmatpush2.msra.mxu0 0.0
    %5406 = vmatprep.subr.mxu0 0.0
    %5407 = vmatpush2.msra.mxu0 0.0
    %5408 = vmatprep.subr.mxu0 0.0
    %5409 = vmatpush2.msra.mxu0 0.0
    %5410 = vmatprep.subr.mxu0 0.0
    %5411 = vmatpush2.msra.mxu0 0.0
    %5412 = vmatprep.subr.mxu0 0.0
    %5413 = vmatpush2.msra.mxu0 0.0
    %5414 = vmatprep.subr.mxu0 0.0
    %5415 = vmatpush2.msra.mxu0 0.0
    %5416 = vmatprep.subr.mxu0 0.0
    %5417 = vmatpush2.msra.mxu0 0.0
    %5418 = vmatprep.subr.mxu0 0.0
    %5419 = vmatpush2.msra.mxu0 0.0
    %5420 = vmatprep.mubr.f32.mxu0 0.0
    %v5421 = vand.u32 %v5039, 4294901760
    %5422 = vmatmul.mubr.f32.gmra.mxu0 %v5421
    %v5423 = vpop.f32.mrf.mxu0
    %v5424 = vadd.f32 %v5347, %v5423
    %v5425 = vpop.f32.mrf.mxu0
    %5426 = vdwg.mxu0
    %5427 = vmatprep.subr.mxu0 0.0
    %5428 = vmatpush1.msra.mxu0 0.0
    %5429 = vmatprep.subr.mxu0 0.0
    %5430 = vmatpush1.msra.mxu0 0.0
    %5431 = vmatprep.subr.mxu0 0.0
    %5432 = vmatpush1.msra.mxu0 0.0
    %5433 = vmatprep.subr.mxu0 0.0
    %5434 = vmatpush1.msra.mxu0 0.0
    %5435 = vmatprep.subr.mxu0 0.0
    %5436 = vmatpush1.msra.mxu0 0.0
    %5437 = vmatprep.subr.mxu0 0.0
    %5438 = vmatpush1.msra.mxu0 0.0
    %5439 = vmatprep.subr.mxu0 0.0
    %5440 = vmatpush1.msra.mxu0 0.0
    %5441 = vmatprep.subr.mxu0 0.0
    %5442 = vmatpush1.msra.mxu0 0.0
    %5443 = vmatprep.subr.mxu0 0.0
    %5444 = vmatpush1.msra.mxu0 0.0
    %5445 = vmatprep.subr.mxu0 0.0
    %5446 = vmatpush1.msra.mxu0 0.0
    %5447 = vmatprep.subr.mxu0 0.0
    %5448 = vmatpush1.msra.mxu0 0.0
    %5449 = vmatprep.subr.mxu0 0.0
    %5450 = vmatpush1.msra.mxu0 0.0
    %5451 = vmatprep.subr.mxu0 0.0
    %5452 = vmatpush1.msra.mxu0 0.0
    %5453 = vmatprep.subr.mxu0 0.0
    %5454 = vmatpush1.msra.mxu0 0.0
    %5455 = vmatprep.subr.mxu0 0.0
    %v5456 = vand.u32 %v2723, 4294901760
    %5457 = vmatpush1.msra.mxu0 %v5456
    %5458 = vmatprep.subr.mxu0 0.0
    %v5459 = vand.u32 %v2722, 4294901760
    %5460 = vmatpush1.msra.mxu0 %v5459
    %5461 = vmatprep.subr.mxu0 0.0
    %5462 = vmatpush2.msra.mxu0 0.0
    %5463 = vmatprep.subr.mxu0 0.0
    %5464 = vmatpush2.msra.mxu0 0.0
    %5465 = vmatprep.subr.mxu0 0.0
    %5466 = vmatpush2.msra.mxu0 0.0
    %5467 = vmatprep.subr.mxu0 0.0
    %5468 = vmatpush2.msra.mxu0 0.0
    %5469 = vmatprep.subr.mxu0 0.0
    %5470 = vmatpush2.msra.mxu0 0.0
    %5471 = vmatprep.subr.mxu0 0.0
    %5472 = vmatpush2.msra.mxu0 0.0
    %5473 = vmatprep.subr.mxu0 0.0
    %5474 = vmatpush2.msra.mxu0 0.0
    %5475 = vmatprep.subr.mxu0 0.0
    %5476 = vmatpush2.msra.mxu0 0.0
    %5477 = vmatprep.subr.mxu0 0.0
    %5478 = vmatpush2.msra.mxu0 0.0
    %5479 = vmatprep.subr.mxu0 0.0
    %5480 = vmatpush2.msra.mxu0 0.0
    %5481 = vmatprep.subr.mxu0 0.0
    %5482 = vmatpush2.msra.mxu0 0.0
    %5483 = vmatprep.subr.mxu0 0.0
    %5484 = vmatpush2.msra.mxu0 0.0
    %5485 = vmatprep.subr.mxu0 0.0
    %5486 = vmatpush2.msra.mxu0 0.0
    %5487 = vmatprep.subr.mxu0 0.0
    %5488 = vmatpush2.msra.mxu0 0.0
    %5489 = vmatprep.subr.mxu0 0.0
    %5490 = vmatpush2.msra.mxu0 0.0
    %5491 = vmatprep.subr.mxu0 0.0
    %5492 = vmatpush2.msra.mxu0 0.0
    %5493 = vmatprep.mubr.f32.mxu0 0.0
    %v5494 = vand.u32 %v5039, 4294901760
    %5495 = vmatmul.mubr.f32.gmra.mxu0 %v5494
    %v5496 = vpop.f32.mrf.mxu0
    %v5497 = vadd.f32 %v5424, %v5496
    %v5498 = vpop.f32.mrf.mxu0
    %5499 = vdwg.mxu0
    %v5501 = vsel %vm83, %v79, 0
    %5503 = vmatprep.subr.mxu0 0.0
    %5504 = vmatpush1.msra.mxu0 0.0
    %5505 = vmatprep.subr.mxu0 0.0
    %5506 = vmatpush1.msra.mxu0 0.0
    %5507 = vmatprep.subr.mxu0 0.0
    %5508 = vmatpush1.msra.mxu0 0.0
    %5509 = vmatprep.subr.mxu0 0.0
    %5510 = vmatpush1.msra.mxu0 0.0
    %5511 = vmatprep.subr.mxu0 0.0
    %5512 = vmatpush1.msra.mxu0 0.0
    %5513 = vmatprep.subr.mxu0 0.0
    %5514 = vmatpush1.msra.mxu0 0.0
    %5515 = vmatprep.subr.mxu0 0.0
    %5516 = vmatpush1.msra.mxu0 0.0
    %5517 = vmatprep.subr.mxu0 0.0
    %5518 = vmatpush1.msra.mxu0 0.0
    %5519 = vmatprep.subr.mxu0 0.0
    %5520 = vmatpush1.msra.mxu0 0.0
    %5521 = vmatprep.subr.mxu0 0.0
    %5522 = vmatpush1.msra.mxu0 0.0
    %5523 = vmatprep.subr.mxu0 0.0
    %5524 = vmatpush1.msra.mxu0 0.0
    %5525 = vmatprep.subr.mxu0 0.0
    %5526 = vmatpush1.msra.mxu0 0.0
    %5527 = vmatprep.subr.mxu0 0.0
    %5528 = vmatpush1.msra.mxu0 0.0
    %5529 = vmatprep.subr.mxu0 0.0
    %5530 = vmatpush1.msra.mxu0 0.0
    %5531 = vmatprep.subr.mxu0 0.0
    %v5532 = vand.u32 %v2725, 4294901760
    %5533 = vmatpush1.msra.mxu0 %v5532
    %5534 = vmatprep.subr.mxu0 0.0
    %v5535 = vand.u32 %v2724, 4294901760
    %5536 = vmatpush1.msra.mxu0 %v5535
    %5537 = vmatprep.subr.mxu0 0.0
    %5538 = vmatpush2.msra.mxu0 0.0
    %5539 = vmatprep.subr.mxu0 0.0
    %5540 = vmatpush2.msra.mxu0 0.0
    %5541 = vmatprep.subr.mxu0 0.0
    %5542 = vmatpush2.msra.mxu0 0.0
    %5543 = vmatprep.subr.mxu0 0.0
    %5544 = vmatpush2.msra.mxu0 0.0
    %5545 = vmatprep.subr.mxu0 0.0
    %5546 = vmatpush2.msra.mxu0 0.0
    %5547 = vmatprep.subr.mxu0 0.0
    %5548 = vmatpush2.msra.mxu0 0.0
    %5549 = vmatprep.subr.mxu0 0.0
    %5550 = vmatpush2.msra.mxu0 0.0
    %5551 = vmatprep.subr.mxu0 0.0
    %5552 = vmatpush2.msra.mxu0 0.0
    %5553 = vmatprep.subr.mxu0 0.0
    %5554 = vmatpush2.msra.mxu0 0.0
    %5555 = vmatprep.subr.mxu0 0.0
    %5556 = vmatpush2.msra.mxu0 0.0
    %5557 = vmatprep.subr.mxu0 0.0
    %5558 = vmatpush2.msra.mxu0 0.0
    %5559 = vmatprep.subr.mxu0 0.0
    %5560 = vmatpush2.msra.mxu0 0.0
    %5561 = vmatprep.subr.mxu0 0.0
    %5562 = vmatpush2.msra.mxu0 0.0
    %5563 = vmatprep.subr.mxu0 0.0
    %5564 = vmatpush2.msra.mxu0 0.0
    %5565 = vmatprep.subr.mxu0 0.0
    %5566 = vmatpush2.msra.mxu0 0.0
    %5567 = vmatprep.subr.mxu0 0.0
    %5568 = vmatpush2.msra.mxu0 0.0
    %5569 = vmatprep.mubr.f32.mxu0 0.0
    %v5570 = vand.u32 %v5501, 4294901760
    %v5571 = vsub.f32 %v5501, %v5570
    %v5572 = vand.u32 %v5571, 4294901760
    %v5573 = vsub.f32 %v5571, %v5572
    %v5574 = vand.u32 %v5573, 4294901760
    %5575 = vmatmul.mubr.f32.gmra.mxu0 %v5574
    %v5576 = vpop.f32.mrf.mxu0
    %v5577 = vadd.f32 0.0, %v5576
    %v5578 = vpop.f32.mrf.mxu0
    %5579 = vdwg.mxu0
    %5580 = vmatprep.subr.mxu0 0.0
    %5581 = vmatpush1.msra.mxu0 0.0
    %5582 = vmatprep.subr.mxu0 0.0
    %5583 = vmatpush1.msra.mxu0 0.0
    %5584 = vmatprep.subr.mxu0 0.0
    %5585 = vmatpush1.msra.mxu0 0.0
    %5586 = vmatprep.subr.mxu0 0.0
    %5587 = vmatpush1.msra.mxu0 0.0
    %5588 = vmatprep.subr.mxu0 0.0
    %5589 = vmatpush1.msra.mxu0 0.0
    %5590 = vmatprep.subr.mxu0 0.0
    %5591 = vmatpush1.msra.mxu0 0.0
    %5592 = vmatprep.subr.mxu0 0.0
    %5593 = vmatpush1.msra.mxu0 0.0
    %5594 = vmatprep.subr.mxu0 0.0
    %5595 = vmatpush1.msra.mxu0 0.0
    %5596 = vmatprep.subr.mxu0 0.0
    %5597 = vmatpush1.msra.mxu0 0.0
    %5598 = vmatprep.subr.mxu0 0.0
    %5599 = vmatpush1.msra.mxu0 0.0
    %5600 = vmatprep.subr.mxu0 0.0
    %5601 = vmatpush1.msra.mxu0 0.0
    %5602 = vmatprep.subr.mxu0 0.0
    %5603 = vmatpush1.msra.mxu0 0.0
    %5604 = vmatprep.subr.mxu0 0.0
    %5605 = vmatpush1.msra.mxu0 0.0
    %5606 = vmatprep.subr.mxu0 0.0
    %5607 = vmatpush1.msra.mxu0 0.0
    %5608 = vmatprep.subr.mxu0 0.0
    %v5609 = vand.u32 %v2725, 4294901760
    %v5610 = vsub.f32 %v2725, %v5609
    %v5611 = vand.u32 %v5610, 4294901760
    %v5612 = vsub.f32 %v5610, %v5611
    %v5613 = vand.u32 %v5612, 4294901760
    %5614 = vmatpush1.msra.mxu0 %v5613
    %5615 = vmatprep.subr.mxu0 0.0
    %v5616 = vand.u32 %v2724, 4294901760
    %v5617 = vsub.f32 %v2724, %v5616
    %v5618 = vand.u32 %v5617, 4294901760
    %v5619 = vsub.f32 %v5617, %v5618
    %v5620 = vand.u32 %v5619, 4294901760
    %5621 = vmatpush1.msra.mxu0 %v5620
    %5622 = vmatprep.subr.mxu0 0.0
    %5623 = vmatpush2.msra.mxu0 0.0
    %5624 = vmatprep.subr.mxu0 0.0
    %5625 = vmatpush2.msra.mxu0 0.0
    %5626 = vmatprep.subr.mxu0 0.0
    %5627 = vmatpush2.msra.mxu0 0.0
    %5628 = vmatprep.subr.mxu0 0.0
    %5629 = vmatpush2.msra.mxu0 0.0
    %5630 = vmatprep.subr.mxu0 0.0
    %5631 = vmatpush2.msra.mxu0 0.0
    %5632 = vmatprep.subr.mxu0 0.0
    %5633 = vmatpush2.msra.mxu0 0.0
    %5634 = vmatprep.subr.mxu0 0.0
    %5635 = vmatpush2.msra.mxu0 0.0
    %5636 = vmatprep.subr.mxu0 0.0
    %5637 = vmatpush2.msra.mxu0 0.0
    %5638 = vmatprep.subr.mxu0 0.0
    %5639 = vmatpush2.msra.mxu0 0.0
    %5640 = vmatprep.subr.mxu0 0.0
    %5641 = vmatpush2.msra.mxu0 0.0
    %5642 = vmatprep.subr.mxu0 0.0
    %5643 = vmatpush2.msra.mxu0 0.0
    %5644 = vmatprep.subr.mxu0 0.0
    %5645 = vmatpush2.msra.mxu0 0.0
    %5646 = vmatprep.subr.mxu0 0.0
    %5647 = vmatpush2.msra.mxu0 0.0
    %5648 = vmatprep.subr.mxu0 0.0
    %5649 = vmatpush2.msra.mxu0 0.0
    %5650 = vmatprep.subr.mxu0 0.0
    %5651 = vmatpush2.msra.mxu0 0.0
    %5652 = vmatprep.subr.mxu0 0.0
    %5653 = vmatpush2.msra.mxu0 0.0
    %5654 = vmatprep.mubr.f32.mxu0 0.0
    %v5655 = vand.u32 %v5501, 4294901760
    %5656 = vmatmul.mubr.f32.gmra.mxu0 %v5655
    %v5657 = vpop.f32.mrf.mxu0
    %v5658 = vadd.f32 %v5577, %v5657
    %v5659 = vpop.f32.mrf.mxu0
    %5660 = vdwg.mxu0
    %5661 = vmatprep.subr.mxu0 0.0
    %5662 = vmatpush1.msra.mxu0 0.0
    %5663 = vmatprep.subr.mxu0 0.0
    %5664 = vmatpush1.msra.mxu0 0.0
    %5665 = vmatprep.subr.mxu0 0.0
    %5666 = vmatpush1.msra.mxu0 0.0
    %5667 = vmatprep.subr.mxu0 0.0
    %5668 = vmatpush1.msra.mxu0 0.0
    %5669 = vmatprep.subr.mxu0 0.0
    %5670 = vmatpush1.msra.mxu0 0.0
    %5671 = vmatprep.subr.mxu0 0.0
    %5672 = vmatpush1.msra.mxu0 0.0
    %5673 = vmatprep.subr.mxu0 0.0
    %5674 = vmatpush1.msra.mxu0 0.0
    %5675 = vmatprep.subr.mxu0 0.0
    %5676 = vmatpush1.msra.mxu0 0.0
    %5677 = vmatprep.subr.mxu0 0.0
    %5678 = vmatpush1.msra.mxu0 0.0
    %5679 = vmatprep.subr.mxu0 0.0
    %5680 = vmatpush1.msra.mxu0 0.0
    %5681 = vmatprep.subr.mxu0 0.0
    %5682 = vmatpush1.msra.mxu0 0.0
    %5683 = vmatprep.subr.mxu0 0.0
    %5684 = vmatpush1.msra.mxu0 0.0
    %5685 = vmatprep.subr.mxu0 0.0
    %5686 = vmatpush1.msra.mxu0 0.0
    %5687 = vmatprep.subr.mxu0 0.0
    %5688 = vmatpush1.msra.mxu0 0.0
    %5689 = vmatprep.subr.mxu0 0.0
    %v5690 = vand.u32 %v2725, 4294901760
    %v5691 = vsub.f32 %v2725, %v5690
    %5692 = vmatpush1.msra.mxu0 %v5691
    %5693 = vmatprep.subr.mxu0 0.0
    %v5694 = vand.u32 %v2724, 4294901760
    %v5695 = vsub.f32 %v2724, %v5694
    %5696 = vmatpush1.msra.mxu0 %v5695
    %5697 = vmatprep.subr.mxu0 0.0
    %5698 = vmatpush2.msra.mxu0 0.0
    %5699 = vmatprep.subr.mxu0 0.0
    %5700 = vmatpush2.msra.mxu0 0.0
    %5701 = vmatprep.subr.mxu0 0.0
    %5702 = vmatpush2.msra.mxu0 0.0
    %5703 = vmatprep.subr.mxu0 0.0
    %5704 = vmatpush2.msra.mxu0 0.0
    %5705 = vmatprep.subr.mxu0 0.0
    %5706 = vmatpush2.msra.mxu0 0.0
    %5707 = vmatprep.subr.mxu0 0.0
    %5708 = vmatpush2.msra.mxu0 0.0
    %5709 = vmatprep.subr.mxu0 0.0
    %5710 = vmatpush2.msra.mxu0 0.0
    %5711 = vmatprep.subr.mxu0 0.0
    %5712 = vmatpush2.msra.mxu0 0.0
    %5713 = vmatprep.subr.mxu0 0.0
    %5714 = vmatpush2.msra.mxu0 0.0
    %5715 = vmatprep.subr.mxu0 0.0
    %5716 = vmatpush2.msra.mxu0 0.0
    %5717 = vmatprep.subr.mxu0 0.0
    %5718 = vmatpush2.msra.mxu0 0.0
    %5719 = vmatprep.subr.mxu0 0.0
    %5720 = vmatpush2.msra.mxu0 0.0
    %5721 = vmatprep.subr.mxu0 0.0
    %5722 = vmatpush2.msra.mxu0 0.0
    %5723 = vmatprep.subr.mxu0 0.0
    %5724 = vmatpush2.msra.mxu0 0.0
    %5725 = vmatprep.subr.mxu0 0.0
    %5726 = vmatpush2.msra.mxu0 0.0
    %5727 = vmatprep.subr.mxu0 0.0
    %5728 = vmatpush2.msra.mxu0 0.0
    %5729 = vmatprep.mubr.f32.mxu0 0.0
    %v5730 = vand.u32 %v5501, 4294901760
    %v5731 = vsub.f32 %v5501, %v5730
    %5732 = vmatmul.mubr.f32.gmra.mxu0 %v5731
    %v5733 = vpop.f32.mrf.mxu0
    %v5734 = vadd.f32 %v5658, %v5733
    %v5735 = vpop.f32.mrf.mxu0
    %5736 = vdwg.mxu0
    %5737 = vmatprep.subr.mxu0 0.0
    %5738 = vmatpush1.msra.mxu0 0.0
    %5739 = vmatprep.subr.mxu0 0.0
    %5740 = vmatpush1.msra.mxu0 0.0
    %5741 = vmatprep.subr.mxu0 0.0
    %5742 = vmatpush1.msra.mxu0 0.0
    %5743 = vmatprep.subr.mxu0 0.0
    %5744 = vmatpush1.msra.mxu0 0.0
    %5745 = vmatprep.subr.mxu0 0.0
    %5746 = vmatpush1.msra.mxu0 0.0
    %5747 = vmatprep.subr.mxu0 0.0
    %5748 = vmatpush1.msra.mxu0 0.0
    %5749 = vmatprep.subr.mxu0 0.0
    %5750 = vmatpush1.msra.mxu0 0.0
    %5751 = vmatprep.subr.mxu0 0.0
    %5752 = vmatpush1.msra.mxu0 0.0
    %5753 = vmatprep.subr.mxu0 0.0
    %5754 = vmatpush1.msra.mxu0 0.0
    %5755 = vmatprep.subr.mxu0 0.0
    %5756 = vmatpush1.msra.mxu0 0.0
    %5757 = vmatprep.subr.mxu0 0.0
    %5758 = vmatpush1.msra.mxu0 0.0
    %5759 = vmatprep.subr.mxu0 0.0
    %5760 = vmatpush1.msra.mxu0 0.0
    %5761 = vmatprep.subr.mxu0 0.0
    %5762 = vmatpush1.msra.mxu0 0.0
    %5763 = vmatprep.subr.mxu0 0.0
    %5764 = vmatpush1.msra.mxu0 0.0
    %5765 = vmatprep.subr.mxu0 0.0
    %v5766 = vand.u32 %v2725, 4294901760
    %5767 = vmatpush1.msra.mxu0 %v5766
    %5768 = vmatprep.subr.mxu0 0.0
    %v5769 = vand.u32 %v2724, 4294901760
    %5770 = vmatpush1.msra.mxu0 %v5769
    %5771 = vmatprep.subr.mxu0 0.0
    %5772 = vmatpush2.msra.mxu0 0.0
    %5773 = vmatprep.subr.mxu0 0.0
    %5774 = vmatpush2.msra.mxu0 0.0
    %5775 = vmatprep.subr.mxu0 0.0
    %5776 = vmatpush2.msra.mxu0 0.0
    %5777 = vmatprep.subr.mxu0 0.0
    %5778 = vmatpush2.msra.mxu0 0.0
    %5779 = vmatprep.subr.mxu0 0.0
    %5780 = vmatpush2.msra.mxu0 0.0
    %5781 = vmatprep.subr.mxu0 0.0
    %5782 = vmatpush2.msra.mxu0 0.0
    %5783 = vmatprep.subr.mxu0 0.0
    %5784 = vmatpush2.msra.mxu0 0.0
    %5785 = vmatprep.subr.mxu0 0.0
    %5786 = vmatpush2.msra.mxu0 0.0
    %5787 = vmatprep.subr.mxu0 0.0
    %5788 = vmatpush2.msra.mxu0 0.0
    %5789 = vmatprep.subr.mxu0 0.0
    %5790 = vmatpush2.msra.mxu0 0.0
    %5791 = vmatprep.subr.mxu0 0.0
    %5792 = vmatpush2.msra.mxu0 0.0
    %5793 = vmatprep.subr.mxu0 0.0
    %5794 = vmatpush2.msra.mxu0 0.0
    %5795 = vmatprep.subr.mxu0 0.0
    %5796 = vmatpush2.msra.mxu0 0.0
    %5797 = vmatprep.subr.mxu0 0.0
    %5798 = vmatpush2.msra.mxu0 0.0
    %5799 = vmatprep.subr.mxu0 0.0
    %5800 = vmatpush2.msra.mxu0 0.0
    %5801 = vmatprep.subr.mxu0 0.0
    %5802 = vmatpush2.msra.mxu0 0.0
    %5803 = vmatprep.mubr.f32.mxu0 0.0
    %v5804 = vand.u32 %v5501, 4294901760
    %v5805 = vsub.f32 %v5501, %v5804
    %v5806 = vand.u32 %v5805, 4294901760
    %5807 = vmatmul.mubr.f32.gmra.mxu0 %v5806
    %v5808 = vpop.f32.mrf.mxu0
    %v5809 = vadd.f32 %v5734, %v5808
    %v5810 = vpop.f32.mrf.mxu0
    %5811 = vdwg.mxu0
    %5812 = vmatprep.subr.mxu0 0.0
    %5813 = vmatpush1.msra.mxu0 0.0
    %5814 = vmatprep.subr.mxu0 0.0
    %5815 = vmatpush1.msra.mxu0 0.0
    %5816 = vmatprep.subr.mxu0 0.0
    %5817 = vmatpush1.msra.mxu0 0.0
    %5818 = vmatprep.subr.mxu0 0.0
    %5819 = vmatpush1.msra.mxu0 0.0
    %5820 = vmatprep.subr.mxu0 0.0
    %5821 = vmatpush1.msra.mxu0 0.0
    %5822 = vmatprep.subr.mxu0 0.0
    %5823 = vmatpush1.msra.mxu0 0.0
    %5824 = vmatprep.subr.mxu0 0.0
    %5825 = vmatpush1.msra.mxu0 0.0
    %5826 = vmatprep.subr.mxu0 0.0
    %5827 = vmatpush1.msra.mxu0 0.0
    %5828 = vmatprep.subr.mxu0 0.0
    %5829 = vmatpush1.msra.mxu0 0.0
    %5830 = vmatprep.subr.mxu0 0.0
    %5831 = vmatpush1.msra.mxu0 0.0
    %5832 = vmatprep.subr.mxu0 0.0
    %5833 = vmatpush1.msra.mxu0 0.0
    %5834 = vmatprep.subr.mxu0 0.0
    %5835 = vmatpush1.msra.mxu0 0.0
    %5836 = vmatprep.subr.mxu0 0.0
    %5837 = vmatpush1.msra.mxu0 0.0
    %5838 = vmatprep.subr.mxu0 0.0
    %5839 = vmatpush1.msra.mxu0 0.0
    %5840 = vmatprep.subr.mxu0 0.0
    %v5841 = vand.u32 %v2725, 4294901760
    %v5842 = vsub.f32 %v2725, %v5841
    %v5843 = vand.u32 %v5842, 4294901760
    %5844 = vmatpush1.msra.mxu0 %v5843
    %5845 = vmatprep.subr.mxu0 0.0
    %v5846 = vand.u32 %v2724, 4294901760
    %v5847 = vsub.f32 %v2724, %v5846
    %v5848 = vand.u32 %v5847, 4294901760
    %5849 = vmatpush1.msra.mxu0 %v5848
    %5850 = vmatprep.subr.mxu0 0.0
    %5851 = vmatpush2.msra.mxu0 0.0
    %5852 = vmatprep.subr.mxu0 0.0
    %5853 = vmatpush2.msra.mxu0 0.0
    %5854 = vmatprep.subr.mxu0 0.0
    %5855 = vmatpush2.msra.mxu0 0.0
    %5856 = vmatprep.subr.mxu0 0.0
    %5857 = vmatpush2.msra.mxu0 0.0
    %5858 = vmatprep.subr.mxu0 0.0
    %5859 = vmatpush2.msra.mxu0 0.0
    %5860 = vmatprep.subr.mxu0 0.0
    %5861 = vmatpush2.msra.mxu0 0.0
    %5862 = vmatprep.subr.mxu0 0.0
    %5863 = vmatpush2.msra.mxu0 0.0
    %5864 = vmatprep.subr.mxu0 0.0
    %5865 = vmatpush2.msra.mxu0 0.0
    %5866 = vmatprep.subr.mxu0 0.0
    %5867 = vmatpush2.msra.mxu0 0.0
    %5868 = vmatprep.subr.mxu0 0.0
    %5869 = vmatpush2.msra.mxu0 0.0
    %5870 = vmatprep.subr.mxu0 0.0
    %5871 = vmatpush2.msra.mxu0 0.0
    %5872 = vmatprep.subr.mxu0 0.0
    %5873 = vmatpush2.msra.mxu0 0.0
    %5874 = vmatprep.subr.mxu0 0.0
    %5875 = vmatpush2.msra.mxu0 0.0
    %5876 = vmatprep.subr.mxu0 0.0
    %5877 = vmatpush2.msra.mxu0 0.0
    %5878 = vmatprep.subr.mxu0 0.0
    %5879 = vmatpush2.msra.mxu0 0.0
    %5880 = vmatprep.subr.mxu0 0.0
    %5881 = vmatpush2.msra.mxu0 0.0
    %5882 = vmatprep.mubr.f32.mxu0 0.0
    %v5883 = vand.u32 %v5501, 4294901760
    %5884 = vmatmul.mubr.f32.gmra.mxu0 %v5883
    %v5885 = vpop.f32.mrf.mxu0
    %v5886 = vadd.f32 %v5809, %v5885
    %v5887 = vpop.f32.mrf.mxu0
    %5888 = vdwg.mxu0
    %5889 = vmatprep.subr.mxu0 0.0
    %5890 = vmatpush1.msra.mxu0 0.0
    %5891 = vmatprep.subr.mxu0 0.0
    %5892 = vmatpush1.msra.mxu0 0.0
    %5893 = vmatprep.subr.mxu0 0.0
    %5894 = vmatpush1.msra.mxu0 0.0
    %5895 = vmatprep.subr.mxu0 0.0
    %5896 = vmatpush1.msra.mxu0 0.0
    %5897 = vmatprep.subr.mxu0 0.0
    %5898 = vmatpush1.msra.mxu0 0.0
    %5899 = vmatprep.subr.mxu0 0.0
    %5900 = vmatpush1.msra.mxu0 0.0
    %5901 = vmatprep.subr.mxu0 0.0
    %5902 = vmatpush1.msra.mxu0 0.0
    %5903 = vmatprep.subr.mxu0 0.0
    %5904 = vmatpush1.msra.mxu0 0.0
    %5905 = vmatprep.subr.mxu0 0.0
    %5906 = vmatpush1.msra.mxu0 0.0
    %5907 = vmatprep.subr.mxu0 0.0
    %5908 = vmatpush1.msra.mxu0 0.0
    %5909 = vmatprep.subr.mxu0 0.0
    %5910 = vmatpush1.msra.mxu0 0.0
    %5911 = vmatprep.subr.mxu0 0.0
    %5912 = vmatpush1.msra.mxu0 0.0
    %5913 = vmatprep.subr.mxu0 0.0
    %5914 = vmatpush1.msra.mxu0 0.0
    %5915 = vmatprep.subr.mxu0 0.0
    %5916 = vmatpush1.msra.mxu0 0.0
    %5917 = vmatprep.subr.mxu0 0.0
    %v5918 = vand.u32 %v2725, 4294901760
    %5919 = vmatpush1.msra.mxu0 %v5918
    %5920 = vmatprep.subr.mxu0 0.0
    %v5921 = vand.u32 %v2724, 4294901760
    %5922 = vmatpush1.msra.mxu0 %v5921
    %5923 = vmatprep.subr.mxu0 0.0
    %5924 = vmatpush2.msra.mxu0 0.0
    %5925 = vmatprep.subr.mxu0 0.0
    %5926 = vmatpush2.msra.mxu0 0.0
    %5927 = vmatprep.subr.mxu0 0.0
    %5928 = vmatpush2.msra.mxu0 0.0
    %5929 = vmatprep.subr.mxu0 0.0
    %5930 = vmatpush2.msra.mxu0 0.0
    %5931 = vmatprep.subr.mxu0 0.0
    %5932 = vmatpush2.msra.mxu0 0.0
    %5933 = vmatprep.subr.mxu0 0.0
    %5934 = vmatpush2.msra.mxu0 0.0
    %5935 = vmatprep.subr.mxu0 0.0
    %5936 = vmatpush2.msra.mxu0 0.0
    %5937 = vmatprep.subr.mxu0 0.0
    %5938 = vmatpush2.msra.mxu0 0.0
    %5939 = vmatprep.subr.mxu0 0.0
    %5940 = vmatpush2.msra.mxu0 0.0
    %5941 = vmatprep.subr.mxu0 0.0
    %5942 = vmatpush2.msra.mxu0 0.0
    %5943 = vmatprep.subr.mxu0 0.0
    %5944 = vmatpush2.msra.mxu0 0.0
    %5945 = vmatprep.subr.mxu0 0.0
    %5946 = vmatpush2.msra.mxu0 0.0
    %5947 = vmatprep.subr.mxu0 0.0
    %5948 = vmatpush2.msra.mxu0 0.0
    %5949 = vmatprep.subr.mxu0 0.0
    %5950 = vmatpush2.msra.mxu0 0.0
    %5951 = vmatprep.subr.mxu0 0.0
    %5952 = vmatpush2.msra.mxu0 0.0
    %5953 = vmatprep.subr.mxu0 0.0
    %5954 = vmatpush2.msra.mxu0 0.0
    %5955 = vmatprep.mubr.f32.mxu0 0.0
    %v5956 = vand.u32 %v5501, 4294901760
    %5957 = vmatmul.mubr.f32.gmra.mxu0 %v5956
    %v5958 = vpop.f32.mrf.mxu0
    %v5959 = vadd.f32 %v5886, %v5958
    %v5960 = vpop.f32.mrf.mxu0
    %5961 = vdwg.mxu0
    %v5963 = vsel %vm83, %v80, 0
    %5965 = vmatprep.subr.mxu0 0.0
    %5966 = vmatpush1.msra.mxu0 0.0
    %5967 = vmatprep.subr.mxu0 0.0
    %5968 = vmatpush1.msra.mxu0 0.0
    %5969 = vmatprep.subr.mxu0 0.0
    %5970 = vmatpush1.msra.mxu0 0.0
    %5971 = vmatprep.subr.mxu0 0.0
    %5972 = vmatpush1.msra.mxu0 0.0
    %5973 = vmatprep.subr.mxu0 0.0
    %5974 = vmatpush1.msra.mxu0 0.0
    %5975 = vmatprep.subr.mxu0 0.0
    %5976 = vmatpush1.msra.mxu0 0.0
    %5977 = vmatprep.subr.mxu0 0.0
    %5978 = vmatpush1.msra.mxu0 0.0
    %5979 = vmatprep.subr.mxu0 0.0
    %5980 = vmatpush1.msra.mxu0 0.0
    %5981 = vmatprep.subr.mxu0 0.0
    %5982 = vmatpush1.msra.mxu0 0.0
    %5983 = vmatprep.subr.mxu0 0.0
    %5984 = vmatpush1.msra.mxu0 0.0
    %5985 = vmatprep.subr.mxu0 0.0
    %5986 = vmatpush1.msra.mxu0 0.0
    %5987 = vmatprep.subr.mxu0 0.0
    %5988 = vmatpush1.msra.mxu0 0.0
    %5989 = vmatprep.subr.mxu0 0.0
    %5990 = vmatpush1.msra.mxu0 0.0
    %5991 = vmatprep.subr.mxu0 0.0
    %5992 = vmatpush1.msra.mxu0 0.0
    %5993 = vmatprep.subr.mxu0 0.0
    %v5994 = vand.u32 %v2727, 4294901760
    %5995 = vmatpush1.msra.mxu0 %v5994
    %5996 = vmatprep.subr.mxu0 0.0
    %v5997 = vand.u32 %v2726, 4294901760
    %5998 = vmatpush1.msra.mxu0 %v5997
    %5999 = vmatprep.subr.mxu0 0.0
    %6000 = vmatpush2.msra.mxu0 0.0
    %6001 = vmatprep.subr.mxu0 0.0
    %6002 = vmatpush2.msra.mxu0 0.0
    %6003 = vmatprep.subr.mxu0 0.0
    %6004 = vmatpush2.msra.mxu0 0.0
    %6005 = vmatprep.subr.mxu0 0.0
    %6006 = vmatpush2.msra.mxu0 0.0
    %6007 = vmatprep.subr.mxu0 0.0
    %6008 = vmatpush2.msra.mxu0 0.0
    %6009 = vmatprep.subr.mxu0 0.0
    %6010 = vmatpush2.msra.mxu0 0.0
    %6011 = vmatprep.subr.mxu0 0.0
    %6012 = vmatpush2.msra.mxu0 0.0
    %6013 = vmatprep.subr.mxu0 0.0
    %6014 = vmatpush2.msra.mxu0 0.0
    %6015 = vmatprep.subr.mxu0 0.0
    %6016 = vmatpush2.msra.mxu0 0.0
    %6017 = vmatprep.subr.mxu0 0.0
    %6018 = vmatpush2.msra.mxu0 0.0
    %6019 = vmatprep.subr.mxu0 0.0
    %6020 = vmatpush2.msra.mxu0 0.0
    %6021 = vmatprep.subr.mxu0 0.0
    %6022 = vmatpush2.msra.mxu0 0.0
    %6023 = vmatprep.subr.mxu0 0.0
    %6024 = vmatpush2.msra.mxu0 0.0
    %6025 = vmatprep.subr.mxu0 0.0
    %6026 = vmatpush2.msra.mxu0 0.0
    %6027 = vmatprep.subr.mxu0 0.0
    %6028 = vmatpush2.msra.mxu0 0.0
    %6029 = vmatprep.subr.mxu0 0.0
    %6030 = vmatpush2.msra.mxu0 0.0
    %6031 = vmatprep.mubr.f32.mxu0 0.0
    %v6032 = vand.u32 %v5963, 4294901760
    %v6033 = vsub.f32 %v5963, %v6032
    %v6034 = vand.u32 %v6033, 4294901760
    %v6035 = vsub.f32 %v6033, %v6034
    %v6036 = vand.u32 %v6035, 4294901760
    %6037 = vmatmul.mubr.f32.gmra.mxu0 %v6036
    %v6038 = vpop.f32.mrf.mxu0
    %v6039 = vadd.f32 0.0, %v6038
    %v6040 = vpop.f32.mrf.mxu0
    %6041 = vdwg.mxu0
    %6042 = vmatprep.subr.mxu0 0.0
    %6043 = vmatpush1.msra.mxu0 0.0
    %6044 = vmatprep.subr.mxu0 0.0
    %6045 = vmatpush1.msra.mxu0 0.0
    %6046 = vmatprep.subr.mxu0 0.0
    %6047 = vmatpush1.msra.mxu0 0.0
    %6048 = vmatprep.subr.mxu0 0.0
    %6049 = vmatpush1.msra.mxu0 0.0
    %6050 = vmatprep.subr.mxu0 0.0
    %6051 = vmatpush1.msra.mxu0 0.0
    %6052 = vmatprep.subr.mxu0 0.0
    %6053 = vmatpush1.msra.mxu0 0.0
    %6054 = vmatprep.subr.mxu0 0.0
    %6055 = vmatpush1.msra.mxu0 0.0
    %6056 = vmatprep.subr.mxu0 0.0
    %6057 = vmatpush1.msra.mxu0 0.0
    %6058 = vmatprep.subr.mxu0 0.0
    %6059 = vmatpush1.msra.mxu0 0.0
    %6060 = vmatprep.subr.mxu0 0.0
    %6061 = vmatpush1.msra.mxu0 0.0
    %6062 = vmatprep.subr.mxu0 0.0
    %6063 = vmatpush1.msra.mxu0 0.0
    %6064 = vmatprep.subr.mxu0 0.0
    %6065 = vmatpush1.msra.mxu0 0.0
    %6066 = vmatprep.subr.mxu0 0.0
    %6067 = vmatpush1.msra.mxu0 0.0
    %6068 = vmatprep.subr.mxu0 0.0
    %6069 = vmatpush1.msra.mxu0 0.0
    %6070 = vmatprep.subr.mxu0 0.0
    %v6071 = vand.u32 %v2727, 4294901760
    %v6072 = vsub.f32 %v2727, %v6071
    %v6073 = vand.u32 %v6072, 4294901760
    %v6074 = vsub.f32 %v6072, %v6073
    %v6075 = vand.u32 %v6074, 4294901760
    %6076 = vmatpush1.msra.mxu0 %v6075
    %6077 = vmatprep.subr.mxu0 0.0
    %v6078 = vand.u32 %v2726, 4294901760
    %v6079 = vsub.f32 %v2726, %v6078
    %v6080 = vand.u32 %v6079, 4294901760
    %v6081 = vsub.f32 %v6079, %v6080
    %v6082 = vand.u32 %v6081, 4294901760
    %6083 = vmatpush1.msra.mxu0 %v6082
    %6084 = vmatprep.subr.mxu0 0.0
    %6085 = vmatpush2.msra.mxu0 0.0
    %6086 = vmatprep.subr.mxu0 0.0
    %6087 = vmatpush2.msra.mxu0 0.0
    %6088 = vmatprep.subr.mxu0 0.0
    %6089 = vmatpush2.msra.mxu0 0.0
    %6090 = vmatprep.subr.mxu0 0.0
    %6091 = vmatpush2.msra.mxu0 0.0
    %6092 = vmatprep.subr.mxu0 0.0
    %6093 = vmatpush2.msra.mxu0 0.0
    %6094 = vmatprep.subr.mxu0 0.0
    %6095 = vmatpush2.msra.mxu0 0.0
    %6096 = vmatprep.subr.mxu0 0.0
    %6097 = vmatpush2.msra.mxu0 0.0
    %6098 = vmatprep.subr.mxu0 0.0
    %6099 = vmatpush2.msra.mxu0 0.0
    %6100 = vmatprep.subr.mxu0 0.0
    %6101 = vmatpush2.msra.mxu0 0.0
    %6102 = vmatprep.subr.mxu0 0.0
    %6103 = vmatpush2.msra.mxu0 0.0
    %6104 = vmatprep.subr.mxu0 0.0
    %6105 = vmatpush2.msra.mxu0 0.0
    %6106 = vmatprep.subr.mxu0 0.0
    %6107 = vmatpush2.msra.mxu0 0.0
    %6108 = vmatprep.subr.mxu0 0.0
    %6109 = vmatpush2.msra.mxu0 0.0
    %6110 = vmatprep.subr.mxu0 0.0
    %6111 = vmatpush2.msra.mxu0 0.0
    %6112 = vmatprep.subr.mxu0 0.0
    %6113 = vmatpush2.msra.mxu0 0.0
    %6114 = vmatprep.subr.mxu0 0.0
    %6115 = vmatpush2.msra.mxu0 0.0
    %6116 = vmatprep.mubr.f32.mxu0 0.0
    %v6117 = vand.u32 %v5963, 4294901760
    %6118 = vmatmul.mubr.f32.gmra.mxu0 %v6117
    %v6119 = vpop.f32.mrf.mxu0
    %v6120 = vadd.f32 %v6039, %v6119
    %v6121 = vpop.f32.mrf.mxu0
    %6122 = vdwg.mxu0
    %6123 = vmatprep.subr.mxu0 0.0
    %6124 = vmatpush1.msra.mxu0 0.0
    %6125 = vmatprep.subr.mxu0 0.0
    %6126 = vmatpush1.msra.mxu0 0.0
    %6127 = vmatprep.subr.mxu0 0.0
    %6128 = vmatpush1.msra.mxu0 0.0
    %6129 = vmatprep.subr.mxu0 0.0
    %6130 = vmatpush1.msra.mxu0 0.0
    %6131 = vmatprep.subr.mxu0 0.0
    %6132 = vmatpush1.msra.mxu0 0.0
    %6133 = vmatprep.subr.mxu0 0.0
    %6134 = vmatpush1.msra.mxu0 0.0
    %6135 = vmatprep.subr.mxu0 0.0
    %6136 = vmatpush1.msra.mxu0 0.0
    %6137 = vmatprep.subr.mxu0 0.0
    %6138 = vmatpush1.msra.mxu0 0.0
    %6139 = vmatprep.subr.mxu0 0.0
    %6140 = vmatpush1.msra.mxu0 0.0
    %6141 = vmatprep.subr.mxu0 0.0
    %6142 = vmatpush1.msra.mxu0 0.0
    %6143 = vmatprep.subr.mxu0 0.0
    %6144 = vmatpush1.msra.mxu0 0.0
    %6145 = vmatprep.subr.mxu0 0.0
    %6146 = vmatpush1.msra.mxu0 0.0
    %6147 = vmatprep.subr.mxu0 0.0
    %6148 = vmatpush1.msra.mxu0 0.0
    %6149 = vmatprep.subr.mxu0 0.0
    %6150 = vmatpush1.msra.mxu0 0.0
    %6151 = vmatprep.subr.mxu0 0.0
    %v6152 = vand.u32 %v2727, 4294901760
    %v6153 = vsub.f32 %v2727, %v6152
    %6154 = vmatpush1.msra.mxu0 %v6153
    %6155 = vmatprep.subr.mxu0 0.0
    %v6156 = vand.u32 %v2726, 4294901760
    %v6157 = vsub.f32 %v2726, %v6156
    %6158 = vmatpush1.msra.mxu0 %v6157
    %6159 = vmatprep.subr.mxu0 0.0
    %6160 = vmatpush2.msra.mxu0 0.0
    %6161 = vmatprep.subr.mxu0 0.0
    %6162 = vmatpush2.msra.mxu0 0.0
    %6163 = vmatprep.subr.mxu0 0.0
    %6164 = vmatpush2.msra.mxu0 0.0
    %6165 = vmatprep.subr.mxu0 0.0
    %6166 = vmatpush2.msra.mxu0 0.0
    %6167 = vmatprep.subr.mxu0 0.0
    %6168 = vmatpush2.msra.mxu0 0.0
    %6169 = vmatprep.subr.mxu0 0.0
    %6170 = vmatpush2.msra.mxu0 0.0
    %6171 = vmatprep.subr.mxu0 0.0
    %6172 = vmatpush2.msra.mxu0 0.0
    %6173 = vmatprep.subr.mxu0 0.0
    %6174 = vmatpush2.msra.mxu0 0.0
    %6175 = vmatprep.subr.mxu0 0.0
    %6176 = vmatpush2.msra.mxu0 0.0
    %6177 = vmatprep.subr.mxu0 0.0
    %6178 = vmatpush2.msra.mxu0 0.0
    %6179 = vmatprep.subr.mxu0 0.0
    %6180 = vmatpush2.msra.mxu0 0.0
    %6181 = vmatprep.subr.mxu0 0.0
    %6182 = vmatpush2.msra.mxu0 0.0
    %6183 = vmatprep.subr.mxu0 0.0
    %6184 = vmatpush2.msra.mxu0 0.0
    %6185 = vmatprep.subr.mxu0 0.0
    %6186 = vmatpush2.msra.mxu0 0.0
    %6187 = vmatprep.subr.mxu0 0.0
    %6188 = vmatpush2.msra.mxu0 0.0
    %6189 = vmatprep.subr.mxu0 0.0
    %6190 = vmatpush2.msra.mxu0 0.0
    %6191 = vmatprep.mubr.f32.mxu0 0.0
    %v6192 = vand.u32 %v5963, 4294901760
    %v6193 = vsub.f32 %v5963, %v6192
    %6194 = vmatmul.mubr.f32.gmra.mxu0 %v6193
    %v6195 = vpop.f32.mrf.mxu0
    %v6196 = vadd.f32 %v6120, %v6195
    %v6197 = vpop.f32.mrf.mxu0
    %6198 = vdwg.mxu0
    %6199 = vmatprep.subr.mxu0 0.0
    %6200 = vmatpush1.msra.mxu0 0.0
    %6201 = vmatprep.subr.mxu0 0.0
    %6202 = vmatpush1.msra.mxu0 0.0
    %6203 = vmatprep.subr.mxu0 0.0
    %6204 = vmatpush1.msra.mxu0 0.0
    %6205 = vmatprep.subr.mxu0 0.0
    %6206 = vmatpush1.msra.mxu0 0.0
    %6207 = vmatprep.subr.mxu0 0.0
    %6208 = vmatpush1.msra.mxu0 0.0
    %6209 = vmatprep.subr.mxu0 0.0
    %6210 = vmatpush1.msra.mxu0 0.0
    %6211 = vmatprep.subr.mxu0 0.0
    %6212 = vmatpush1.msra.mxu0 0.0
    %6213 = vmatprep.subr.mxu0 0.0
    %6214 = vmatpush1.msra.mxu0 0.0
    %6215 = vmatprep.subr.mxu0 0.0
    %6216 = vmatpush1.msra.mxu0 0.0
    %6217 = vmatprep.subr.mxu0 0.0
    %6218 = vmatpush1.msra.mxu0 0.0
    %6219 = vmatprep.subr.mxu0 0.0
    %6220 = vmatpush1.msra.mxu0 0.0
    %6221 = vmatprep.subr.mxu0 0.0
    %6222 = vmatpush1.msra.mxu0 0.0
    %6223 = vmatprep.subr.mxu0 0.0
    %6224 = vmatpush1.msra.mxu0 0.0
    %6225 = vmatprep.subr.mxu0 0.0
    %6226 = vmatpush1.msra.mxu0 0.0
    %6227 = vmatprep.subr.mxu0 0.0
    %v6228 = vand.u32 %v2727, 4294901760
    %6229 = vmatpush1.msra.mxu0 %v6228
    %6230 = vmatprep.subr.mxu0 0.0
    %v6231 = vand.u32 %v2726, 4294901760
    %6232 = vmatpush1.msra.mxu0 %v6231
    %6233 = vmatprep.subr.mxu0 0.0
    %6234 = vmatpush2.msra.mxu0 0.0
    %6235 = vmatprep.subr.mxu0 0.0
    %6236 = vmatpush2.msra.mxu0 0.0
    %6237 = vmatprep.subr.mxu0 0.0
    %6238 = vmatpush2.msra.mxu0 0.0
    %6239 = vmatprep.subr.mxu0 0.0
    %6240 = vmatpush2.msra.mxu0 0.0
    %6241 = vmatprep.subr.mxu0 0.0
    %6242 = vmatpush2.msra.mxu0 0.0
    %6243 = vmatprep.subr.mxu0 0.0
    %6244 = vmatpush2.msra.mxu0 0.0
    %6245 = vmatprep.subr.mxu0 0.0
    %6246 = vmatpush2.msra.mxu0 0.0
    %6247 = vmatprep.subr.mxu0 0.0
    %6248 = vmatpush2.msra.mxu0 0.0
    %6249 = vmatprep.subr.mxu0 0.0
    %6250 = vmatpush2.msra.mxu0 0.0
    %6251 = vmatprep.subr.mxu0 0.0
    %6252 = vmatpush2.msra.mxu0 0.0
    %6253 = vmatprep.subr.mxu0 0.0
    %6254 = vmatpush2.msra.mxu0 0.0
    %6255 = vmatprep.subr.mxu0 0.0
    %6256 = vmatpush2.msra.mxu0 0.0
    %6257 = vmatprep.subr.mxu0 0.0
    %6258 = vmatpush2.msra.mxu0 0.0
    %6259 = vmatprep.subr.mxu0 0.0
    %6260 = vmatpush2.msra.mxu0 0.0
    %6261 = vmatprep.subr.mxu0 0.0
    %6262 = vmatpush2.msra.mxu0 0.0
    %6263 = vmatprep.subr.mxu0 0.0
    %6264 = vmatpush2.msra.mxu0 0.0
    %6265 = vmatprep.mubr.f32.mxu0 0.0
    %v6266 = vand.u32 %v5963, 4294901760
    %v6267 = vsub.f32 %v5963, %v6266
    %v6268 = vand.u32 %v6267, 4294901760
    %6269 = vmatmul.mubr.f32.gmra.mxu0 %v6268
    %v6270 = vpop.f32.mrf.mxu0
    %v6271 = vadd.f32 %v6196, %v6270
    %v6272 = vpop.f32.mrf.mxu0
    %6273 = vdwg.mxu0
    %6274 = vmatprep.subr.mxu0 0.0
    %6275 = vmatpush1.msra.mxu0 0.0
    %6276 = vmatprep.subr.mxu0 0.0
    %6277 = vmatpush1.msra.mxu0 0.0
    %6278 = vmatprep.subr.mxu0 0.0
    %6279 = vmatpush1.msra.mxu0 0.0
    %6280 = vmatprep.subr.mxu0 0.0
    %6281 = vmatpush1.msra.mxu0 0.0
    %6282 = vmatprep.subr.mxu0 0.0
    %6283 = vmatpush1.msra.mxu0 0.0
    %6284 = vmatprep.subr.mxu0 0.0
    %6285 = vmatpush1.msra.mxu0 0.0
    %6286 = vmatprep.subr.mxu0 0.0
    %6287 = vmatpush1.msra.mxu0 0.0
    %6288 = vmatprep.subr.mxu0 0.0
    %6289 = vmatpush1.msra.mxu0 0.0
    %6290 = vmatprep.subr.mxu0 0.0
    %6291 = vmatpush1.msra.mxu0 0.0
    %6292 = vmatprep.subr.mxu0 0.0
    %6293 = vmatpush1.msra.mxu0 0.0
    %6294 = vmatprep.subr.mxu0 0.0
    %6295 = vmatpush1.msra.mxu0 0.0
    %6296 = vmatprep.subr.mxu0 0.0
    %6297 = vmatpush1.msra.mxu0 0.0
    %6298 = vmatprep.subr.mxu0 0.0
    %6299 = vmatpush1.msra.mxu0 0.0
    %6300 = vmatprep.subr.mxu0 0.0
    %6301 = vmatpush1.msra.mxu0 0.0
    %6302 = vmatprep.subr.mxu0 0.0
    %v6303 = vand.u32 %v2727, 4294901760
    %v6304 = vsub.f32 %v2727, %v6303
    %v6305 = vand.u32 %v6304, 4294901760
    %6306 = vmatpush1.msra.mxu0 %v6305
    %6307 = vmatprep.subr.mxu0 0.0
    %v6308 = vand.u32 %v2726, 4294901760
    %v6309 = vsub.f32 %v2726, %v6308
    %v6310 = vand.u32 %v6309, 4294901760
    %6311 = vmatpush1.msra.mxu0 %v6310
    %6312 = vmatprep.subr.mxu0 0.0
    %6313 = vmatpush2.msra.mxu0 0.0
    %6314 = vmatprep.subr.mxu0 0.0
    %6315 = vmatpush2.msra.mxu0 0.0
    %6316 = vmatprep.subr.mxu0 0.0
    %6317 = vmatpush2.msra.mxu0 0.0
    %6318 = vmatprep.subr.mxu0 0.0
    %6319 = vmatpush2.msra.mxu0 0.0
    %6320 = vmatprep.subr.mxu0 0.0
    %6321 = vmatpush2.msra.mxu0 0.0
    %6322 = vmatprep.subr.mxu0 0.0
    %6323 = vmatpush2.msra.mxu0 0.0
    %6324 = vmatprep.subr.mxu0 0.0
    %6325 = vmatpush2.msra.mxu0 0.0
    %6326 = vmatprep.subr.mxu0 0.0
    %6327 = vmatpush2.msra.mxu0 0.0
    %6328 = vmatprep.subr.mxu0 0.0
    %6329 = vmatpush2.msra.mxu0 0.0
    %6330 = vmatprep.subr.mxu0 0.0
    %6331 = vmatpush2.msra.mxu0 0.0
    %6332 = vmatprep.subr.mxu0 0.0
    %6333 = vmatpush2.msra.mxu0 0.0
    %6334 = vmatprep.subr.mxu0 0.0
    %6335 = vmatpush2.msra.mxu0 0.0
    %6336 = vmatprep.subr.mxu0 0.0
    %6337 = vmatpush2.msra.mxu0 0.0
    %6338 = vmatprep.subr.mxu0 0.0
    %6339 = vmatpush2.msra.mxu0 0.0
    %6340 = vmatprep.subr.mxu0 0.0
    %6341 = vmatpush2.msra.mxu0 0.0
    %6342 = vmatprep.subr.mxu0 0.0
    %6343 = vmatpush2.msra.mxu0 0.0
    %6344 = vmatprep.mubr.f32.mxu0 0.0
    %v6345 = vand.u32 %v5963, 4294901760
    %6346 = vmatmul.mubr.f32.gmra.mxu0 %v6345
    %v6347 = vpop.f32.mrf.mxu0
    %v6348 = vadd.f32 %v6271, %v6347
    %v6349 = vpop.f32.mrf.mxu0
    %6350 = vdwg.mxu0
    %6351 = vmatprep.subr.mxu0 0.0
    %6352 = vmatpush1.msra.mxu0 0.0
    %6353 = vmatprep.subr.mxu0 0.0
    %6354 = vmatpush1.msra.mxu0 0.0
    %6355 = vmatprep.subr.mxu0 0.0
    %6356 = vmatpush1.msra.mxu0 0.0
    %6357 = vmatprep.subr.mxu0 0.0
    %6358 = vmatpush1.msra.mxu0 0.0
    %6359 = vmatprep.subr.mxu0 0.0
    %6360 = vmatpush1.msra.mxu0 0.0
    %6361 = vmatprep.subr.mxu0 0.0
    %6362 = vmatpush1.msra.mxu0 0.0
    %6363 = vmatprep.subr.mxu0 0.0
    %6364 = vmatpush1.msra.mxu0 0.0
    %6365 = vmatprep.subr.mxu0 0.0
    %6366 = vmatpush1.msra.mxu0 0.0
    %6367 = vmatprep.subr.mxu0 0.0
    %6368 = vmatpush1.msra.mxu0 0.0
    %6369 = vmatprep.subr.mxu0 0.0
    %6370 = vmatpush1.msra.mxu0 0.0
    %6371 = vmatprep.subr.mxu0 0.0
    %6372 = vmatpush1.msra.mxu0 0.0
    %6373 = vmatprep.subr.mxu0 0.0
    %6374 = vmatpush1.msra.mxu0 0.0
    %6375 = vmatprep.subr.mxu0 0.0
    %6376 = vmatpush1.msra.mxu0 0.0
    %6377 = vmatprep.subr.mxu0 0.0
    %6378 = vmatpush1.msra.mxu0 0.0
    %6379 = vmatprep.subr.mxu0 0.0
    %v6380 = vand.u32 %v2727, 4294901760
    %6381 = vmatpush1.msra.mxu0 %v6380
    %6382 = vmatprep.subr.mxu0 0.0
    %v6383 = vand.u32 %v2726, 4294901760
    %6384 = vmatpush1.msra.mxu0 %v6383
    %6385 = vmatprep.subr.mxu0 0.0
    %6386 = vmatpush2.msra.mxu0 0.0
    %6387 = vmatprep.subr.mxu0 0.0
    %6388 = vmatpush2.msra.mxu0 0.0
    %6389 = vmatprep.subr.mxu0 0.0
    %6390 = vmatpush2.msra.mxu0 0.0
    %6391 = vmatprep.subr.mxu0 0.0
    %6392 = vmatpush2.msra.mxu0 0.0
    %6393 = vmatprep.subr.mxu0 0.0
    %6394 = vmatpush2.msra.mxu0 0.0
    %6395 = vmatprep.subr.mxu0 0.0
    %6396 = vmatpush2.msra.mxu0 0.0
    %6397 = vmatprep.subr.mxu0 0.0
    %6398 = vmatpush2.msra.mxu0 0.0
    %6399 = vmatprep.subr.mxu0 0.0
    %6400 = vmatpush2.msra.mxu0 0.0
    %6401 = vmatprep.subr.mxu0 0.0
    %6402 = vmatpush2.msra.mxu0 0.0
    %6403 = vmatprep.subr.mxu0 0.0
    %6404 = vmatpush2.msra.mxu0 0.0
    %6405 = vmatprep.subr.mxu0 0.0
    %6406 = vmatpush2.msra.mxu0 0.0
    %6407 = vmatprep.subr.mxu0 0.0
    %6408 = vmatpush2.msra.mxu0 0.0
    %6409 = vmatprep.subr.mxu0 0.0
    %6410 = vmatpush2.msra.mxu0 0.0
    %6411 = vmatprep.subr.mxu0 0.0
    %6412 = vmatpush2.msra.mxu0 0.0
    %6413 = vmatprep.subr.mxu0 0.0
    %6414 = vmatpush2.msra.mxu0 0.0
    %6415 = vmatprep.subr.mxu0 0.0
    %6416 = vmatpush2.msra.mxu0 0.0
    %6417 = vmatprep.mubr.f32.mxu0 0.0
    %v6418 = vand.u32 %v5963, 4294901760
    %6419 = vmatmul.mubr.f32.gmra.mxu0 %v6418
    %v6420 = vpop.f32.mrf.mxu0
    %v6421 = vadd.f32 %v6348, %v6420
    %v6422 = vpop.f32.mrf.mxu0
    %6423 = vdwg.mxu0
    %v6424 = vcombine.low %v3187, %v4111
    %v6425 = vcombine.high %v3187, %v4111
    %v6427 = vunpack.c.l.s4 1983009808
    %v6428 = vunpack.c.0.s8 %v6427
    %v6429 = vlaneseq
    %v6430 = vshrl.u32 %v6429, 7
    %v6431 = vsub.s32 %v6428, %v6430
    %v6432 = vrot.slane %v6424, %v6431
    %v6434 = vunpack.c.l.s4 1983009808
    %v6435 = vunpack.c.0.s8 %v6434
    %v6436 = vlaneseq
    %v6437 = vshrl.u32 %v6436, 7
    %v6438 = vsub.s32 %v6435, %v6437
    %v6439 = vrot.slane %v6425, %v6438
    %v6440 = vcombine.low %v3649, %v4573
    %v6441 = vcombine.high %v3649, %v4573
    %v6443 = vunpack.c.l.s4 1983009808
    %v6444 = vunpack.c.0.s8 %v6443
    %v6445 = vlaneseq
    %v6446 = vshrl.u32 %v6445, 7
    %v6447 = vsub.s32 %v6444, %v6446
    %v6448 = vrot.slane %v6440, %v6447
    %v6450 = vunpack.c.l.s4 1983009808
    %v6451 = vunpack.c.0.s8 %v6450
    %v6452 = vlaneseq
    %v6453 = vshrl.u32 %v6452, 7
    %v6454 = vsub.s32 %v6451, %v6453
    %v6455 = vrot.slane %v6441, %v6454
    %v6456 = vcombine.low %v6432, %v6448
    %v6457 = vcombine.high %v6432, %v6448
    %v6459 = vunpack.c.l.s4 1934713408
    %v6460 = vunpack.c.0.s8 %v6459
    %v6461 = vlaneseq
    %v6462 = vshrl.u32 %v6461, 7
    %v6463 = vsub.s32 %v6460, %v6462
    %v6464 = vrot.slane %v6456, %v6463
    %v6466 = vunpack.c.l.s4 1934713408
    %v6467 = vunpack.c.0.s8 %v6466
    %v6468 = vlaneseq
    %v6469 = vshrl.u32 %v6468, 7
    %v6470 = vsub.s32 %v6467, %v6469
    %v6471 = vrot.slane %v6457, %v6470
    %v6472 = vcombine.low %v6439, %v6455
    %v6473 = vcombine.high %v6439, %v6455
    %v6475 = vunpack.c.l.s4 1934713408
    %v6476 = vunpack.c.0.s8 %v6475
    %v6477 = vlaneseq
    %v6478 = vshrl.u32 %v6477, 7
    %v6479 = vsub.s32 %v6476, %v6478
    %v6480 = vrot.slane %v6472, %v6479
    %v6482 = vunpack.c.l.s4 1934713408
    %v6483 = vunpack.c.0.s8 %v6482
    %v6484 = vlaneseq
    %v6485 = vshrl.u32 %v6484, 7
    %v6486 = vsub.s32 %v6483, %v6485
    %v6487 = vrot.slane %v6473, %v6486
    %v6488 = vcombine.high %v6464, 0.0
    %v6489 = vcombine.high %v6471, 0.0
    %v6490 = vcombine.high %v6480, 0.0
    %v6491 = vcombine.high %v6487, 0.0
    %v6492 = vcombine.low %v5035, %v5959
    %v6493 = vcombine.high %v5035, %v5959
    %v6495 = vunpack.c.l.s4 1983009808
    %v6496 = vunpack.c.0.s8 %v6495
    %v6497 = vlaneseq
    %v6498 = vshrl.u32 %v6497, 7
    %v6499 = vsub.s32 %v6496, %v6498
    %v6500 = vrot.slane %v6492, %v6499
    %v6502 = vunpack.c.l.s4 1983009808
    %v6503 = vunpack.c.0.s8 %v6502
    %v6504 = vlaneseq
    %v6505 = vshrl.u32 %v6504, 7
    %v6506 = vsub.s32 %v6503, %v6505
    %v6507 = vrot.slane %v6493, %v6506
    %v6508 = vcombine.low %v5497, %v6421
    %v6509 = vcombine.high %v5497, %v6421
    %v6511 = vunpack.c.l.s4 1983009808
    %v6512 = vunpack.c.0.s8 %v6511
    %v6513 = vlaneseq
    %v6514 = vshrl.u32 %v6513, 7
    %v6515 = vsub.s32 %v6512, %v6514
    %v6516 = vrot.slane %v6508, %v6515
    %v6518 = vunpack.c.l.s4 1983009808
    %v6519 = vunpack.c.0.s8 %v6518
    %v6520 = vlaneseq
    %v6521 = vshrl.u32 %v6520, 7
    %v6522 = vsub.s32 %v6519, %v6521
    %v6523 = vrot.slane %v6509, %v6522
    %v6524 = vcombine.low %v6500, %v6516
    %v6525 = vcombine.high %v6500, %v6516
    %v6527 = vunpack.c.l.s4 1934713408
    %v6528 = vunpack.c.0.s8 %v6527
    %v6529 = vlaneseq
    %v6530 = vshrl.u32 %v6529, 7
    %v6531 = vsub.s32 %v6528, %v6530
    %v6532 = vrot.slane %v6524, %v6531
    %v6534 = vunpack.c.l.s4 1934713408
    %v6535 = vunpack.c.0.s8 %v6534
    %v6536 = vlaneseq
    %v6537 = vshrl.u32 %v6536, 7
    %v6538 = vsub.s32 %v6535, %v6537
    %v6539 = vrot.slane %v6525, %v6538
    %v6540 = vcombine.low %v6507, %v6523
    %v6541 = vcombine.high %v6507, %v6523
    %v6543 = vunpack.c.l.s4 1934713408
    %v6544 = vunpack.c.0.s8 %v6543
    %v6545 = vlaneseq
    %v6546 = vshrl.u32 %v6545, 7
    %v6547 = vsub.s32 %v6544, %v6546
    %v6548 = vrot.slane %v6540, %v6547
    %v6550 = vunpack.c.l.s4 1934713408
    %v6551 = vunpack.c.0.s8 %v6550
    %v6552 = vlaneseq
    %v6553 = vshrl.u32 %v6552, 7
    %v6554 = vsub.s32 %v6551, %v6553
    %v6555 = vrot.slane %v6541, %v6554
    %v6556 = vcombine.high %v6532, 0.0
    %v6557 = vcombine.high %v6539, 0.0
    %v6558 = vcombine.high %v6548, 0.0
    %v6559 = vcombine.high %v6555, 0.0
    %6562 = vrot.lane.b32.xlu0 %v6488, 16
    %v6563 = vpop.permute.xlu0 %6562
    %6564 = vrot.lane.b32.xlu0 %v6556, 16
    %v6565 = vpop.permute.xlu0 %6564
    %6570 = vrot.lane.b32.xlu0 %v6471, 32
    %v6571 = vpop.permute.xlu0 %6570
    %6572 = vrot.lane.b32.xlu0 %v6539, 32
    %v6573 = vpop.permute.xlu0 %6572
    %6578 = vrot.lane.b32.xlu0 %v6489, 48
    %v6579 = vpop.permute.xlu0 %6578
    %6580 = vrot.lane.b32.xlu0 %v6557, 48
    %v6581 = vpop.permute.xlu0 %6580
    %6586 = vrot.lane.b32.xlu0 %v6480, 64
    %v6587 = vpop.permute.xlu0 %6586
    %6588 = vrot.lane.b32.xlu0 %v6548, 64
    %v6589 = vpop.permute.xlu0 %6588
    %6594 = vrot.lane.b32.xlu0 %v6490, 80
    %v6595 = vpop.permute.xlu0 %6594
    %6596 = vrot.lane.b32.xlu0 %v6558, 80
    %v6597 = vpop.permute.xlu0 %6596
    %6602 = vrot.lane.b32.xlu0 %v6487, 96
    %v6603 = vpop.permute.xlu0 %6602
    %6604 = vrot.lane.b32.xlu0 %v6555, 96
    %v6605 = vpop.permute.xlu0 %6604
    %6610 = vrot.lane.b32.xlu0 %v6491, 112
    %v6611 = vpop.permute.xlu0 %6610
    %6612 = vrot.lane.b32.xlu0 %v6559, 112
    %v6613 = vpop.permute.xlu0 %6612
    %v6616 = vsel %vm83, %v6464, %v6563
    %v6617 = vsel %vm83, %v6532, %v6565
    %vm6618 = vcmask 261120
    %v6619 = vsel %vm6618, %v6616, %v6571
    %v6620 = vsel %vm6618, %v6617, %v6573
    %vm6621 = vcmask 392192
    %v6622 = vsel %vm6621, %v6619, %v6579
    %v6623 = vsel %vm6621, %v6620, %v6581
    %vm6624 = vcmask 523264
    %v6625 = vsel %vm6624, %v6622, %v6587
    %v6626 = vsel %vm6624, %v6623, %v6589
    %vm6627 = vcmask 654336
    %v6628 = vsel %vm6627, %v6625, %v6595
    %v6629 = vsel %vm6627, %v6626, %v6597
    %vm6630 = vcmask 785408
    %v6631 = vsel %vm6630, %v6628, %v6603
    %v6632 = vsel %vm6630, %v6629, %v6605
    %vm6633 = vcmask 916480
    %v6634 = vsel %vm6633, %v6631, %v6611
    %v6635 = vsel %vm6633, %v6632, %v6613
    %6636 = vst [vmem:[#allocation10] sm:$0xf] %v6634
    %6637 = vst [vmem:[#allocation10 + $0x4] sm:$0xf] %v6635
    // Predicated region
    $region34: #{tpu_custom_call.1} parent=1 // pred_check
      _
    $region35: #{tpu_custom_call.1} parent=1 // pred_check_branch
      %6639 = sbr.rel (0) target = $region37
    $region36: #{tpu_custom_call.1} parent=1 // pred_region
      %s6641 = ssub.s32 128, 128
      %6642 = vsyncadd [#allocation4], %s6641
      %s6643 = sshll.u32 [#allocation10], 4
      %s6644 = int_to_ptr.vmem [resolvable:$true] %s6643
      %6649 = dma.vmem_to_hbm [thread:$0]  %s6644, 128, %s4, [#allocation4], 64, 64, 4
    $region37: #{tpu_custom_call.1} parent=1 // pred_fallthru
      _
    // Predicated region
    $region38: #{tpu_custom_call.1} parent=1 // pred_check
      _
    $region39: #{tpu_custom_call.1} parent=1 // pred_check_branch
      %6651 = sbr.rel (0) target = $region41
    $region40: #{tpu_custom_call.1} parent=1 // pred_region
      %6652 = dma.done [#allocation4], 128
    $region41: #{tpu_custom_call.1} parent=1 // pred_fallthru
      _
    %6653 = vsyncpa [#allocation3], 1
    %6654 = vsyncpa [#allocation6], 1
    %6655 = vsyncpa [#allocation9], 1
    %6656 = vsyncpa [#allocation4], 1

</llo_original>
